<compile_context>
chip_gen: v7x
topology: tpu7x:2x2x1
jax: 0.10.0
libtpu: 0.0.40
codegen_flags: <defaults>
</compile_context>

<pallas_src>
import jax
import jax.numpy as jnp
from jax.experimental import pallas as pl
from jax.experimental.pallas import tpu as pltpu


def _round_up(n: int, m: int) -> int:
    return ((n + m - 1) // m) * m


def mine_critic_kernel(x_ref, w1t_ref, b1_ref, w2t_ref, b2_ref, w3_ref, b3_ref, o_ref):
    """One batch tile: (tb, in_dim) -> (tb, 1); batch on the sublane axis."""
    x = x_ref[...].astype(w1t_ref.dtype)

    # Layer 1: (tb, in_dim) @ (in_dim, hidden) -> (tb, hidden), f32 accumulation.
    h1 = jnp.dot(x, w1t_ref[...], preferred_element_type=jnp.float32)
    h1 = jnp.maximum(h1 + b1_ref[...].astype(jnp.float32), 0.0)

    # Layer 2: (tb, hidden) @ (hidden, hidden) -> (tb, hidden).
    h2 = jnp.dot(h1.astype(w2t_ref.dtype), w2t_ref[...],
                 preferred_element_type=jnp.float32)
    h2 = jnp.maximum(h2 + b2_ref[...].astype(jnp.float32), 0.0)

    # Head: VPU multiply + lane (XLU) reduction -- avoids an N=1 MXU pass.
    w3 = w3_ref[...].astype(jnp.float32)                     # (1, hidden) row
    y = jnp.sum(h2 * w3, axis=-1, keepdims=True)             # (tb, 1)
    y = y + b3_ref[...].astype(jnp.float32)

    o_ref[...] = y.astype(o_ref.dtype)


def mine_critic_forward(x, params, *, target_tile_bytes: int = 2 * 2**20):
    """x: (B, in_dim).  params (PyTorch orientation):
         w1 (hidden, in_dim), b1 (hidden,),
         w2 (hidden, hidden), b2 (hidden,),
         w3 (1, hidden),      b3 (1,).
       Returns (B, 1) in x.dtype (matmul accumulation is f32)."""
    B, in_dim = x.shape
    hidden = params["w1"].shape[0]

    # Pre-transpose / reshape only the tiny weights (one-time layout plumbing);
    # x stays in its natural HBM layout -> no extra HBM pass over the big tensor.
    w1t = params["w1"].T                     # (in_dim, hidden)
    b1r = params["b1"].reshape(1, hidden)    # (1, hidden)
    w2t = params["w2"].T                     # (hidden, hidden)
    b2r = params["b2"].reshape(1, hidden)
    w3r = params["w3"].reshape(1, hidden)
    b3r = params["b3"].reshape(1, 1)

    x_bpe = jnp.dtype(x.dtype).itemsize

    # ---- Batch tile: derived from bytes (~target_tile_bytes of x per step) ----
    tb = _round_up(max(512, target_tile_bytes // max(1, in_dim * x_bpe)), 128)
    tb = min(tb, _round_up(B, 128))
    if B > 128:  # keep >= 2 grid steps so v7x's two TensorCores both get work
        tb = min(tb, max(128, _round_up(pl.cdiv(B, 2), 128)))
    tb = max(tb, 128)

    # ---- VMEM plan (derived from actual chip capacity, conservative on v7x) ----
    try:
        vmem_cap = int(pltpu.get_tpu_info().vmem_capacity_bytes)
    except Exception:
        vmem_cap = 64 * 2**20  # conservative default (v7x per-TC VMEM)
    vmem_budget = min((vmem_cap * 3) // 4, 112 * 2**20)

    weight_bytes = sum(int(a.size) * jnp.dtype(a.dtype).itemsize
                       for a in (w1t, b1r, w2t, b2r, w3r, b3r))
    per_row_bytes = (2 * in_dim * x_bpe     # x tile, double-buffered
                     + 2 * x_bpe            # out tile, double-buffered
                     + 2 * hidden * 4)      # f32 h1/h2 live tiles
    tb_cap = (vmem_budget - 2 * weight_bytes - (4 << 20)) // max(1, per_row_bytes)
    if tb_cap >= 128:
        tb = min(tb, (tb_cap // 128) * 128)
    tb = max(tb, 128)

    plan_bytes = 2 * weight_bytes + tb * per_row_bytes
    vmem_limit = int(min(vmem_budget, max(32 * 2**20, int(plan_bytes * 1.25))))

    grid = (pl.cdiv(B, tb),)

    def run(resident_mode):
        rk = {} if resident_mode is None else {"pipeline_mode": resident_mode}
        resident = lambda i: (0, 0)  # weights / biases: same block every grid step
        in_specs = [
            pl.BlockSpec((tb, in_dim), lambda i: (i, 0)),    # x tile, natural layout
            pl.BlockSpec((in_dim, hidden), resident, **rk),  # w1^T
            pl.BlockSpec((1, hidden), resident, **rk),       # b1
            pl.BlockSpec((hidden, hidden), resident, **rk),  # w2^T
            pl.BlockSpec((1, hidden), resident, **rk),       # b2
            pl.BlockSpec((1, hidden), resident, **rk),       # w3
            pl.BlockSpec((1, 1), resident, **rk),            # b3
        ]
        out_spec = pl.BlockSpec((tb, 1), lambda i: (i, 0))
        return pl.pallas_call(
            mine_critic_kernel,
            out_shape=jax.ShapeDtypeStruct((B, 1), x.dtype),
            grid_spec=pltpu.PrefetchScalarGridSpec(
                num_scalar_prefetch=0,
                grid=grid,
                in_specs=in_specs,
                out_specs=out_spec,
            ),
            compiler_params=pltpu.CompilerParams(
                dimension_semantics=("parallel",),   # batch tiles split across TCs
                vmem_limit_bytes=vmem_limit,
            ),
        )(x, w1t, b1r, w2t, b2r, w3r, b3r)

    # Single-buffer the constant-index weight/bias tiles; fall back to the
    # default double-buffered specs if this Pallas build rejects Buffered(1).
    try:
        return jax.block_until_ready(run(pl.Buffered(1)))
    except Exception:
        return jax.block_until_ready(run(None))


def init_params(key, in_dim, hidden):
    """PyTorch-style uniform fan-in init, weights in (out_features, in_features)."""
    ks = jax.random.split(key, 6)

    def lin(kw, kb, fan_in, fan_out):
        bound = 1.0 / jnp.sqrt(fan_in)
        w = jax.random.uniform(kw, (fan_out, fan_in), jnp.float32, -bound, bound)
        b = jax.random.uniform(kb, (fan_out,), jnp.float32, -bound, bound)
        return w, b

    w1, b1 = lin(ks[0], ks[1], in_dim, hidden)
    w2, b2 = lin(ks[2], ks[3], hidden, hidden)
    w3, b3 = lin(ks[4], ks[5], hidden, 1)
    return {"w1": w1, "b1": b1, "w2": w2, "b2": b2, "w3": w3, "b3": b3}


def mine_critic_reference(x, p):
    h1 = jnp.maximum(x @ p["w1"].T + p["b1"], 0.0)
    h2 = jnp.maximum(h1 @ p["w2"].T + p["b2"], 0.0)
    return h2 @ p["w3"].T + p["b3"]


if __name__ == "__main__":
    key = jax.random.PRNGKey(0)
    k_x, k_p = jax.random.split(key)

    # Small test consistent with the module: (B, in_dim) input, (B, 1) output.
    # B is deliberately not a multiple of the tile to exercise the masked
    # boundary block, and the tile heuristic yields a 2-step grid here.
    B, in_dim, hidden = 300, 16, 32
    x = jax.random.normal(k_x, (B, in_dim), jnp.float32)
    params = init_params(k_p, in_dim, hidden)

    out = mine_critic_forward(x, params)
    out = jax.block_until_ready(out)

    ref = mine_critic_reference(x, params)
    assert out.shape == (B, 1)
    # Tolerance accounts for TPU default matmul precision (bf16 passes on MXU).
    assert jnp.allclose(out, ref, atol=2e-2, rtol=2e-2), \
        float(jnp.max(jnp.abs(out - ref)))

    print("KERNEL_OK")
</pallas_src>

<mosaic_0001>
module attributes {stable_mosaic.version = 11 : i64} {
  func.func @mine_critic_kernel(%arg0: i32, %arg1: memref<256x16xf32, #tpu.memory_space<vmem>>, %arg2: memref<16x32xf32, #tpu.memory_space<vmem>>, %arg3: memref<1x32xf32, #tpu.memory_space<vmem>>, %arg4: memref<32x32xf32, #tpu.memory_space<vmem>>, %arg5: memref<1x32xf32, #tpu.memory_space<vmem>>, %arg6: memref<1x32xf32, #tpu.memory_space<vmem>>, %arg7: memref<1x1xf32, #tpu.memory_space<vmem>>, %arg8: memref<256x1xf32, #tpu.memory_space<vmem>>) attributes {dimension_semantics = [#tpu.dimension_semantics<parallel>], iteration_bounds = array<i64: 2>, scalar_prefetch = 0 : i64, scratch_operands = 0 : i64, tpu.core_type = #tpu.core_type<tc>, window_params = [{transform_indices = @transform_0, window_bounds = array<i64: 256, 16>}, {pipeline_mode = #tpu.pipeline_mode<synchronous>, transform_indices = @transform_1, window_bounds = array<i64: 16, 32>}, {pipeline_mode = #tpu.pipeline_mode<synchronous>, transform_indices = @transform_2, window_bounds = array<i64: 1, 32>}, {pipeline_mode = #tpu.pipeline_mode<synchronous>, transform_indices = @transform_3, window_bounds = array<i64: 32, 32>}, {pipeline_mode = #tpu.pipeline_mode<synchronous>, transform_indices = @transform_4, window_bounds = array<i64: 1, 32>}, {pipeline_mode = #tpu.pipeline_mode<synchronous>, transform_indices = @transform_5, window_bounds = array<i64: 1, 32>}, {pipeline_mode = #tpu.pipeline_mode<synchronous>, transform_indices = @transform_6, window_bounds = array<i64: 1, 1>}, {transform_indices = @transform_7, window_bounds = array<i64: 256, 1>}]} {
    %c0 = arith.constant 0 : index
    %c0_0 = arith.constant 0 : index
    %0 = vector.load %arg1[%c0, %c0_0] : memref<256x16xf32, #tpu.memory_space<vmem>>, vector<256x16xf32>
    %c0_1 = arith.constant 0 : index
    %c0_2 = arith.constant 0 : index
    %1 = vector.load %arg2[%c0_1, %c0_2] : memref<16x32xf32, #tpu.memory_space<vmem>>, vector<16x32xf32>
    %cst = arith.constant dense<0.000000e+00> : vector<256x32xf32>
    %2 = tpu.matmul %0, %1, %cst {dimension_numbers = #tpu.dot_dimension_numbers<[1], [0], [0], [1], [0, 0, 1, 1], [], []>} : vector<256x16xf32>, vector<16x32xf32>, vector<256x32xf32> -> vector<256x32xf32>
    %c0_3 = arith.constant 0 : index
    %c0_4 = arith.constant 0 : index
    %3 = vector.load %arg3[%c0_3, %c0_4] : memref<1x32xf32, #tpu.memory_space<vmem>>, vector<1x32xf32>
    %4 = vector.broadcast %3 : vector<1x32xf32> to vector<256x32xf32>
    %5 = arith.addf %2, %4 : vector<256x32xf32>
    %cst_5 = arith.constant 0.000000e+00 : f32
    %6 = vector.broadcast %cst_5 : f32 to vector<256x32xf32>
    %7 = arith.maximumf %5, %6 : vector<256x32xf32>
    %c0_6 = arith.constant 0 : index
    %c0_7 = arith.constant 0 : index
    %8 = vector.load %arg4[%c0_6, %c0_7] : memref<32x32xf32, #tpu.memory_space<vmem>>, vector<32x32xf32>
    %cst_8 = arith.constant dense<0.000000e+00> : vector<256x32xf32>
    %9 = tpu.matmul %7, %8, %cst_8 {dimension_numbers = #tpu.dot_dimension_numbers<[1], [0], [0], [1], [0, 0, 1, 1], [], []>} : vector<256x32xf32>, vector<32x32xf32>, vector<256x32xf32> -> vector<256x32xf32>
    %c0_9 = arith.constant 0 : index
    %c0_10 = arith.constant 0 : index
    %10 = vector.load %arg5[%c0_9, %c0_10] : memref<1x32xf32, #tpu.memory_space<vmem>>, vector<1x32xf32>
    %11 = vector.broadcast %10 : vector<1x32xf32> to vector<256x32xf32>
    %12 = arith.addf %9, %11 : vector<256x32xf32>
    %cst_11 = arith.constant 0.000000e+00 : f32
    %13 = vector.broadcast %cst_11 : f32 to vector<256x32xf32>
    %14 = arith.maximumf %12, %13 : vector<256x32xf32>
    %c0_12 = arith.constant 0 : index
    %c0_13 = arith.constant 0 : index
    %15 = vector.load %arg6[%c0_12, %c0_13] : memref<1x32xf32, #tpu.memory_space<vmem>>, vector<1x32xf32>
    %16 = vector.broadcast %15 : vector<1x32xf32> to vector<256x32xf32>
    %17 = arith.mulf %14, %16 : vector<256x32xf32>
    %cst_14 = arith.constant dense<0.000000e+00> : vector<256xf32>
    %18 = vector.multi_reduction <add>, %17, %cst_14 [1] : vector<256x32xf32> to vector<256xf32>
    %19 = vector.shape_cast %18 : vector<256xf32> to vector<256x1xf32>
    %c0_15 = arith.constant 0 : index
    %c0_16 = arith.constant 0 : index
    %20 = vector.load %arg7[%c0_15, %c0_16] : memref<1x1xf32, #tpu.memory_space<vmem>>, vector<1x1xf32>
    %21 = vector.broadcast %20 : vector<1x1xf32> to vector<256x1xf32>
    %22 = arith.addf %19, %21 : vector<256x1xf32>
    %c0_17 = arith.constant 0 : index
    %c0_18 = arith.constant 0 : index
    %23 = vector.load %arg8[%c0_17, %c0_18] : memref<256x1xf32, #tpu.memory_space<vmem>>, vector<256x1xf32>
    tpu.vector_store %arg8[%c0_17, %c0_18], %22 {strides = array<i32>} : memref<256x1xf32, #tpu.memory_space<vmem>>, vector<256x1xf32>,
    return
  }
  func.func @transform_0(%arg0: i32) -> (i32, i32) {
    %c0_i32 = arith.constant 0 : i32
    %c0_i32_0 = arith.constant 0 : i32
    return %arg0, %c0_i32 : i32, i32
  }
  func.func @transform_1(%arg0: i32) -> (i32, i32) {
    %c0_i32 = arith.constant 0 : i32
    %c0_i32_0 = arith.constant 0 : i32
    %c0_i32_1 = arith.constant 0 : i32
    return %c0_i32, %c0_i32_0 : i32, i32
  }
  func.func @transform_2(%arg0: i32) -> (i32, i32) {
    %c0_i32 = arith.constant 0 : i32
    %c0_i32_0 = arith.constant 0 : i32
    %c0_i32_1 = arith.constant 0 : i32
    return %c0_i32, %c0_i32_0 : i32, i32
  }
  func.func @transform_3(%arg0: i32) -> (i32, i32) {
    %c0_i32 = arith.constant 0 : i32
    %c0_i32_0 = arith.constant 0 : i32
    %c0_i32_1 = arith.constant 0 : i32
    return %c0_i32, %c0_i32_0 : i32, i32
  }
  func.func @transform_4(%arg0: i32) -> (i32, i32) {
    %c0_i32 = arith.constant 0 : i32
    %c0_i32_0 = arith.constant 0 : i32
    %c0_i32_1 = arith.constant 0 : i32
    return %c0_i32, %c0_i32_0 : i32, i32
  }
  func.func @transform_5(%arg0: i32) -> (i32, i32) {
    %c0_i32 = arith.constant 0 : i32
    %c0_i32_0 = arith.constant 0 : i32
    %c0_i32_1 = arith.constant 0 : i32
    return %c0_i32, %c0_i32_0 : i32, i32
  }
  func.func @transform_6(%arg0: i32) -> (i32, i32) {
    %c0_i32 = arith.constant 0 : i32
    %c0_i32_0 = arith.constant 0 : i32
    %c0_i32_1 = arith.constant 0 : i32
    return %c0_i32, %c0_i32_0 : i32, i32
  }
  func.func @transform_7(%arg0: i32) -> (i32, i32) {
    %c0_i32 = arith.constant 0 : i32
    %c0_i32_0 = arith.constant 0 : i32
    return %arg0, %c0_i32 : i32, i32
  }
}

module attributes {stable_mosaic.version = 11 : i64} {
  func.func @mine_critic_kernel(%arg0: i32, %arg1: memref<256x16xf32, #tpu.memory_space<vmem>>, %arg2: memref<16x32xf32, #tpu.memory_space<vmem>>, %arg3: memref<1x32xf32, #tpu.memory_space<vmem>>, %arg4: memref<32x32xf32, #tpu.memory_space<vmem>>, %arg5: memref<1x32xf32, #tpu.memory_space<vmem>>, %arg6: memref<1x32xf32, #tpu.memory_space<vmem>>, %arg7: memref<1x1xf32, #tpu.memory_space<vmem>>, %arg8: memref<256x1xf32, #tpu.memory_space<vmem>>) attributes {dimension_semantics = [#tpu.dimension_semantics<parallel>], iteration_bounds = array<i64: 2>, scalar_prefetch = 0 : i64, scratch_operands = 0 : i64, tpu.core_type = #tpu.core_type<tc>, window_params = [{transform_indices = @transform_0, window_bounds = array<i64: 256, 16>}, {pipeline_mode = #tpu.pipeline_mode<synchronous>, transform_indices = @transform_1, window_bounds = array<i64: 16, 32>}, {pipeline_mode = #tpu.pipeline_mode<synchronous>, transform_indices = @transform_2, window_bounds = array<i64: 1, 32>}, {pipeline_mode = #tpu.pipeline_mode<synchronous>, transform_indices = @transform_3, window_bounds = array<i64: 32, 32>}, {pipeline_mode = #tpu.pipeline_mode<synchronous>, transform_indices = @transform_4, window_bounds = array<i64: 1, 32>}, {pipeline_mode = #tpu.pipeline_mode<synchronous>, transform_indices = @transform_5, window_bounds = array<i64: 1, 32>}, {pipeline_mode = #tpu.pipeline_mode<synchronous>, transform_indices = @transform_6, window_bounds = array<i64: 1, 1>}, {transform_indices = @transform_7, window_bounds = array<i64: 256, 1>}]} {
    %c0 = arith.constant 0 : index
    %c0_0 = arith.constant 0 : index
    %0 = vector.load %arg1[%c0, %c0_0] : memref<256x16xf32, #tpu.memory_space<vmem>>, vector<256x16xf32>
    %c0_1 = arith.constant 0 : index
    %c0_2 = arith.constant 0 : index
    %1 = vector.load %arg2[%c0_1, %c0_2] : memref<16x32xf32, #tpu.memory_space<vmem>>, vector<16x32xf32>
    %cst = arith.constant dense<0.000000e+00> : vector<256x32xf32>
    %2 = tpu.matmul %0, %1, %cst {dimension_numbers = #tpu.dot_dimension_numbers<[1], [0], [0], [1], [0, 0, 1, 1], [], []>} : vector<256x16xf32>, vector<16x32xf32>, vector<256x32xf32> -> vector<256x32xf32>
    %c0_3 = arith.constant 0 : index
    %c0_4 = arith.constant 0 : index
    %3 = vector.load %arg3[%c0_3, %c0_4] : memref<1x32xf32, #tpu.memory_space<vmem>>, vector<1x32xf32>
    %4 = vector.broadcast %3 : vector<1x32xf32> to vector<256x32xf32>
    %5 = arith.addf %2, %4 : vector<256x32xf32>
    %cst_5 = arith.constant 0.000000e+00 : f32
    %6 = vector.broadcast %cst_5 : f32 to vector<256x32xf32>
    %7 = arith.maximumf %5, %6 : vector<256x32xf32>
    %c0_6 = arith.constant 0 : index
    %c0_7 = arith.constant 0 : index
    %8 = vector.load %arg4[%c0_6, %c0_7] : memref<32x32xf32, #tpu.memory_space<vmem>>, vector<32x32xf32>
    %cst_8 = arith.constant dense<0.000000e+00> : vector<256x32xf32>
    %9 = tpu.matmul %7, %8, %cst_8 {dimension_numbers = #tpu.dot_dimension_numbers<[1], [0], [0], [1], [0, 0, 1, 1], [], []>} : vector<256x32xf32>, vector<32x32xf32>, vector<256x32xf32> -> vector<256x32xf32>
    %c0_9 = arith.constant 0 : index
    %c0_10 = arith.constant 0 : index
    %10 = vector.load %arg5[%c0_9, %c0_10] : memref<1x32xf32, #tpu.memory_space<vmem>>, vector<1x32xf32>
    %11 = vector.broadcast %10 : vector<1x32xf32> to vector<256x32xf32>
    %12 = arith.addf %9, %11 : vector<256x32xf32>
    %cst_11 = arith.constant 0.000000e+00 : f32
    %13 = vector.broadcast %cst_11 : f32 to vector<256x32xf32>
    %14 = arith.maximumf %12, %13 : vector<256x32xf32>
    %c0_12 = arith.constant 0 : index
    %c0_13 = arith.constant 0 : index
    %15 = vector.load %arg6[%c0_12, %c0_13] : memref<1x32xf32, #tpu.memory_space<vmem>>, vector<1x32xf32>
    %16 = vector.broadcast %15 : vector<1x32xf32> to vector<256x32xf32>
    %17 = arith.mulf %14, %16 : vector<256x32xf32>
    %cst_14 = arith.constant dense<0.000000e+00> : vector<256xf32>
    %18 = vector.multi_reduction <add>, %17, %cst_14 [1] : vector<256x32xf32> to vector<256xf32>
    %19 = vector.shape_cast %18 : vector<256xf32> to vector<256x1xf32>
    %c0_15 = arith.constant 0 : index
    %c0_16 = arith.constant 0 : index
    %20 = vector.load %arg7[%c0_15, %c0_16] : memref<1x1xf32, #tpu.memory_space<vmem>>, vector<1x1xf32>
    %21 = vector.broadcast %20 : vector<1x1xf32> to vector<256x1xf32>
    %22 = arith.addf %19, %21 : vector<256x1xf32>
    %c0_17 = arith.constant 0 : index
    %c0_18 = arith.constant 0 : index
    %23 = vector.load %arg8[%c0_17, %c0_18] : memref<256x1xf32, #tpu.memory_space<vmem>>, vector<256x1xf32>
    tpu.vector_store %arg8[%c0_17, %c0_18], %22 {strides = array<i32>} : memref<256x1xf32, #tpu.memory_space<vmem>>, vector<256x1xf32>,
    return
  }
  func.func @transform_0(%arg0: i32) -> (i32, i32) {
    %c0_i32 = arith.constant 0 : i32
    %c0_i32_0 = arith.constant 0 : i32
    return %arg0, %c0_i32 : i32, i32
  }
  func.func @transform_1(%arg0: i32) -> (i32, i32) {
    %c0_i32 = arith.constant 0 : i32
    %c0_i32_0 = arith.constant 0 : i32
    %c0_i32_1 = arith.constant 0 : i32
    return %c0_i32, %c0_i32_0 : i32, i32
  }
  func.func @transform_2(%arg0: i32) -> (i32, i32) {
    %c0_i32 = arith.constant 0 : i32
    %c0_i32_0 = arith.constant 0 : i32
    %c0_i32_1 = arith.constant 0 : i32
    return %c0_i32, %c0_i32_0 : i32, i32
  }
  func.func @transform_3(%arg0: i32) -> (i32, i32) {
    %c0_i32 = arith.constant 0 : i32
    %c0_i32_0 = arith.constant 0 : i32
    %c0_i32_1 = arith.constant 0 : i32
    return %c0_i32, %c0_i32_0 : i32, i32
  }
  func.func @transform_4(%arg0: i32) -> (i32, i32) {
    %c0_i32 = arith.constant 0 : i32
    %c0_i32_0 = arith.constant 0 : i32
    %c0_i32_1 = arith.constant 0 : i32
    return %c0_i32, %c0_i32_0 : i32, i32
  }
  func.func @transform_5(%arg0: i32) -> (i32, i32) {
    %c0_i32 = arith.constant 0 : i32
    %c0_i32_0 = arith.constant 0 : i32
    %c0_i32_1 = arith.constant 0 : i32
    return %c0_i32, %c0_i32_0 : i32, i32
  }
  func.func @transform_6(%arg0: i32) -> (i32, i32) {
    %c0_i32 = arith.constant 0 : i32
    %c0_i32_0 = arith.constant 0 : i32
    %c0_i32_1 = arith.constant 0 : i32
    return %c0_i32, %c0_i32_0 : i32, i32
  }
  func.func @transform_7(%arg0: i32) -> (i32, i32) {
    %c0_i32 = arith.constant 0 : i32
    %c0_i32_0 = arith.constant 0 : i32
    return %arg0, %c0_i32 : i32, i32
  }
}

</mosaic_0001>

<llo_original>
// kernel: tpu_custom_call.1
$region0: #{tpu_custom_call.1}
  #allocation0 [shape = 'u32[]', space=smem, size = 0x4, offset = 0x4, fixed_abs, tag = 'smem constant byte address 0x4 - core index']
  #allocation1 [shape = 'u32[144,128]{1,0:T(1,128)}', space=vmem, size = 0x12000, scoped, tag = 'internal scratch']
  #allocation2 [shape = 'f32[1,1]{1,0:T(1,128)S(1)}', space=vmem, size = 0x200, scoped, tag = 'scoped memory for tpu_custom_call.1']
  %s0 = inlined_call_operand.vmem [shape: f32[300,16], index: 0, kind: input, shape index: {}]
  %s1 = inlined_call_operand.vmem [shape: f32[16,32], index: 1, kind: input, shape index: {}]
  %s2 = inlined_call_operand.vmem [shape: f32[1,32], index: 2, kind: input, shape index: {}]
  %s3 = inlined_call_operand.vmem [shape: f32[32,32], index: 3, kind: input, shape index: {}]
  %s4 = inlined_call_operand.vmem [shape: f32[1,32], index: 4, kind: input, shape index: {}]
  %s5 = inlined_call_operand.vmem [shape: f32[1,32], index: 5, kind: input, shape index: {}]
  %s6 = inlined_call_operand.<no memory space> [shape: f32[1,1], index: 6, kind: input, shape index: {}]
  %s7 = inlined_call_operand.vmem [shape: f32[300,1], index: 7, kind: output, shape index: {}]
  %s8 = sld [smem:[#allocation0]]
  $region109: #{tpu_custom_call.1} parent=0
    _
  %s10 = ssub.s32 1, %s8
  %s11 = scalar_select 0, %s10, %s8
  %v12 = vstv %s6
  %13 = vst [vmem:[#allocation2] sm:$0x1] %v12
  $region1: #{tpu_custom_call.1} parent=0
    #allocation3 [shape = 'u8[262144]{0}', space=vmem, size = 0x40000, scoped, tag = 'output window, operand 0']
    loop: start=0, step=1, limit=4
    $region2: #{tpu_custom_call.1} parent=1 // loop_pre_header
      _
    $region3: #{tpu_custom_call.1} parent=1 // loop_header
      %s15 = sphi 0, %s19
      %p16 = scmp.ge.s32.totalorder %s15, 4
      %s25 = sphi 0, %s27
      %s28 = sphi 0, %s25
      %s29 = sphi 0, %s28
      %s45 = sphi 0, %s29
      %s49 = sphi 0, %s49
      %s51 = sphi 0, %s49
      %s52 = sphi 0, %s51
      %s66 = sphi 0, %s52
      %s70 = sphi 0, %s70
      %s72 = sphi 0, %s70
      %s73 = sphi 0, %s72
      %s87 = sphi 0, %s73
      %s91 = sphi 0, %s91
      %s93 = sphi 0, %s91
      %s94 = sphi 0, %s93
      %s108 = sphi 0, %s94
      %s112 = sphi 0, %s112
      %s114 = sphi 0, %s112
      %s115 = sphi 0, %s114
      %s129 = sphi 0, %s115
      %s133 = sphi 0, %s133
      %s135 = sphi 0, %s133
      %s136 = sphi 0, %s135
      %s150 = sphi 0, %s136
      %s154 = sphi 0, %s154
      %s156 = sphi 0, %s154
      %s157 = sphi 0, %s156
      %s171 = sphi 0, %s157
      %s177 = sphi 0, %s179
      %s180 = sphi 0, %s177
      %s181 = sphi 0, %s180
      %s197 = sphi 0, %s181
    $region4: #{tpu_custom_call.1} parent=1 // loop_header_branch
      %18 = sbr.rel (%p16) target = $region8
    $region5: #{tpu_custom_call.1} parent=1 // loop_body
      %s20 = ssub.s32 %s15, 1
      %s21 = ssub.s32 %s15, 2
      %s22 = sadd.s32 %s15, 1
      %s23 = ssub.s32 %s15, %s22
      %p24 = scmp.eq.s32.totalorder %s23, 0
      %s26 = sadd.s32 %s25, 1
      %s27 = scalar_select %p24, %s25, %s26
      %p30 = pneg %p24
      %p31 = scmp.eq.s32.totalorder %s15, 1
      %p32 = por %p30, %p31
      %p33 = scmp.ne.s32.totalorder %s25, %s28
      %p34 = scmp.eq.s32.totalorder %s15, 0
      %p35 = por %p33, %p34
      %p36 = scmp.ne.s32.totalorder %s25, %s28
      %p37 = scmp.eq.s32.totalorder %s20, 1
      %p38 = por %p36, %p37
      %p39 = scmp.ne.s32.totalorder %s28, %s29
      %p40 = scmp.eq.s32.totalorder %s20, 0
      %p41 = por %p39, %p40
      %p42 = scmp.ne.s32.totalorder %s28, %s29
      %p43 = scmp.eq.s32.totalorder %s21, 1
      %p44 = por %p42, %p43
      %p46 = scmp.ne.s32.totalorder %s29, %s45
      %p47 = scmp.eq.s32.totalorder %s21, 0
      %p48 = por %p46, %p47
      %s50 = sadd.s32 %s49, 1
      %p53 = scmp.eq.s32.totalorder %s15, 1
      %p54 = scmp.ne.s32.totalorder %s49, %s51
      %p55 = scmp.eq.s32.totalorder %s15, 0
      %p56 = por %p54, %p55
      %p57 = scmp.ne.s32.totalorder %s49, %s51
      %p58 = scmp.eq.s32.totalorder %s20, 1
      %p59 = por %p57, %p58
      %p60 = scmp.ne.s32.totalorder %s51, %s52
      %p61 = scmp.eq.s32.totalorder %s20, 0
      %p62 = por %p60, %p61
      %p63 = scmp.ne.s32.totalorder %s51, %s52
      %p64 = scmp.eq.s32.totalorder %s21, 1
      %p65 = por %p63, %p64
      %p67 = scmp.ne.s32.totalorder %s52, %s66
      %p68 = scmp.eq.s32.totalorder %s21, 0
      %p69 = por %p67, %p68
      %s71 = sadd.s32 %s70, 1
      %p74 = scmp.eq.s32.totalorder %s15, 1
      %p75 = scmp.ne.s32.totalorder %s70, %s72
      %p76 = scmp.eq.s32.totalorder %s15, 0
      %p77 = por %p75, %p76
      %p78 = scmp.ne.s32.totalorder %s70, %s72
      %p79 = scmp.eq.s32.totalorder %s20, 1
      %p80 = por %p78, %p79
      %p81 = scmp.ne.s32.totalorder %s72, %s73
      %p82 = scmp.eq.s32.totalorder %s20, 0
      %p83 = por %p81, %p82
      %p84 = scmp.ne.s32.totalorder %s72, %s73
      %p85 = scmp.eq.s32.totalorder %s21, 1
      %p86 = por %p84, %p85
      %p88 = scmp.ne.s32.totalorder %s73, %s87
      %p89 = scmp.eq.s32.totalorder %s21, 0
      %p90 = por %p88, %p89
      %s92 = sadd.s32 %s91, 1
      %p95 = scmp.eq.s32.totalorder %s15, 1
      %p96 = scmp.ne.s32.totalorder %s91, %s93
      %p97 = scmp.eq.s32.totalorder %s15, 0
      %p98 = por %p96, %p97
      %p99 = scmp.ne.s32.totalorder %s91, %s93
      %p100 = scmp.eq.s32.totalorder %s20, 1
      %p101 = por %p99, %p100
      %p102 = scmp.ne.s32.totalorder %s93, %s94
      %p103 = scmp.eq.s32.totalorder %s20, 0
      %p104 = por %p102, %p103
      %p105 = scmp.ne.s32.totalorder %s93, %s94
      %p106 = scmp.eq.s32.totalorder %s21, 1
      %p107 = por %p105, %p106
      %p109 = scmp.ne.s32.totalorder %s94, %s108
      %p110 = scmp.eq.s32.totalorder %s21, 0
      %p111 = por %p109, %p110
      %s113 = sadd.s32 %s112, 1
      %p116 = scmp.eq.s32.totalorder %s15, 1
      %p117 = scmp.ne.s32.totalorder %s112, %s114
      %p118 = scmp.eq.s32.totalorder %s15, 0
      %p119 = por %p117, %p118
      %p120 = scmp.ne.s32.totalorder %s112, %s114
      %p121 = scmp.eq.s32.totalorder %s20, 1
      %p122 = por %p120, %p121
      %p123 = scmp.ne.s32.totalorder %s114, %s115
      %p124 = scmp.eq.s32.totalorder %s20, 0
      %p125 = por %p123, %p124
      %p126 = scmp.ne.s32.totalorder %s114, %s115
      %p127 = scmp.eq.s32.totalorder %s21, 1
      %p128 = por %p126, %p127
      %p130 = scmp.ne.s32.totalorder %s115, %s129
      %p131 = scmp.eq.s32.totalorder %s21, 0
      %p132 = por %p130, %p131
      %s134 = sadd.s32 %s133, 1
      %p137 = scmp.eq.s32.totalorder %s15, 1
      %p138 = scmp.ne.s32.totalorder %s133, %s135
      %p139 = scmp.eq.s32.totalorder %s15, 0
      %p140 = por %p138, %p139
      %p141 = scmp.ne.s32.totalorder %s133, %s135
      %p142 = scmp.eq.s32.totalorder %s20, 1
      %p143 = por %p141, %p142
      %p144 = scmp.ne.s32.totalorder %s135, %s136
      %p145 = scmp.eq.s32.totalorder %s20, 0
      %p146 = por %p144, %p145
      %p147 = scmp.ne.s32.totalorder %s135, %s136
      %p148 = scmp.eq.s32.totalorder %s21, 1
      %p149 = por %p147, %p148
      %p151 = scmp.ne.s32.totalorder %s136, %s150
      %p152 = scmp.eq.s32.totalorder %s21, 0
      %p153 = por %p151, %p152
      %s155 = sadd.s32 %s154, 1
      %p158 = scmp.eq.s32.totalorder %s15, 1
      %p159 = scmp.ne.s32.totalorder %s154, %s156
      %p160 = scmp.eq.s32.totalorder %s15, 0
      %p161 = por %p159, %p160
      %p162 = scmp.ne.s32.totalorder %s154, %s156
      %p163 = scmp.eq.s32.totalorder %s20, 1
      %p164 = por %p162, %p163
      %p165 = scmp.ne.s32.totalorder %s156, %s157
      %p166 = scmp.eq.s32.totalorder %s20, 0
      %p167 = por %p165, %p166
      %p168 = scmp.ne.s32.totalorder %s156, %s157
      %p169 = scmp.eq.s32.totalorder %s21, 1
      %p170 = por %p168, %p169
      %p172 = scmp.ne.s32.totalorder %s157, %s171
      %p173 = scmp.eq.s32.totalorder %s21, 0
      %p174 = por %p172, %p173
      %s175 = ssub.s32 %s15, %s22
      %p176 = scmp.eq.s32.totalorder %s175, 0
      %s178 = sadd.s32 %s177, 1
      %s179 = scalar_select %p176, %s177, %s178
      %p182 = pneg %p176
      %p183 = scmp.eq.s32.totalorder %s15, 1
      %p184 = por %p182, %p183
      %p185 = scmp.ne.s32.totalorder %s177, %s180
      %p186 = scmp.eq.s32.totalorder %s15, 0
      %p187 = por %p185, %p186
      %p188 = scmp.ne.s32.totalorder %s177, %s180
      %p189 = scmp.eq.s32.totalorder %s20, 1
      %p190 = por %p188, %p189
      %p191 = scmp.ne.s32.totalorder %s180, %s181
      %p192 = scmp.eq.s32.totalorder %s20, 0
      %p193 = por %p191, %p192
      %p194 = scmp.ne.s32.totalorder %s180, %s181
      %p195 = scmp.eq.s32.totalorder %s21, 1
      %p196 = por %p194, %p195
      %p198 = scmp.ne.s32.totalorder %s181, %s197
      %p199 = scmp.eq.s32.totalorder %s21, 0
      %p200 = por %p198, %p199
      %p201 = scmp.le.s32.totalorder 1, %s15
      %p202 = scmp.lt.s32.totalorder %s15, 3
      %p203 = pnand %p201, %p202
      %p204 = pneg %p203
      // Predicated region
      $region9: #{tpu_custom_call.1} parent=5 // pred_check
        _
      $region10: #{tpu_custom_call.1} parent=5 // pred_check_branch
        %206 = sbr.rel (%p203) target = $region12
      $region11: #{tpu_custom_call.1} parent=5 // pred_region
        %s207 = ssub.s32 %s15, 1
        // Predicated region
        $region13: #{tpu_custom_call.1} parent=11 // pred_check
          %p208 = pneg %p62
        $region14: #{tpu_custom_call.1} parent=11 // pred_check_branch
          %210 = sbr.rel (%p208) target = $region16
        $region15: #{tpu_custom_call.1} parent=11 // pred_region
          _
        $region16: #{tpu_custom_call.1} parent=11 // pred_fallthru
          _
        // Predicated region
        $region17: #{tpu_custom_call.1} parent=11 // pred_check
          %p211 = pneg %p83
        $region18: #{tpu_custom_call.1} parent=11 // pred_check_branch
          %213 = sbr.rel (%p211) target = $region20
        $region19: #{tpu_custom_call.1} parent=11 // pred_region
          _
        $region20: #{tpu_custom_call.1} parent=11 // pred_fallthru
          _
        // Predicated region
        $region21: #{tpu_custom_call.1} parent=11 // pred_check
          %p214 = pneg %p104
        $region22: #{tpu_custom_call.1} parent=11 // pred_check_branch
          %216 = sbr.rel (%p214) target = $region24
        $region23: #{tpu_custom_call.1} parent=11 // pred_region
          _
        $region24: #{tpu_custom_call.1} parent=11 // pred_fallthru
          _
        // Predicated region
        $region25: #{tpu_custom_call.1} parent=11 // pred_check
          %p217 = pneg %p125
        $region26: #{tpu_custom_call.1} parent=11 // pred_check_branch
          %219 = sbr.rel (%p217) target = $region28
        $region27: #{tpu_custom_call.1} parent=11 // pred_region
          _
        $region28: #{tpu_custom_call.1} parent=11 // pred_fallthru
          _
        // Predicated region
        $region29: #{tpu_custom_call.1} parent=11 // pred_check
          %p220 = pneg %p146
        $region30: #{tpu_custom_call.1} parent=11 // pred_check_branch
          %222 = sbr.rel (%p220) target = $region32
        $region31: #{tpu_custom_call.1} parent=11 // pred_region
          _
        $region32: #{tpu_custom_call.1} parent=11 // pred_fallthru
          _
        // Predicated region
        $region33: #{tpu_custom_call.1} parent=11 // pred_check
          %p223 = pneg %p167
        $region34: #{tpu_custom_call.1} parent=11 // pred_check_branch
          %225 = sbr.rel (%p223) target = $region36
        $region35: #{tpu_custom_call.1} parent=11 // pred_region
          _
        $region36: #{tpu_custom_call.1} parent=11 // pred_fallthru
          _
      $region12: #{tpu_custom_call.1} parent=5 // pred_fallthru
        _
      %p226 = scmp.lt.s32.totalorder %s15, 2
      // Predicated region
      $region37: #{tpu_custom_call.1} parent=5 // pred_check
        %p227 = pneg %p226
      $region38: #{tpu_custom_call.1} parent=5 // pred_check_branch
        %229 = sbr.rel (%p227) target = $region40
      $region39: #{tpu_custom_call.1} parent=5 // pred_region
        // Predicated region
        $region41: #{tpu_custom_call.1} parent=39 // pred_check
          %p230 = pneg %p35
        $region42: #{tpu_custom_call.1} parent=39 // pred_check_branch
          %232 = sbr.rel (%p230) target = $region44
        $region43: #{tpu_custom_call.1} parent=39 // pred_region
          %s233 = smul.u32 32, %s15
          %s234 = ssub.s32 38, %s233
          %p235 = scmp.lt.s32.totalorder %s234, 32
          %s236 = scalar_select %p235, %s234, 32
          %s237 = smul.u32 128, %s236
          %p238 = scmp.lt.s32.totalorder %s233, 37
          %s239 = scalar_select %p238, %s233, 37
          %s240 = smul.addr %s239, 8
          %s241 = scalar_lea.vmem %s0, %s240
          %s242 = smul.u32 32, %s15
          %s243 = ssub.s32 38, %s242
          %p244 = scmp.lt.s32.totalorder %s243, 32
          %s245 = scalar_select %p244, %s243, 32
          %s246 = smul.u32 128, %s245
        $region44: #{tpu_custom_call.1} parent=39 // pred_fallthru
          _
      $region40: #{tpu_custom_call.1} parent=5 // pred_fallthru
        _
      %p247 = scmp.le.s32.totalorder 1, %s15
      %p248 = scmp.lt.s32.totalorder %s15, 3
      %p249 = pnand %p247, %p248
      %p250 = pneg %p249
      // Predicated region
      $region45: #{tpu_custom_call.1} parent=5 // pred_check
        _
      $region46: #{tpu_custom_call.1} parent=5 // pred_check_branch
        %252 = sbr.rel (%p249) target = $region48
      $region47: #{tpu_custom_call.1} parent=5 // pred_region
        %s253 = ssub.s32 %s15, 1
        %s254 = smul.u32 32, %s20
        %s255 = ssub.s32 38, %s254
        %p256 = scmp.lt.s32.totalorder %s255, 32
        %s257 = scalar_select %p256, %s255, 32
        %s258 = smul.u32 128, %s257
        %p259 = scmp.lt.s32.totalorder %s254, 37
        %s260 = scalar_select %p259, %s254, 37
        %s261 = smul.addr %s260, 8
        %s262 = scalar_lea.vmem %s0, %s261
        %p263 = pneg %p41
        %p264 = pneg %p38
        %p265 = pneg %p62
        %p266 = pneg %p59
        %p267 = pneg %p83
        %p268 = pneg %p80
        %p269 = pneg %p104
        %p270 = pneg %p101
        %p271 = pneg %p125
        %p272 = pneg %p122
        %p273 = pneg %p146
        %p274 = pneg %p143
        %p275 = pneg %p167
        %p276 = pneg %p164
        %p277 = pneg %p193
        %p278 = pneg %p190
        %s279 = sand.u32 %s180, 1
        %s280 = sand.u32 %s180, 1
        %s281 = smul.addr %s280, 256
        %s282 = scalar_lea.vmem [#allocation3], %s281
        %s283 = smul.u32 32, %s20
        %s284 = ssub.s32 38, %s283
        %p285 = scmp.lt.s32.totalorder %s284, 32
        %s286 = scalar_select %p285, %s284, 32
        %s287 = smul.u32 128, %s286
        %p288 = scmp.lt.s32.totalorder %s283, 37
        %s289 = scalar_select %p288, %s283, 37
        %s290 = smul.addr %s289, 8
        %s291 = scalar_lea.vmem %s0, %s290
        %s292 = smul.u32 32, %s20
        %s293 = ssub.s32 38, %s292
        %p294 = scmp.lt.s32.totalorder %s293, 32
        %s295 = scalar_select %p294, %s293, 32
        %s296 = smul.u32 128, %s295
        %s297 = smul.u32 32, %s20
        %s298 = ssub.s32 38, %s297
        %p299 = scmp.lt.s32.totalorder %s298, 32
        %s300 = scalar_select %p299, %s298, 32
        %s301 = smul.u32 128, %s300
        %v302 = vld [vmem:[%s291] sm:$0xff]
        %v303 = vld [vmem:[%s291 + $0x8] sm:$0xff]
        %v304 = vld [vmem:[%s291 + $0x10] sm:$0xff]
        %v305 = vld [vmem:[%s291 + $0x18] sm:$0xff]
        %v306 = vld [vmem:[%s291 + $0x20] sm:$0xff]
        %v307 = vld [vmem:[%s291 + $0x28] sm:$0xff]
        %v308 = vld [vmem:[%s291 + $0x30] sm:$0xff]
        %v309 = vld [vmem:[%s291 + $0x38] sm:$0xff]
        %v310 = vld [vmem:[%s291 + $0x40] sm:$0xff]
        %v311 = vld [vmem:[%s291 + $0x48] sm:$0xff]
        %v312 = vld [vmem:[%s291 + $0x50] sm:$0xff]
        %v313 = vld [vmem:[%s291 + $0x58] sm:$0xff]
        %v314 = vld [vmem:[%s291 + $0x60] sm:$0xff]
        %v315 = vld [vmem:[%s291 + $0x68] sm:$0xff]
        %v316 = vld [vmem:[%s291 + $0x70] sm:$0xff]
        %v317 = vld [vmem:[%s291 + $0x78] sm:$0xff]
        %v318 = vld [vmem:[%s291 + $0x80] sm:$0xff]
        %v319 = vld [vmem:[%s291 + $0x88] sm:$0xff]
        %v320 = vld [vmem:[%s291 + $0x90] sm:$0xff]
        %v321 = vld [vmem:[%s291 + $0x98] sm:$0xff]
        %v322 = vld [vmem:[%s291 + $0xa0] sm:$0xff]
        %v323 = vld [vmem:[%s291 + $0xa8] sm:$0xff]
        %v324 = vld [vmem:[%s291 + $0xb0] sm:$0xff]
        %v325 = vld [vmem:[%s291 + $0xb8] sm:$0xff]
        %v326 = vld [vmem:[%s291 + $0xc0] sm:$0xff]
        %v327 = vld [vmem:[%s291 + $0xc8] sm:$0xff]
        %v328 = vld [vmem:[%s291 + $0xd0] sm:$0xff]
        %v329 = vld [vmem:[%s291 + $0xd8] sm:$0xff]
        %v330 = vld [vmem:[%s291 + $0xe0] sm:$0xff]
        %v331 = vld [vmem:[%s291 + $0xe8] sm:$0xff]
        %v332 = vld [vmem:[%s291 + $0xf0] sm:$0xff]
        %v333 = vld [vmem:[%s291 + $0xf8] sm:$0xff]
        %v334 = vld [vmem:[%s1] sm:$0xff]
        %v335 = vld [vmem:[%s1 + $0x8] sm:$0xff]
        %v336 = vld [vmem:[%s2] sm:$0x1]
        %v338 = vlaneseq
        %v339 = vshrl.u32 %v338, 7
        %v340 = vsub.s32 0, %v339
        %v341 = vrot.slane %v336, %v340
        %vm343 = vcmask 130048
        %v345 = vsel %vm343, %v302, 0
        %v348 = vsel %vm343, %v303, 0
        %v351 = vsel %vm343, %v304, 0
        %v354 = vsel %vm343, %v305, 0
        %v357 = vsel %vm343, %v306, 0
        %v360 = vsel %vm343, %v307, 0
        %v363 = vsel %vm343, %v308, 0
        %v366 = vsel %vm343, %v309, 0
        %v369 = vsel %vm343, %v310, 0
        %v372 = vsel %vm343, %v311, 0
        %v375 = vsel %vm343, %v312, 0
        %v378 = vsel %vm343, %v313, 0
        %v381 = vsel %vm343, %v314, 0
        %v384 = vsel %vm343, %v315, 0
        %v387 = vsel %vm343, %v316, 0
        %v390 = vsel %vm343, %v317, 0
        %v393 = vsel %vm343, %v318, 0
        %v396 = vsel %vm343, %v319, 0
        %v399 = vsel %vm343, %v320, 0
        %v402 = vsel %vm343, %v321, 0
        %v405 = vsel %vm343, %v322, 0
        %v408 = vsel %vm343, %v323, 0
        %v411 = vsel %vm343, %v324, 0
        %v414 = vsel %vm343, %v325, 0
        %v417 = vsel %vm343, %v326, 0
        %v420 = vsel %vm343, %v327, 0
        %v423 = vsel %vm343, %v328, 0
        %v426 = vsel %vm343, %v329, 0
        %v429 = vsel %vm343, %v330, 0
        %v432 = vsel %vm343, %v331, 0
        %v435 = vsel %vm343, %v332, 0
        %v438 = vsel %vm343, %v333, 0
        %440 = vmatprep.subr.mxu0 0.0
        %441 = vmatpush1.msra.mxu0 %v334
        %442 = vmatprep.subr.mxu0 0.0
        %443 = vmatpush1.msra.mxu0 %v335
        %444 = vmatprep.subr.mxu0 0.0
        %445 = vmatpush1.msra.mxu0 0.0
        %446 = vmatprep.subr.mxu0 0.0
        %447 = vmatpush1.msra.mxu0 0.0
        %448 = vmatprep.subr.mxu0 0.0
        %449 = vmatpush1.msra.mxu0 0.0
        %450 = vmatprep.subr.mxu0 0.0
        %451 = vmatpush1.msra.mxu0 0.0
        %452 = vmatprep.subr.mxu0 0.0
        %453 = vmatpush1.msra.mxu0 0.0
        %454 = vmatprep.subr.mxu0 0.0
        %455 = vmatpush1.msra.mxu0 0.0
        %456 = vmatprep.subr.mxu0 0.0
        %457 = vmatpush1.msra.mxu0 0.0
        %458 = vmatprep.subr.mxu0 0.0
        %459 = vmatpush1.msra.mxu0 0.0
        %460 = vmatprep.subr.mxu0 0.0
        %461 = vmatpush1.msra.mxu0 0.0
        %462 = vmatprep.subr.mxu0 0.0
        %463 = vmatpush1.msra.mxu0 0.0
        %464 = vmatprep.subr.mxu0 0.0
        %465 = vmatpush1.msra.mxu0 0.0
        %466 = vmatprep.subr.mxu0 0.0
        %467 = vmatpush1.msra.mxu0 0.0
        %468 = vmatprep.subr.mxu0 0.0
        %469 = vmatpush1.msra.mxu0 0.0
        %470 = vmatprep.subr.mxu0 0.0
        %471 = vmatpush1.msra.mxu0 0.0
        %472 = vmatprep.subr.mxu0 0.0
        %473 = vmatpush1.msra.mxu0 0.0
        %474 = vmatprep.subr.mxu0 0.0
        %475 = vmatpush1.msra.mxu0 0.0
        %476 = vmatprep.subr.mxu0 0.0
        %477 = vmatpush1.msra.mxu0 0.0
        %478 = vmatprep.subr.mxu0 0.0
        %479 = vmatpush1.msra.mxu0 0.0
        %480 = vmatprep.subr.mxu0 0.0
        %481 = vmatpush1.msra.mxu0 0.0
        %482 = vmatprep.subr.mxu0 0.0
        %483 = vmatpush1.msra.mxu0 0.0
        %484 = vmatprep.subr.mxu0 0.0
        %485 = vmatpush1.msra.mxu0 0.0
        %486 = vmatprep.subr.mxu0 0.0
        %487 = vmatpush1.msra.mxu0 0.0
        %488 = vmatprep.subr.mxu0 0.0
        %489 = vmatpush1.msra.mxu0 0.0
        %490 = vmatprep.subr.mxu0 0.0
        %491 = vmatpush1.msra.mxu0 0.0
        %492 = vmatprep.subr.mxu0 0.0
        %493 = vmatpush1.msra.mxu0 0.0
        %494 = vmatprep.subr.mxu0 0.0
        %495 = vmatpush1.msra.mxu0 0.0
        %496 = vmatprep.subr.mxu0 0.0
        %497 = vmatpush1.msra.mxu0 0.0
        %498 = vmatprep.subr.mxu0 0.0
        %499 = vmatpush1.msra.mxu0 0.0
        %500 = vmatprep.subr.mxu0 0.0
        %501 = vmatpush1.msra.mxu0 0.0
        %502 = vmatprep.subr.mxu0 0.0
        %503 = vmatpush1.msra.mxu0 0.0
        %504 = vmatprep.mubr.f32.mxu0 0.0
        %505 = vmatmul.mubr.f32.gmra.mrb[0].mxu0 %v345
        %v506 = vpop.f32.mrb[0].mxu0
        %v507 = vadd.f32 %v341, %v506
        %v508 = vpop.f32.mrb[0].mxu0
        %509 = vmatprep.mubr.f32.mxu0 0.0
        %510 = vmatmul.mubr.f32.gmra.mrb[0].mxu0 %v348
        %v511 = vpop.f32.mrb[0].mxu0
        %v512 = vadd.f32 %v341, %v511
        %v513 = vpop.f32.mrb[0].mxu0
        %514 = vmatprep.mubr.f32.mxu0 0.0
        %515 = vmatmul.mubr.f32.gmra.mrb[0].mxu0 %v351
        %v516 = vpop.f32.mrb[0].mxu0
        %v517 = vadd.f32 %v341, %v516
        %v518 = vpop.f32.mrb[0].mxu0
        %519 = vmatprep.mubr.f32.mxu0 0.0
        %520 = vmatmul.mubr.f32.gmra.mrb[0].mxu0 %v354
        %v521 = vpop.f32.mrb[0].mxu0
        %v522 = vadd.f32 %v341, %v521
        %v523 = vpop.f32.mrb[0].mxu0
        %524 = vmatprep.mubr.f32.mxu0 0.0
        %525 = vmatmul.mubr.f32.gmra.mrb[0].mxu0 %v357
        %v526 = vpop.f32.mrb[0].mxu0
        %v527 = vadd.f32 %v341, %v526
        %v528 = vpop.f32.mrb[0].mxu0
        %529 = vmatprep.mubr.f32.mxu0 0.0
        %530 = vmatmul.mubr.f32.gmra.mrb[0].mxu0 %v360
        %v531 = vpop.f32.mrb[0].mxu0
        %v532 = vadd.f32 %v341, %v531
        %v533 = vpop.f32.mrb[0].mxu0
        %534 = vmatprep.mubr.f32.mxu0 0.0
        %535 = vmatmul.mubr.f32.gmra.mrb[0].mxu0 %v363
        %v536 = vpop.f32.mrb[0].mxu0
        %v537 = vadd.f32 %v341, %v536
        %v538 = vpop.f32.mrb[0].mxu0
        %539 = vmatprep.mubr.f32.mxu0 0.0
        %540 = vmatmul.mubr.f32.gmra.mrb[0].mxu0 %v366
        %v541 = vpop.f32.mrb[0].mxu0
        %v542 = vadd.f32 %v341, %v541
        %v543 = vpop.f32.mrb[0].mxu0
        %544 = vmatprep.mubr.f32.mxu0 0.0
        %545 = vmatmul.mubr.f32.gmra.mrb[0].mxu0 %v369
        %v546 = vpop.f32.mrb[0].mxu0
        %v547 = vadd.f32 %v341, %v546
        %v548 = vpop.f32.mrb[0].mxu0
        %549 = vmatprep.mubr.f32.mxu0 0.0
        %550 = vmatmul.mubr.f32.gmra.mrb[0].mxu0 %v372
        %v551 = vpop.f32.mrb[0].mxu0
        %v552 = vadd.f32 %v341, %v551
        %v553 = vpop.f32.mrb[0].mxu0
        %554 = vmatprep.mubr.f32.mxu0 0.0
        %555 = vmatmul.mubr.f32.gmra.mrb[0].mxu0 %v375
        %v556 = vpop.f32.mrb[0].mxu0
        %v557 = vadd.f32 %v341, %v556
        %v558 = vpop.f32.mrb[0].mxu0
        %559 = vmatprep.mubr.f32.mxu0 0.0
        %560 = vmatmul.mubr.f32.gmra.mrb[0].mxu0 %v378
        %v561 = vpop.f32.mrb[0].mxu0
        %v562 = vadd.f32 %v341, %v561
        %v563 = vpop.f32.mrb[0].mxu0
        %564 = vmatprep.mubr.f32.mxu0 0.0
        %565 = vmatmul.mubr.f32.gmra.mrb[0].mxu0 %v381
        %v566 = vpop.f32.mrb[0].mxu0
        %v567 = vadd.f32 %v341, %v566
        %v568 = vpop.f32.mrb[0].mxu0
        %569 = vmatprep.mubr.f32.mxu0 0.0
        %570 = vmatmul.mubr.f32.gmra.mrb[0].mxu0 %v384
        %v571 = vpop.f32.mrb[0].mxu0
        %v572 = vadd.f32 %v341, %v571
        %v573 = vpop.f32.mrb[0].mxu0
        %574 = vmatprep.mubr.f32.mxu0 0.0
        %575 = vmatmul.mubr.f32.gmra.mrb[0].mxu0 %v387
        %v576 = vpop.f32.mrb[0].mxu0
        %v577 = vadd.f32 %v341, %v576
        %v578 = vpop.f32.mrb[0].mxu0
        %579 = vmatprep.mubr.f32.mxu0 0.0
        %580 = vmatmul.mubr.f32.gmra.mrb[0].mxu0 %v390
        %v581 = vpop.f32.mrb[0].mxu0
        %v582 = vadd.f32 %v341, %v581
        %v583 = vpop.f32.mrb[0].mxu0
        %584 = vmatprep.mubr.f32.mxu0 0.0
        %585 = vmatmul.mubr.f32.gmra.mrb[0].mxu0 %v393
        %v586 = vpop.f32.mrb[0].mxu0
        %v587 = vadd.f32 %v341, %v586
        %v588 = vpop.f32.mrb[0].mxu0
        %589 = vmatprep.mubr.f32.mxu0 0.0
        %590 = vmatmul.mubr.f32.gmra.mrb[0].mxu0 %v396
        %v591 = vpop.f32.mrb[0].mxu0
        %v592 = vadd.f32 %v341, %v591
        %v593 = vpop.f32.mrb[0].mxu0
        %594 = vmatprep.mubr.f32.mxu0 0.0
        %595 = vmatmul.mubr.f32.gmra.mrb[0].mxu0 %v399
        %v596 = vpop.f32.mrb[0].mxu0
        %v597 = vadd.f32 %v341, %v596
        %v598 = vpop.f32.mrb[0].mxu0
        %599 = vmatprep.mubr.f32.mxu0 0.0
        %600 = vmatmul.mubr.f32.gmra.mrb[0].mxu0 %v402
        %v601 = vpop.f32.mrb[0].mxu0
        %v602 = vadd.f32 %v341, %v601
        %v603 = vpop.f32.mrb[0].mxu0
        %604 = vmatprep.mubr.f32.mxu0 0.0
        %605 = vmatmul.mubr.f32.gmra.mrb[0].mxu0 %v405
        %v606 = vpop.f32.mrb[0].mxu0
        %v607 = vadd.f32 %v341, %v606
        %v608 = vpop.f32.mrb[0].mxu0
        %609 = vmatprep.mubr.f32.mxu0 0.0
        %610 = vmatmul.mubr.f32.gmra.mrb[0].mxu0 %v408
        %v611 = vpop.f32.mrb[0].mxu0
        %v612 = vadd.f32 %v341, %v611
        %v613 = vpop.f32.mrb[0].mxu0
        %614 = vmatprep.mubr.f32.mxu0 0.0
        %615 = vmatmul.mubr.f32.gmra.mrb[0].mxu0 %v411
        %v616 = vpop.f32.mrb[0].mxu0
        %v617 = vadd.f32 %v341, %v616
        %v618 = vpop.f32.mrb[0].mxu0
        %619 = vmatprep.mubr.f32.mxu0 0.0
        %620 = vmatmul.mubr.f32.gmra.mrb[0].mxu0 %v414
        %v621 = vpop.f32.mrb[0].mxu0
        %v622 = vadd.f32 %v341, %v621
        %v623 = vpop.f32.mrb[0].mxu0
        %624 = vmatprep.mubr.f32.mxu0 0.0
        %625 = vmatmul.mubr.f32.gmra.mrb[0].mxu0 %v417
        %v626 = vpop.f32.mrb[0].mxu0
        %v627 = vadd.f32 %v341, %v626
        %v628 = vpop.f32.mrb[0].mxu0
        %629 = vmatprep.mubr.f32.mxu0 0.0
        %630 = vmatmul.mubr.f32.gmra.mrb[0].mxu0 %v420
        %v631 = vpop.f32.mrb[0].mxu0
        %v632 = vadd.f32 %v341, %v631
        %v633 = vpop.f32.mrb[0].mxu0
        %634 = vmatprep.mubr.f32.mxu0 0.0
        %635 = vmatmul.mubr.f32.gmra.mrb[0].mxu0 %v423
        %v636 = vpop.f32.mrb[0].mxu0
        %v637 = vadd.f32 %v341, %v636
        %v638 = vpop.f32.mrb[0].mxu0
        %639 = vmatprep.mubr.f32.mxu0 0.0
        %640 = vmatmul.mubr.f32.gmra.mrb[0].mxu0 %v426
        %v641 = vpop.f32.mrb[0].mxu0
        %v642 = vadd.f32 %v341, %v641
        %v643 = vpop.f32.mrb[0].mxu0
        %644 = vmatprep.mubr.f32.mxu0 0.0
        %645 = vmatmul.mubr.f32.gmra.mrb[0].mxu0 %v429
        %v646 = vpop.f32.mrb[0].mxu0
        %v647 = vadd.f32 %v341, %v646
        %v648 = vpop.f32.mrb[0].mxu0
        %649 = vmatprep.mubr.f32.mxu0 0.0
        %650 = vmatmul.mubr.f32.gmra.mrb[0].mxu0 %v432
        %v651 = vpop.f32.mrb[0].mxu0
        %v652 = vadd.f32 %v341, %v651
        %v653 = vpop.f32.mrb[0].mxu0
        %654 = vmatprep.mubr.f32.mxu0 0.0
        %655 = vmatmul.mubr.f32.gmra.mrb[0].mxu0 %v435
        %v656 = vpop.f32.mrb[0].mxu0
        %v657 = vadd.f32 %v341, %v656
        %v658 = vpop.f32.mrb[0].mxu0
        %659 = vmatprep.mubr.f32.mxu0 0.0
        %660 = vmatmul.mubr.f32.gmra.mrb[0].mxu0 %v438
        %v661 = vpop.f32.mrb[0].mxu0
        %v662 = vadd.f32 %v341, %v661
        %v663 = vpop.f32.mrb[0].mxu0
        %664 = vdwg.mxu0
        %v665 = vmax.f32 %v507, 0.0
        %v666 = vmax.f32 %v512, 0.0
        %v667 = vmax.f32 %v517, 0.0
        %v668 = vmax.f32 %v522, 0.0
        %v669 = vmax.f32 %v527, 0.0
        %v670 = vmax.f32 %v532, 0.0
        %v671 = vmax.f32 %v537, 0.0
        %v672 = vmax.f32 %v542, 0.0
        %v673 = vmax.f32 %v547, 0.0
        %v674 = vmax.f32 %v552, 0.0
        %v675 = vmax.f32 %v557, 0.0
        %v676 = vmax.f32 %v562, 0.0
        %v677 = vmax.f32 %v567, 0.0
        %v678 = vmax.f32 %v572, 0.0
        %v679 = vmax.f32 %v577, 0.0
        %v680 = vmax.f32 %v582, 0.0
        %v681 = vmax.f32 %v587, 0.0
        %v682 = vmax.f32 %v592, 0.0
        %v683 = vmax.f32 %v597, 0.0
        %v684 = vmax.f32 %v602, 0.0
        %v685 = vmax.f32 %v607, 0.0
        %v686 = vmax.f32 %v612, 0.0
        %v687 = vmax.f32 %v617, 0.0
        %v688 = vmax.f32 %v622, 0.0
        %v689 = vmax.f32 %v627, 0.0
        %v690 = vmax.f32 %v632, 0.0
        %v691 = vmax.f32 %v637, 0.0
        %v692 = vmax.f32 %v642, 0.0
        %v693 = vmax.f32 %v647, 0.0
        %v694 = vmax.f32 %v652, 0.0
        %v695 = vmax.f32 %v657, 0.0
        %v696 = vmax.f32 %v662, 0.0
        %v697 = vld [vmem:[%s3] sm:$0xff]
        %v698 = vld [vmem:[%s3 + $0x8] sm:$0xff]
        %v699 = vld [vmem:[%s3 + $0x10] sm:$0xff]
        %v700 = vld [vmem:[%s3 + $0x18] sm:$0xff]
        %v701 = vld [vmem:[%s4] sm:$0x1]
        %v703 = vlaneseq
        %v704 = vshrl.u32 %v703, 7
        %v705 = vsub.s32 0, %v704
        %v706 = vrot.slane %v701, %v705
        %vm708 = vcmask 261120
        %v710 = vsel %vm708, %v665, 0
        %v713 = vsel %vm708, %v666, 0
        %v716 = vsel %vm708, %v667, 0
        %v719 = vsel %vm708, %v668, 0
        %v722 = vsel %vm708, %v669, 0
        %v725 = vsel %vm708, %v670, 0
        %v728 = vsel %vm708, %v671, 0
        %v731 = vsel %vm708, %v672, 0
        %v734 = vsel %vm708, %v673, 0
        %v737 = vsel %vm708, %v674, 0
        %v740 = vsel %vm708, %v675, 0
        %v743 = vsel %vm708, %v676, 0
        %v746 = vsel %vm708, %v677, 0
        %v749 = vsel %vm708, %v678, 0
        %v752 = vsel %vm708, %v679, 0
        %v755 = vsel %vm708, %v680, 0
        %v758 = vsel %vm708, %v681, 0
        %v761 = vsel %vm708, %v682, 0
        %v764 = vsel %vm708, %v683, 0
        %v767 = vsel %vm708, %v684, 0
        %v770 = vsel %vm708, %v685, 0
        %v773 = vsel %vm708, %v686, 0
        %v776 = vsel %vm708, %v687, 0
        %v779 = vsel %vm708, %v688, 0
        %v782 = vsel %vm708, %v689, 0
        %v785 = vsel %vm708, %v690, 0
        %v788 = vsel %vm708, %v691, 0
        %v791 = vsel %vm708, %v692, 0
        %v794 = vsel %vm708, %v693, 0
        %v797 = vsel %vm708, %v694, 0
        %v800 = vsel %vm708, %v695, 0
        %v803 = vsel %vm708, %v696, 0
        %805 = vmatprep.subr.mxu0 0.0
        %806 = vmatpush1.msra.mxu0 %v697
        %807 = vmatprep.subr.mxu0 0.0
        %808 = vmatpush1.msra.mxu0 %v698
        %809 = vmatprep.subr.mxu0 0.0
        %810 = vmatpush1.msra.mxu0 %v699
        %811 = vmatprep.subr.mxu0 0.0
        %812 = vmatpush1.msra.mxu0 %v700
        %813 = vmatprep.subr.mxu0 0.0
        %814 = vmatpush1.msra.mxu0 0.0
        %815 = vmatprep.subr.mxu0 0.0
        %816 = vmatpush1.msra.mxu0 0.0
        %817 = vmatprep.subr.mxu0 0.0
        %818 = vmatpush1.msra.mxu0 0.0
        %819 = vmatprep.subr.mxu0 0.0
        %820 = vmatpush1.msra.mxu0 0.0
        %821 = vmatprep.subr.mxu0 0.0
        %822 = vmatpush1.msra.mxu0 0.0
        %823 = vmatprep.subr.mxu0 0.0
        %824 = vmatpush1.msra.mxu0 0.0
        %825 = vmatprep.subr.mxu0 0.0
        %826 = vmatpush1.msra.mxu0 0.0
        %827 = vmatprep.subr.mxu0 0.0
        %828 = vmatpush1.msra.mxu0 0.0
        %829 = vmatprep.subr.mxu0 0.0
        %830 = vmatpush1.msra.mxu0 0.0
        %831 = vmatprep.subr.mxu0 0.0
        %832 = vmatpush1.msra.mxu0 0.0
        %833 = vmatprep.subr.mxu0 0.0
        %834 = vmatpush1.msra.mxu0 0.0
        %835 = vmatprep.subr.mxu0 0.0
        %836 = vmatpush1.msra.mxu0 0.0
        %837 = vmatprep.subr.mxu0 0.0
        %838 = vmatpush1.msra.mxu0 0.0
        %839 = vmatprep.subr.mxu0 0.0
        %840 = vmatpush1.msra.mxu0 0.0
        %841 = vmatprep.subr.mxu0 0.0
        %842 = vmatpush1.msra.mxu0 0.0
        %843 = vmatprep.subr.mxu0 0.0
        %844 = vmatpush1.msra.mxu0 0.0
        %845 = vmatprep.subr.mxu0 0.0
        %846 = vmatpush1.msra.mxu0 0.0
        %847 = vmatprep.subr.mxu0 0.0
        %848 = vmatpush1.msra.mxu0 0.0
        %849 = vmatprep.subr.mxu0 0.0
        %850 = vmatpush1.msra.mxu0 0.0
        %851 = vmatprep.subr.mxu0 0.0
        %852 = vmatpush1.msra.mxu0 0.0
        %853 = vmatprep.subr.mxu0 0.0
        %854 = vmatpush1.msra.mxu0 0.0
        %855 = vmatprep.subr.mxu0 0.0
        %856 = vmatpush1.msra.mxu0 0.0
        %857 = vmatprep.subr.mxu0 0.0
        %858 = vmatpush1.msra.mxu0 0.0
        %859 = vmatprep.subr.mxu0 0.0
        %860 = vmatpush1.msra.mxu0 0.0
        %861 = vmatprep.subr.mxu0 0.0
        %862 = vmatpush1.msra.mxu0 0.0
        %863 = vmatprep.subr.mxu0 0.0
        %864 = vmatpush1.msra.mxu0 0.0
        %865 = vmatprep.subr.mxu0 0.0
        %866 = vmatpush1.msra.mxu0 0.0
        %867 = vmatprep.subr.mxu0 0.0
        %868 = vmatpush1.msra.mxu0 0.0
        %869 = vmatprep.mubr.f32.mxu0 0.0
        %870 = vmatmul.mubr.f32.gmra.mrb[0].mxu0 %v710
        %v871 = vpop.f32.mrb[0].mxu0
        %v872 = vadd.f32 %v706, %v871
        %v873 = vpop.f32.mrb[0].mxu0
        %874 = vmatprep.mubr.f32.mxu0 0.0
        %875 = vmatmul.mubr.f32.gmra.mrb[0].mxu0 %v713
        %v876 = vpop.f32.mrb[0].mxu0
        %v877 = vadd.f32 %v706, %v876
        %v878 = vpop.f32.mrb[0].mxu0
        %879 = vmatprep.mubr.f32.mxu0 0.0
        %880 = vmatmul.mubr.f32.gmra.mrb[0].mxu0 %v716
        %v881 = vpop.f32.mrb[0].mxu0
        %v882 = vadd.f32 %v706, %v881
        %v883 = vpop.f32.mrb[0].mxu0
        %884 = vmatprep.mubr.f32.mxu0 0.0
        %885 = vmatmul.mubr.f32.gmra.mrb[0].mxu0 %v719
        %v886 = vpop.f32.mrb[0].mxu0
        %v887 = vadd.f32 %v706, %v886
        %v888 = vpop.f32.mrb[0].mxu0
        %889 = vmatprep.mubr.f32.mxu0 0.0
        %890 = vmatmul.mubr.f32.gmra.mrb[0].mxu0 %v722
        %v891 = vpop.f32.mrb[0].mxu0
        %v892 = vadd.f32 %v706, %v891
        %v893 = vpop.f32.mrb[0].mxu0
        %894 = vmatprep.mubr.f32.mxu0 0.0
        %895 = vmatmul.mubr.f32.gmra.mrb[0].mxu0 %v725
        %v896 = vpop.f32.mrb[0].mxu0
        %v897 = vadd.f32 %v706, %v896
        %v898 = vpop.f32.mrb[0].mxu0
        %899 = vmatprep.mubr.f32.mxu0 0.0
        %900 = vmatmul.mubr.f32.gmra.mrb[0].mxu0 %v728
        %v901 = vpop.f32.mrb[0].mxu0
        %v902 = vadd.f32 %v706, %v901
        %v903 = vpop.f32.mrb[0].mxu0
        %904 = vmatprep.mubr.f32.mxu0 0.0
        %905 = vmatmul.mubr.f32.gmra.mrb[0].mxu0 %v731
        %v906 = vpop.f32.mrb[0].mxu0
        %v907 = vadd.f32 %v706, %v906
        %v908 = vpop.f32.mrb[0].mxu0
        %909 = vmatprep.mubr.f32.mxu0 0.0
        %910 = vmatmul.mubr.f32.gmra.mrb[0].mxu0 %v734
        %v911 = vpop.f32.mrb[0].mxu0
        %v912 = vadd.f32 %v706, %v911
        %v913 = vpop.f32.mrb[0].mxu0
        %914 = vmatprep.mubr.f32.mxu0 0.0
        %915 = vmatmul.mubr.f32.gmra.mrb[0].mxu0 %v737
        %v916 = vpop.f32.mrb[0].mxu0
        %v917 = vadd.f32 %v706, %v916
        %v918 = vpop.f32.mrb[0].mxu0
        %919 = vmatprep.mubr.f32.mxu0 0.0
        %920 = vmatmul.mubr.f32.gmra.mrb[0].mxu0 %v740
        %v921 = vpop.f32.mrb[0].mxu0
        %v922 = vadd.f32 %v706, %v921
        %v923 = vpop.f32.mrb[0].mxu0
        %924 = vmatprep.mubr.f32.mxu0 0.0
        %925 = vmatmul.mubr.f32.gmra.mrb[0].mxu0 %v743
        %v926 = vpop.f32.mrb[0].mxu0
        %v927 = vadd.f32 %v706, %v926
        %v928 = vpop.f32.mrb[0].mxu0
        %929 = vmatprep.mubr.f32.mxu0 0.0
        %930 = vmatmul.mubr.f32.gmra.mrb[0].mxu0 %v746
        %v931 = vpop.f32.mrb[0].mxu0
        %v932 = vadd.f32 %v706, %v931
        %v933 = vpop.f32.mrb[0].mxu0
        %934 = vmatprep.mubr.f32.mxu0 0.0
        %935 = vmatmul.mubr.f32.gmra.mrb[0].mxu0 %v749
        %v936 = vpop.f32.mrb[0].mxu0
        %v937 = vadd.f32 %v706, %v936
        %v938 = vpop.f32.mrb[0].mxu0
        %939 = vmatprep.mubr.f32.mxu0 0.0
        %940 = vmatmul.mubr.f32.gmra.mrb[0].mxu0 %v752
        %v941 = vpop.f32.mrb[0].mxu0
        %v942 = vadd.f32 %v706, %v941
        %v943 = vpop.f32.mrb[0].mxu0
        %944 = vmatprep.mubr.f32.mxu0 0.0
        %945 = vmatmul.mubr.f32.gmra.mrb[0].mxu0 %v755
        %v946 = vpop.f32.mrb[0].mxu0
        %v947 = vadd.f32 %v706, %v946
        %v948 = vpop.f32.mrb[0].mxu0
        %949 = vmatprep.mubr.f32.mxu0 0.0
        %950 = vmatmul.mubr.f32.gmra.mrb[0].mxu0 %v758
        %v951 = vpop.f32.mrb[0].mxu0
        %v952 = vadd.f32 %v706, %v951
        %v953 = vpop.f32.mrb[0].mxu0
        %954 = vmatprep.mubr.f32.mxu0 0.0
        %955 = vmatmul.mubr.f32.gmra.mrb[0].mxu0 %v761
        %v956 = vpop.f32.mrb[0].mxu0
        %v957 = vadd.f32 %v706, %v956
        %v958 = vpop.f32.mrb[0].mxu0
        %959 = vmatprep.mubr.f32.mxu0 0.0
        %960 = vmatmul.mubr.f32.gmra.mrb[0].mxu0 %v764
        %v961 = vpop.f32.mrb[0].mxu0
        %v962 = vadd.f32 %v706, %v961
        %v963 = vpop.f32.mrb[0].mxu0
        %964 = vmatprep.mubr.f32.mxu0 0.0
        %965 = vmatmul.mubr.f32.gmra.mrb[0].mxu0 %v767
        %v966 = vpop.f32.mrb[0].mxu0
        %v967 = vadd.f32 %v706, %v966
        %v968 = vpop.f32.mrb[0].mxu0
        %969 = vmatprep.mubr.f32.mxu0 0.0
        %970 = vmatmul.mubr.f32.gmra.mrb[0].mxu0 %v770
        %v971 = vpop.f32.mrb[0].mxu0
        %v972 = vadd.f32 %v706, %v971
        %v973 = vpop.f32.mrb[0].mxu0
        %974 = vmatprep.mubr.f32.mxu0 0.0
        %975 = vmatmul.mubr.f32.gmra.mrb[0].mxu0 %v773
        %v976 = vpop.f32.mrb[0].mxu0
        %v977 = vadd.f32 %v706, %v976
        %v978 = vpop.f32.mrb[0].mxu0
        %979 = vmatprep.mubr.f32.mxu0 0.0
        %980 = vmatmul.mubr.f32.gmra.mrb[0].mxu0 %v776
        %v981 = vpop.f32.mrb[0].mxu0
        %v982 = vadd.f32 %v706, %v981
        %v983 = vpop.f32.mrb[0].mxu0
        %984 = vmatprep.mubr.f32.mxu0 0.0
        %985 = vmatmul.mubr.f32.gmra.mrb[0].mxu0 %v779
        %v986 = vpop.f32.mrb[0].mxu0
        %v987 = vadd.f32 %v706, %v986
        %v988 = vpop.f32.mrb[0].mxu0
        %989 = vmatprep.mubr.f32.mxu0 0.0
        %990 = vmatmul.mubr.f32.gmra.mrb[0].mxu0 %v782
        %v991 = vpop.f32.mrb[0].mxu0
        %v992 = vadd.f32 %v706, %v991
        %v993 = vpop.f32.mrb[0].mxu0
        %994 = vmatprep.mubr.f32.mxu0 0.0
        %995 = vmatmul.mubr.f32.gmra.mrb[0].mxu0 %v785
        %v996 = vpop.f32.mrb[0].mxu0
        %v997 = vadd.f32 %v706, %v996
        %v998 = vpop.f32.mrb[0].mxu0
        %999 = vmatprep.mubr.f32.mxu0 0.0
        %1000 = vmatmul.mubr.f32.gmra.mrb[0].mxu0 %v788
        %v1001 = vpop.f32.mrb[0].mxu0
        %v1002 = vadd.f32 %v706, %v1001
        %v1003 = vpop.f32.mrb[0].mxu0
        %1004 = vmatprep.mubr.f32.mxu0 0.0
        %1005 = vmatmul.mubr.f32.gmra.mrb[0].mxu0 %v791
        %v1006 = vpop.f32.mrb[0].mxu0
        %v1007 = vadd.f32 %v706, %v1006
        %v1008 = vpop.f32.mrb[0].mxu0
        %1009 = vmatprep.mubr.f32.mxu0 0.0
        %1010 = vmatmul.mubr.f32.gmra.mrb[0].mxu0 %v794
        %v1011 = vpop.f32.mrb[0].mxu0
        %v1012 = vadd.f32 %v706, %v1011
        %v1013 = vpop.f32.mrb[0].mxu0
        %1014 = vmatprep.mubr.f32.mxu0 0.0
        %1015 = vmatmul.mubr.f32.gmra.mrb[0].mxu0 %v797
        %v1016 = vpop.f32.mrb[0].mxu0
        %v1017 = vadd.f32 %v706, %v1016
        %v1018 = vpop.f32.mrb[0].mxu0
        %1019 = vmatprep.mubr.f32.mxu0 0.0
        %1020 = vmatmul.mubr.f32.gmra.mrb[0].mxu0 %v800
        %v1021 = vpop.f32.mrb[0].mxu0
        %v1022 = vadd.f32 %v706, %v1021
        %v1023 = vpop.f32.mrb[0].mxu0
        %1024 = vmatprep.mubr.f32.mxu0 0.0
        %1025 = vmatmul.mubr.f32.gmra.mrb[0].mxu0 %v803
        %v1026 = vpop.f32.mrb[0].mxu0
        %v1027 = vadd.f32 %v706, %v1026
        %v1028 = vpop.f32.mrb[0].mxu0
        %1029 = vdwg.mxu0
        %v1030 = vmax.f32 %v872, 0.0
        %v1031 = vmax.f32 %v877, 0.0
        %v1032 = vmax.f32 %v882, 0.0
        %v1033 = vmax.f32 %v887, 0.0
        %v1034 = vmax.f32 %v892, 0.0
        %v1035 = vmax.f32 %v897, 0.0
        %v1036 = vmax.f32 %v902, 0.0
        %v1037 = vmax.f32 %v907, 0.0
        %v1038 = vmax.f32 %v912, 0.0
        %v1039 = vmax.f32 %v917, 0.0
        %v1040 = vmax.f32 %v922, 0.0
        %v1041 = vmax.f32 %v927, 0.0
        %v1042 = vmax.f32 %v932, 0.0
        %v1043 = vmax.f32 %v937, 0.0
        %v1044 = vmax.f32 %v942, 0.0
        %v1045 = vmax.f32 %v947, 0.0
        %v1046 = vmax.f32 %v952, 0.0
        %v1047 = vmax.f32 %v957, 0.0
        %v1048 = vmax.f32 %v962, 0.0
        %v1049 = vmax.f32 %v967, 0.0
        %v1050 = vmax.f32 %v972, 0.0
        %v1051 = vmax.f32 %v977, 0.0
        %v1052 = vmax.f32 %v982, 0.0
        %v1053 = vmax.f32 %v987, 0.0
        %v1054 = vmax.f32 %v992, 0.0
        %v1055 = vmax.f32 %v997, 0.0
        %v1056 = vmax.f32 %v1002, 0.0
        %v1057 = vmax.f32 %v1007, 0.0
        %v1058 = vmax.f32 %v1012, 0.0
        %v1059 = vmax.f32 %v1017, 0.0
        %v1060 = vmax.f32 %v1022, 0.0
        %v1061 = vmax.f32 %v1027, 0.0
        %v1062 = vld [vmem:[%s5] sm:$0x1]
        %v1064 = vlaneseq
        %v1065 = vshrl.u32 %v1064, 7
        %v1066 = vsub.s32 0, %v1065
        %v1067 = vrot.slane %v1062, %v1066
        %v1069 = vmul.f32 %v1030, %v1067
        %v1070 = vmul.f32 %v1031, %v1067
        %v1071 = vmul.f32 %v1032, %v1067
        %v1072 = vmul.f32 %v1033, %v1067
        %v1073 = vmul.f32 %v1034, %v1067
        %v1074 = vmul.f32 %v1035, %v1067
        %v1075 = vmul.f32 %v1036, %v1067
        %v1076 = vmul.f32 %v1037, %v1067
        %v1077 = vmul.f32 %v1038, %v1067
        %v1078 = vmul.f32 %v1039, %v1067
        %v1079 = vmul.f32 %v1040, %v1067
        %v1080 = vmul.f32 %v1041, %v1067
        %v1081 = vmul.f32 %v1042, %v1067
        %v1082 = vmul.f32 %v1043, %v1067
        %v1083 = vmul.f32 %v1044, %v1067
        %v1084 = vmul.f32 %v1045, %v1067
        %v1085 = vmul.f32 %v1046, %v1067
        %v1086 = vmul.f32 %v1047, %v1067
        %v1087 = vmul.f32 %v1048, %v1067
        %v1088 = vmul.f32 %v1049, %v1067
        %v1089 = vmul.f32 %v1050, %v1067
        %v1090 = vmul.f32 %v1051, %v1067
        %v1091 = vmul.f32 %v1052, %v1067
        %v1092 = vmul.f32 %v1053, %v1067
        %v1093 = vmul.f32 %v1054, %v1067
        %v1094 = vmul.f32 %v1055, %v1067
        %v1095 = vmul.f32 %v1056, %v1067
        %v1096 = vmul.f32 %v1057, %v1067
        %v1097 = vmul.f32 %v1058, %v1067
        %v1098 = vmul.f32 %v1059, %v1067
        %v1099 = vmul.f32 %v1060, %v1067
        %v1100 = vmul.f32 %v1061, %v1067
        %v1101 = vsel %vm708, %v1069, 0.0
        %1102 = vadd.xlane.f32.xlu0 %v1101
        %v1103 = vpop.xlane.xlu0 %1102
        %v1104 = vsel %vm708, %v1070, 0.0
        %1105 = vadd.xlane.f32.xlu0 %v1104
        %v1106 = vpop.xlane.xlu0 %1105
        %v1107 = vsel %vm708, %v1071, 0.0
        %1108 = vadd.xlane.f32.xlu0 %v1107
        %v1109 = vpop.xlane.xlu0 %1108
        %v1110 = vsel %vm708, %v1072, 0.0
        %1111 = vadd.xlane.f32.xlu0 %v1110
        %v1112 = vpop.xlane.xlu0 %1111
        %v1113 = vsel %vm708, %v1073, 0.0
        %1114 = vadd.xlane.f32.xlu0 %v1113
        %v1115 = vpop.xlane.xlu0 %1114
        %v1116 = vsel %vm708, %v1074, 0.0
        %1117 = vadd.xlane.f32.xlu0 %v1116
        %v1118 = vpop.xlane.xlu0 %1117
        %v1119 = vsel %vm708, %v1075, 0.0
        %1120 = vadd.xlane.f32.xlu0 %v1119
        %v1121 = vpop.xlane.xlu0 %1120
        %v1122 = vsel %vm708, %v1076, 0.0
        %1123 = vadd.xlane.f32.xlu0 %v1122
        %v1124 = vpop.xlane.xlu0 %1123
        %v1125 = vsel %vm708, %v1077, 0.0
        %1126 = vadd.xlane.f32.xlu0 %v1125
        %v1127 = vpop.xlane.xlu0 %1126
        %v1128 = vsel %vm708, %v1078, 0.0
        %1129 = vadd.xlane.f32.xlu0 %v1128
        %v1130 = vpop.xlane.xlu0 %1129
        %v1131 = vsel %vm708, %v1079, 0.0
        %1132 = vadd.xlane.f32.xlu0 %v1131
        %v1133 = vpop.xlane.xlu0 %1132
        %v1134 = vsel %vm708, %v1080, 0.0
        %1135 = vadd.xlane.f32.xlu0 %v1134
        %v1136 = vpop.xlane.xlu0 %1135
        %v1137 = vsel %vm708, %v1081, 0.0
        %1138 = vadd.xlane.f32.xlu0 %v1137
        %v1139 = vpop.xlane.xlu0 %1138
        %v1140 = vsel %vm708, %v1082, 0.0
        %1141 = vadd.xlane.f32.xlu0 %v1140
        %v1142 = vpop.xlane.xlu0 %1141
        %v1143 = vsel %vm708, %v1083, 0.0
        %1144 = vadd.xlane.f32.xlu0 %v1143
        %v1145 = vpop.xlane.xlu0 %1144
        %v1146 = vsel %vm708, %v1084, 0.0
        %1147 = vadd.xlane.f32.xlu0 %v1146
        %v1148 = vpop.xlane.xlu0 %1147
        %v1149 = vsel %vm708, %v1085, 0.0
        %1150 = vadd.xlane.f32.xlu0 %v1149
        %v1151 = vpop.xlane.xlu0 %1150
        %v1152 = vsel %vm708, %v1086, 0.0
        %1153 = vadd.xlane.f32.xlu0 %v1152
        %v1154 = vpop.xlane.xlu0 %1153
        %v1155 = vsel %vm708, %v1087, 0.0
        %1156 = vadd.xlane.f32.xlu0 %v1155
        %v1157 = vpop.xlane.xlu0 %1156
        %v1158 = vsel %vm708, %v1088, 0.0
        %1159 = vadd.xlane.f32.xlu0 %v1158
        %v1160 = vpop.xlane.xlu0 %1159
        %v1161 = vsel %vm708, %v1089, 0.0
        %1162 = vadd.xlane.f32.xlu0 %v1161
        %v1163 = vpop.xlane.xlu0 %1162
        %v1164 = vsel %vm708, %v1090, 0.0
        %1165 = vadd.xlane.f32.xlu0 %v1164
        %v1166 = vpop.xlane.xlu0 %1165
        %v1167 = vsel %vm708, %v1091, 0.0
        %1168 = vadd.xlane.f32.xlu0 %v1167
        %v1169 = vpop.xlane.xlu0 %1168
        %v1170 = vsel %vm708, %v1092, 0.0
        %1171 = vadd.xlane.f32.xlu0 %v1170
        %v1172 = vpop.xlane.xlu0 %1171
        %v1173 = vsel %vm708, %v1093, 0.0
        %1174 = vadd.xlane.f32.xlu0 %v1173
        %v1175 = vpop.xlane.xlu0 %1174
        %v1176 = vsel %vm708, %v1094, 0.0
        %1177 = vadd.xlane.f32.xlu0 %v1176
        %v1178 = vpop.xlane.xlu0 %1177
        %v1179 = vsel %vm708, %v1095, 0.0
        %1180 = vadd.xlane.f32.xlu0 %v1179
        %v1181 = vpop.xlane.xlu0 %1180
        %v1182 = vsel %vm708, %v1096, 0.0
        %1183 = vadd.xlane.f32.xlu0 %v1182
        %v1184 = vpop.xlane.xlu0 %1183
        %v1185 = vsel %vm708, %v1097, 0.0
        %1186 = vadd.xlane.f32.xlu0 %v1185
        %v1187 = vpop.xlane.xlu0 %1186
        %v1188 = vsel %vm708, %v1098, 0.0
        %1189 = vadd.xlane.f32.xlu0 %v1188
        %v1190 = vpop.xlane.xlu0 %1189
        %v1191 = vsel %vm708, %v1099, 0.0
        %1192 = vadd.xlane.f32.xlu0 %v1191
        %v1193 = vpop.xlane.xlu0 %1192
        %v1194 = vsel %vm708, %v1100, 0.0
        %1195 = vadd.xlane.f32.xlu0 %v1194
        %v1196 = vpop.xlane.xlu0 %1195
        %v1197 = vld [vmem:[#allocation2] sm:$0x1]
        %v1199 = vlaneseq
        %v1200 = vshrl.u32 %v1199, 7
        %v1201 = vsub.s32 0, %v1200
        %v1202 = vrot.slane %v1197, %v1201
        %v1204 = vadd.f32 %v1103, %v1202
        %v1205 = vadd.f32 %v1106, %v1202
        %v1206 = vadd.f32 %v1109, %v1202
        %v1207 = vadd.f32 %v1112, %v1202
        %v1208 = vadd.f32 %v1115, %v1202
        %v1209 = vadd.f32 %v1118, %v1202
        %v1210 = vadd.f32 %v1121, %v1202
        %v1211 = vadd.f32 %v1124, %v1202
        %v1212 = vadd.f32 %v1127, %v1202
        %v1213 = vadd.f32 %v1130, %v1202
        %v1214 = vadd.f32 %v1133, %v1202
        %v1215 = vadd.f32 %v1136, %v1202
        %v1216 = vadd.f32 %v1139, %v1202
        %v1217 = vadd.f32 %v1142, %v1202
        %v1218 = vadd.f32 %v1145, %v1202
        %v1219 = vadd.f32 %v1148, %v1202
        %v1220 = vadd.f32 %v1151, %v1202
        %v1221 = vadd.f32 %v1154, %v1202
        %v1222 = vadd.f32 %v1157, %v1202
        %v1223 = vadd.f32 %v1160, %v1202
        %v1224 = vadd.f32 %v1163, %v1202
        %v1225 = vadd.f32 %v1166, %v1202
        %v1226 = vadd.f32 %v1169, %v1202
        %v1227 = vadd.f32 %v1172, %v1202
        %v1228 = vadd.f32 %v1175, %v1202
        %v1229 = vadd.f32 %v1178, %v1202
        %v1230 = vadd.f32 %v1181, %v1202
        %v1231 = vadd.f32 %v1184, %v1202
        %v1232 = vadd.f32 %v1187, %v1202
        %v1233 = vadd.f32 %v1190, %v1202
        %v1234 = vadd.f32 %v1193, %v1202
        %v1235 = vadd.f32 %v1196, %v1202
        %vm1236 = vcmask 7168
        %1237 = vst.msk [vmem:[%s282] sm:$0xff] %vm1236, %v1204
        %1238 = vst.msk [vmem:[%s282 + $0x8] sm:$0xff] %vm1236, %v1205
        %1239 = vst.msk [vmem:[%s282 + $0x10] sm:$0xff] %vm1236, %v1206
        %1240 = vst.msk [vmem:[%s282 + $0x18] sm:$0xff] %vm1236, %v1207
        %1241 = vst.msk [vmem:[%s282 + $0x20] sm:$0xff] %vm1236, %v1208
        %1242 = vst.msk [vmem:[%s282 + $0x28] sm:$0xff] %vm1236, %v1209
        %1243 = vst.msk [vmem:[%s282 + $0x30] sm:$0xff] %vm1236, %v1210
        %1244 = vst.msk [vmem:[%s282 + $0x38] sm:$0xff] %vm1236, %v1211
        %1245 = vst.msk [vmem:[%s282 + $0x40] sm:$0xff] %vm1236, %v1212
        %1246 = vst.msk [vmem:[%s282 + $0x48] sm:$0xff] %vm1236, %v1213
        %1247 = vst.msk [vmem:[%s282 + $0x50] sm:$0xff] %vm1236, %v1214
        %1248 = vst.msk [vmem:[%s282 + $0x58] sm:$0xff] %vm1236, %v1215
        %1249 = vst.msk [vmem:[%s282 + $0x60] sm:$0xff] %vm1236, %v1216
        %1250 = vst.msk [vmem:[%s282 + $0x68] sm:$0xff] %vm1236, %v1217
        %1251 = vst.msk [vmem:[%s282 + $0x70] sm:$0xff] %vm1236, %v1218
        %1252 = vst.msk [vmem:[%s282 + $0x78] sm:$0xff] %vm1236, %v1219
        %1253 = vst.msk [vmem:[%s282 + $0x80] sm:$0xff] %vm1236, %v1220
        %1254 = vst.msk [vmem:[%s282 + $0x88] sm:$0xff] %vm1236, %v1221
        %1255 = vst.msk [vmem:[%s282 + $0x90] sm:$0xff] %vm1236, %v1222
        %1256 = vst.msk [vmem:[%s282 + $0x98] sm:$0xff] %vm1236, %v1223
        %1257 = vst.msk [vmem:[%s282 + $0xa0] sm:$0xff] %vm1236, %v1224
        %1258 = vst.msk [vmem:[%s282 + $0xa8] sm:$0xff] %vm1236, %v1225
        %1259 = vst.msk [vmem:[%s282 + $0xb0] sm:$0xff] %vm1236, %v1226
        %1260 = vst.msk [vmem:[%s282 + $0xb8] sm:$0xff] %vm1236, %v1227
        %1261 = vst.msk [vmem:[%s282 + $0xc0] sm:$0xff] %vm1236, %v1228
        %1262 = vst.msk [vmem:[%s282 + $0xc8] sm:$0xff] %vm1236, %v1229
        %1263 = vst.msk [vmem:[%s282 + $0xd0] sm:$0xff] %vm1236, %v1230
        %1264 = vst.msk [vmem:[%s282 + $0xd8] sm:$0xff] %vm1236, %v1231
        %1265 = vst.msk [vmem:[%s282 + $0xe0] sm:$0xff] %vm1236, %v1232
        %1266 = vst.msk [vmem:[%s282 + $0xe8] sm:$0xff] %vm1236, %v1233
        %1267 = vst.msk [vmem:[%s282 + $0xf0] sm:$0xff] %vm1236, %v1234
        %1268 = vst.msk [vmem:[%s282 + $0xf8] sm:$0xff] %vm1236, %v1235
        %s1269 = sand.u32 %s180, 1
        %s1270 = sand.u32 %s180, 1
        %s1271 = smul.addr %s1270, 256
        %s1272 = scalar_lea.vmem [#allocation3], %s1271
        // Predicated region
        $region49: #{tpu_custom_call.1} parent=47 // pred_check
          %p1273 = pneg %p190
        $region50: #{tpu_custom_call.1} parent=47 // pred_check_branch
          %1275 = sbr.rel (%p1273) target = $region52
        $region51: #{tpu_custom_call.1} parent=47 // pred_region
          %s1276 = smul.u32 32, %s20
          %s1277 = ssub.s32 38, %s1276
          %p1278 = scmp.lt.s32.totalorder %s1277, 32
          %s1279 = scalar_select %p1278, %s1277, 32
          %s1280 = smul.u32 128, %s1279
          %p1281 = scmp.ne.s32.totalorder 0, %s1280
          %s1282 = smul.addr %s1276, 8
          %s1283 = scalar_lea.vmem %s7, %s1282
          // Predicated region
          $region53: #{tpu_custom_call.1} parent=51 // pred_check
            %p1284 = pneg %p1281
          $region54: #{tpu_custom_call.1} parent=51 // pred_check_branch
            %1286 = sbr.rel (%p1284) target = $region56
          $region55: #{tpu_custom_call.1} parent=51 // pred_region
            // Predicated region
            $region57: #{tpu_custom_call.1} parent=55 // pred_check
              _
            $region58: #{tpu_custom_call.1} parent=55 // pred_check_branch
              %1288 = sbr.rel (0) target = $region60
            $region59: #{tpu_custom_call.1} parent=55 // pred_region
              // Predicated region
              $region79: #{tpu_custom_call.1} parent=59 // pred_check
                _
              $region80: #{tpu_custom_call.1} parent=59 // pred_check_branch
                %1399 = sbr.rel (0) target = $region82
              $region81: #{tpu_custom_call.1} parent=59 // pred_region
                %s1400 = sshrl.u32 %s1279, 5
                // While loop
                $region83: #{tpu_custom_call.1} parent=81 // loop_pre_header
                  _
                $region84: #{tpu_custom_call.1} parent=81 // loop_header
                  %s1402 = sphi 0, %s1404
                  %p1403 = scmp.ge.s32.totalorder %s1402, %s1400
                  %s1407 = sphi 0, %s1476
                  %s1408 = sphi %s1272, %s1479
                  %s1409 = sphi %s1283, %s1480
                $region85: #{tpu_custom_call.1} parent=81 // loop_header_branch
                  %1406 = sbr.rel (%p1403) target = $region89
                $region86: #{tpu_custom_call.1} parent=81 // loop_body
                  %v1410 = vld [vmem:[%s1408] sm:$0xff]
                  %1411 = vst [vmem:[%s1409] sm:$0xff] %v1410
                  %v1412 = vld [vmem:[%s1408 + $0x8] sm:$0xff]
                  %1413 = vst [vmem:[%s1409 + $0x8] sm:$0xff] %v1412
                  %v1414 = vld [vmem:[%s1408 + $0x10] sm:$0xff]
                  %1415 = vst [vmem:[%s1409 + $0x10] sm:$0xff] %v1414
                  %v1416 = vld [vmem:[%s1408 + $0x18] sm:$0xff]
                  %1417 = vst [vmem:[%s1409 + $0x18] sm:$0xff] %v1416
                  %v1418 = vld [vmem:[%s1408 + $0x20] sm:$0xff]
                  %1419 = vst [vmem:[%s1409 + $0x20] sm:$0xff] %v1418
                  %v1420 = vld [vmem:[%s1408 + $0x28] sm:$0xff]
                  %1421 = vst [vmem:[%s1409 + $0x28] sm:$0xff] %v1420
                  %v1422 = vld [vmem:[%s1408 + $0x30] sm:$0xff]
                  %1423 = vst [vmem:[%s1409 + $0x30] sm:$0xff] %v1422
                  %v1424 = vld [vmem:[%s1408 + $0x38] sm:$0xff]
                  %1425 = vst [vmem:[%s1409 + $0x38] sm:$0xff] %v1424
                  %v1426 = vld [vmem:[%s1408 + $0x40] sm:$0xff]
                  %1427 = vst [vmem:[%s1409 + $0x40] sm:$0xff] %v1426
                  %v1428 = vld [vmem:[%s1408 + $0x48] sm:$0xff]
                  %1429 = vst [vmem:[%s1409 + $0x48] sm:$0xff] %v1428
                  %v1430 = vld [vmem:[%s1408 + $0x50] sm:$0xff]
                  %1431 = vst [vmem:[%s1409 + $0x50] sm:$0xff] %v1430
                  %v1432 = vld [vmem:[%s1408 + $0x58] sm:$0xff]
                  %1433 = vst [vmem:[%s1409 + $0x58] sm:$0xff] %v1432
                  %v1434 = vld [vmem:[%s1408 + $0x60] sm:$0xff]
                  %1435 = vst [vmem:[%s1409 + $0x60] sm:$0xff] %v1434
                  %v1436 = vld [vmem:[%s1408 + $0x68] sm:$0xff]
                  %1437 = vst [vmem:[%s1409 + $0x68] sm:$0xff] %v1436
                  %v1438 = vld [vmem:[%s1408 + $0x70] sm:$0xff]
                  %1439 = vst [vmem:[%s1409 + $0x70] sm:$0xff] %v1438
                  %v1440 = vld [vmem:[%s1408 + $0x78] sm:$0xff]
                  %1441 = vst [vmem:[%s1409 + $0x78] sm:$0xff] %v1440
                  %v1442 = vld [vmem:[%s1408 + $0x80] sm:$0xff]
                  %1443 = vst [vmem:[%s1409 + $0x80] sm:$0xff] %v1442
                  %v1444 = vld [vmem:[%s1408 + $0x88] sm:$0xff]
                  %1445 = vst [vmem:[%s1409 + $0x88] sm:$0xff] %v1444
                  %v1446 = vld [vmem:[%s1408 + $0x90] sm:$0xff]
                  %1447 = vst [vmem:[%s1409 + $0x90] sm:$0xff] %v1446
                  %v1448 = vld [vmem:[%s1408 + $0x98] sm:$0xff]
                  %1449 = vst [vmem:[%s1409 + $0x98] sm:$0xff] %v1448
                  %v1450 = vld [vmem:[%s1408 + $0xa0] sm:$0xff]
                  %1451 = vst [vmem:[%s1409 + $0xa0] sm:$0xff] %v1450
                  %v1452 = vld [vmem:[%s1408 + $0xa8] sm:$0xff]
                  %1453 = vst [vmem:[%s1409 + $0xa8] sm:$0xff] %v1452
                  %v1454 = vld [vmem:[%s1408 + $0xb0] sm:$0xff]
                  %1455 = vst [vmem:[%s1409 + $0xb0] sm:$0xff] %v1454
                  %v1456 = vld [vmem:[%s1408 + $0xb8] sm:$0xff]
                  %1457 = vst [vmem:[%s1409 + $0xb8] sm:$0xff] %v1456
                  %v1458 = vld [vmem:[%s1408 + $0xc0] sm:$0xff]
                  %1459 = vst [vmem:[%s1409 + $0xc0] sm:$0xff] %v1458
                  %v1460 = vld [vmem:[%s1408 + $0xc8] sm:$0xff]
                  %1461 = vst [vmem:[%s1409 + $0xc8] sm:$0xff] %v1460
                  %v1462 = vld [vmem:[%s1408 + $0xd0] sm:$0xff]
                  %1463 = vst [vmem:[%s1409 + $0xd0] sm:$0xff] %v1462
                  %v1464 = vld [vmem:[%s1408 + $0xd8] sm:$0xff]
                  %1465 = vst [vmem:[%s1409 + $0xd8] sm:$0xff] %v1464
                  %v1466 = vld [vmem:[%s1408 + $0xe0] sm:$0xff]
                  %1467 = vst [vmem:[%s1409 + $0xe0] sm:$0xff] %v1466
                  %v1468 = vld [vmem:[%s1408 + $0xe8] sm:$0xff]
                  %1469 = vst [vmem:[%s1409 + $0xe8] sm:$0xff] %v1468
                  %v1470 = vld [vmem:[%s1408 + $0xf0] sm:$0xff]
                  %1471 = vst [vmem:[%s1409 + $0xf0] sm:$0xff] %v1470
                  %v1472 = vld [vmem:[%s1408 + $0xf8] sm:$0xff]
                  %1473 = vst [vmem:[%s1409 + $0xf8] sm:$0xff] %v1472
                  %s1474 = sadd.s32 1, %s1407
                  %p1475 = scmp.ge.s32.totalorder %s1474, %s1400
                  %s1476 = scalar_select %p1475, 0, %s1474
                  %s1477 = smul.u32 %s1476, 256
                  %s1478 = smul.u32 %s1476, 256
                  %s1479 = scalar_lea.vmem %s1272, %s1477 [#allocation3]
                  %s1480 = scalar_lea.vmem %s1283, %s1478
                $region87: #{tpu_custom_call.1} parent=81 // loop_footer
                  %s1404 = sadd.s32 %s1402, 1
                $region88: #{tpu_custom_call.1} parent=81 // loop_footer_branch
                  %1401 = sbr.rel target = $region84
                $region89: #{tpu_custom_call.1} parent=81 // loop_exit
                  _
                %s1481 = sshrl.u32 %s1279, 5
                %s1482 = sand.u32 %s1279, 31
                %s1483 = smul.u32 %s1481, 32
                %s1484 = smul.u32 8, %s1483
                %s1485 = scalar_lea.vmem %s1272, %s1484 [#allocation3]
                %s1486 = smul.u32 8, %s1483
                %s1487 = scalar_lea.vmem %s1283, %s1486
                // While loop
                $region90: #{tpu_custom_call.1} parent=81 // loop_pre_header
                  _
                $region91: #{tpu_custom_call.1} parent=81 // loop_header
                  %s1489 = sphi 0, %s1491
                  %p1490 = scmp.ge.s32.totalorder %s1489, %s1482
                  %s1494 = sphi 0, %s1501
                  %s1495 = sphi %s1485, %s1504
                  %s1496 = sphi %s1487, %s1505
                $region92: #{tpu_custom_call.1} parent=81 // loop_header_branch
                  %1493 = sbr.rel (%p1490) target = $region96
                $region93: #{tpu_custom_call.1} parent=81 // loop_body
                  %v1497 = vld [vmem:[%s1495] sm:$0xff]
                  %1498 = vst [vmem:[%s1496] sm:$0xff] %v1497
                  %s1499 = sadd.s32 1, %s1494
                  %p1500 = scmp.ge.s32.totalorder %s1499, %s1482
                  %s1501 = scalar_select %p1500, 0, %s1499
                  %s1502 = smul.u32 %s1501, 8
                  %s1503 = smul.u32 %s1501, 8
                  %s1504 = scalar_lea.vmem %s1485, %s1502 [#allocation3]
                  %s1505 = scalar_lea.vmem %s1487, %s1503
                $region94: #{tpu_custom_call.1} parent=81 // loop_footer
                  %s1491 = sadd.s32 %s1489, 1
                $region95: #{tpu_custom_call.1} parent=81 // loop_footer_branch
                  %1488 = sbr.rel target = $region91
                $region96: #{tpu_custom_call.1} parent=81 // loop_exit
                  _
              $region82: #{tpu_custom_call.1} parent=59 // pred_fallthru
                _
              // Predicated region
              $region97: #{tpu_custom_call.1} parent=59 // pred_check
                _
              $region98: #{tpu_custom_call.1} parent=59 // pred_check_branch
                %1507 = sbr.rel target = $region100
              $region99: #{tpu_custom_call.1} parent=59 // pred_region
                _
              $region100: #{tpu_custom_call.1} parent=59 // pred_fallthru
                _
            $region60: #{tpu_custom_call.1} parent=55 // pred_fallthru
              _
            // Predicated region
            $region61: #{tpu_custom_call.1} parent=55 // pred_check
              _
            $region62: #{tpu_custom_call.1} parent=55 // pred_check_branch
              %1290 = sbr.rel target = $region64
            $region63: #{tpu_custom_call.1} parent=55 // pred_region
              %s1292 = sshrl.u32 %s1279, 5
              // While loop
              $region65: #{tpu_custom_call.1} parent=63 // loop_pre_header
                _
              $region66: #{tpu_custom_call.1} parent=63 // loop_header
                %s1294 = sphi 0, %s1296
                %p1295 = scmp.ge.s32.totalorder %s1294, %s1292
                %s1299 = sphi 0, %s1368
                %s1300 = sphi %s1272, %s1371
                %s1301 = sphi %s1283, %s1372
              $region67: #{tpu_custom_call.1} parent=63 // loop_header_branch
                %1298 = sbr.rel (%p1295) target = $region71
              $region68: #{tpu_custom_call.1} parent=63 // loop_body
                %v1302 = vld [vmem:[%s1300] sm:$0xff]
                %1303 = vst [vmem:[%s1301] sm:$0xff] %v1302
                %v1304 = vld [vmem:[%s1300 + $0x8] sm:$0xff]
                %1305 = vst [vmem:[%s1301 + $0x8] sm:$0xff] %v1304
                %v1306 = vld [vmem:[%s1300 + $0x10] sm:$0xff]
                %1307 = vst [vmem:[%s1301 + $0x10] sm:$0xff] %v1306
                %v1308 = vld [vmem:[%s1300 + $0x18] sm:$0xff]
                %1309 = vst [vmem:[%s1301 + $0x18] sm:$0xff] %v1308
                %v1310 = vld [vmem:[%s1300 + $0x20] sm:$0xff]
                %1311 = vst [vmem:[%s1301 + $0x20] sm:$0xff] %v1310
                %v1312 = vld [vmem:[%s1300 + $0x28] sm:$0xff]
                %1313 = vst [vmem:[%s1301 + $0x28] sm:$0xff] %v1312
                %v1314 = vld [vmem:[%s1300 + $0x30] sm:$0xff]
                %1315 = vst [vmem:[%s1301 + $0x30] sm:$0xff] %v1314
                %v1316 = vld [vmem:[%s1300 + $0x38] sm:$0xff]
                %1317 = vst [vmem:[%s1301 + $0x38] sm:$0xff] %v1316
                %v1318 = vld [vmem:[%s1300 + $0x40] sm:$0xff]
                %1319 = vst [vmem:[%s1301 + $0x40] sm:$0xff] %v1318
                %v1320 = vld [vmem:[%s1300 + $0x48] sm:$0xff]
                %1321 = vst [vmem:[%s1301 + $0x48] sm:$0xff] %v1320
                %v1322 = vld [vmem:[%s1300 + $0x50] sm:$0xff]
                %1323 = vst [vmem:[%s1301 + $0x50] sm:$0xff] %v1322
                %v1324 = vld [vmem:[%s1300 + $0x58] sm:$0xff]
                %1325 = vst [vmem:[%s1301 + $0x58] sm:$0xff] %v1324
                %v1326 = vld [vmem:[%s1300 + $0x60] sm:$0xff]
                %1327 = vst [vmem:[%s1301 + $0x60] sm:$0xff] %v1326
                %v1328 = vld [vmem:[%s1300 + $0x68] sm:$0xff]
                %1329 = vst [vmem:[%s1301 + $0x68] sm:$0xff] %v1328
                %v1330 = vld [vmem:[%s1300 + $0x70] sm:$0xff]
                %1331 = vst [vmem:[%s1301 + $0x70] sm:$0xff] %v1330
                %v1332 = vld [vmem:[%s1300 + $0x78] sm:$0xff]
                %1333 = vst [vmem:[%s1301 + $0x78] sm:$0xff] %v1332
                %v1334 = vld [vmem:[%s1300 + $0x80] sm:$0xff]
                %1335 = vst [vmem:[%s1301 + $0x80] sm:$0xff] %v1334
                %v1336 = vld [vmem:[%s1300 + $0x88] sm:$0xff]
                %1337 = vst [vmem:[%s1301 + $0x88] sm:$0xff] %v1336
                %v1338 = vld [vmem:[%s1300 + $0x90] sm:$0xff]
                %1339 = vst [vmem:[%s1301 + $0x90] sm:$0xff] %v1338
                %v1340 = vld [vmem:[%s1300 + $0x98] sm:$0xff]
                %1341 = vst [vmem:[%s1301 + $0x98] sm:$0xff] %v1340
                %v1342 = vld [vmem:[%s1300 + $0xa0] sm:$0xff]
                %1343 = vst [vmem:[%s1301 + $0xa0] sm:$0xff] %v1342
                %v1344 = vld [vmem:[%s1300 + $0xa8] sm:$0xff]
                %1345 = vst [vmem:[%s1301 + $0xa8] sm:$0xff] %v1344
                %v1346 = vld [vmem:[%s1300 + $0xb0] sm:$0xff]
                %1347 = vst [vmem:[%s1301 + $0xb0] sm:$0xff] %v1346
                %v1348 = vld [vmem:[%s1300 + $0xb8] sm:$0xff]
                %1349 = vst [vmem:[%s1301 + $0xb8] sm:$0xff] %v1348
                %v1350 = vld [vmem:[%s1300 + $0xc0] sm:$0xff]
                %1351 = vst [vmem:[%s1301 + $0xc0] sm:$0xff] %v1350
                %v1352 = vld [vmem:[%s1300 + $0xc8] sm:$0xff]
                %1353 = vst [vmem:[%s1301 + $0xc8] sm:$0xff] %v1352
                %v1354 = vld [vmem:[%s1300 + $0xd0] sm:$0xff]
                %1355 = vst [vmem:[%s1301 + $0xd0] sm:$0xff] %v1354
                %v1356 = vld [vmem:[%s1300 + $0xd8] sm:$0xff]
                %1357 = vst [vmem:[%s1301 + $0xd8] sm:$0xff] %v1356
                %v1358 = vld [vmem:[%s1300 + $0xe0] sm:$0xff]
                %1359 = vst [vmem:[%s1301 + $0xe0] sm:$0xff] %v1358
                %v1360 = vld [vmem:[%s1300 + $0xe8] sm:$0xff]
                %1361 = vst [vmem:[%s1301 + $0xe8] sm:$0xff] %v1360
                %v1362 = vld [vmem:[%s1300 + $0xf0] sm:$0xff]
                %1363 = vst [vmem:[%s1301 + $0xf0] sm:$0xff] %v1362
                %v1364 = vld [vmem:[%s1300 + $0xf8] sm:$0xff]
                %1365 = vst [vmem:[%s1301 + $0xf8] sm:$0xff] %v1364
                %s1366 = sadd.s32 1, %s1299
                %p1367 = scmp.ge.s32.totalorder %s1366, %s1292
                %s1368 = scalar_select %p1367, 0, %s1366
                %s1369 = smul.u32 %s1368, 256
                %s1370 = smul.u32 %s1368, 256
                %s1371 = scalar_lea.vmem %s1272, %s1369 [#allocation3]
                %s1372 = scalar_lea.vmem %s1283, %s1370
              $region69: #{tpu_custom_call.1} parent=63 // loop_footer
                %s1296 = sadd.s32 %s1294, 1
              $region70: #{tpu_custom_call.1} parent=63 // loop_footer_branch
                %1293 = sbr.rel target = $region66
              $region71: #{tpu_custom_call.1} parent=63 // loop_exit
                _
              %s1373 = sshrl.u32 %s1279, 5
              %s1374 = sand.u32 %s1279, 31
              %s1375 = smul.u32 %s1373, 32
              %s1376 = smul.u32 8, %s1375
              %s1377 = scalar_lea.vmem %s1272, %s1376 [#allocation3]
              %s1378 = smul.u32 8, %s1375
              %s1379 = scalar_lea.vmem %s1283, %s1378
              // While loop
              $region72: #{tpu_custom_call.1} parent=63 // loop_pre_header
                _
              $region73: #{tpu_custom_call.1} parent=63 // loop_header
                %s1381 = sphi 0, %s1383
                %p1382 = scmp.ge.s32.totalorder %s1381, %s1374
                %s1386 = sphi 0, %s1393
                %s1387 = sphi %s1377, %s1396
                %s1388 = sphi %s1379, %s1397
              $region74: #{tpu_custom_call.1} parent=63 // loop_header_branch
                %1385 = sbr.rel (%p1382) target = $region78
              $region75: #{tpu_custom_call.1} parent=63 // loop_body
                %v1389 = vld [vmem:[%s1387] sm:$0xff]
                %1390 = vst [vmem:[%s1388] sm:$0xff] %v1389
                %s1391 = sadd.s32 1, %s1386
                %p1392 = scmp.ge.s32.totalorder %s1391, %s1374
                %s1393 = scalar_select %p1392, 0, %s1391
                %s1394 = smul.u32 %s1393, 8
                %s1395 = smul.u32 %s1393, 8
                %s1396 = scalar_lea.vmem %s1377, %s1394 [#allocation3]
                %s1397 = scalar_lea.vmem %s1379, %s1395
              $region76: #{tpu_custom_call.1} parent=63 // loop_footer
                %s1383 = sadd.s32 %s1381, 1
              $region77: #{tpu_custom_call.1} parent=63 // loop_footer_branch
                %1380 = sbr.rel target = $region73
              $region78: #{tpu_custom_call.1} parent=63 // loop_exit
                _
            $region64: #{tpu_custom_call.1} parent=55 // pred_fallthru
              _
          $region56: #{tpu_custom_call.1} parent=51 // pred_fallthru
            _
          %1508 = vnop
        $region52: #{tpu_custom_call.1} parent=47 // pred_fallthru
          _
      $region48: #{tpu_custom_call.1} parent=5 // pred_fallthru
        _
      %p1509 = scmp.le.s32.totalorder 2, %s15
      // Predicated region
      $region101: #{tpu_custom_call.1} parent=5 // pred_check
        %p1510 = pneg %p1509
      $region102: #{tpu_custom_call.1} parent=5 // pred_check_branch
        %1512 = sbr.rel (%p1510) target = $region104
      $region103: #{tpu_custom_call.1} parent=5 // pred_region
        %s1513 = ssub.s32 %s15, 2
        // Predicated region
        $region105: #{tpu_custom_call.1} parent=103 // pred_check
          %p1514 = pneg %p196
        $region106: #{tpu_custom_call.1} parent=103 // pred_check_branch
          %1516 = sbr.rel (%p1514) target = $region108
        $region107: #{tpu_custom_call.1} parent=103 // pred_region
          %s1517 = sand.u32 %s181, 1
          %s1518 = sand.u32 %s181, 1
          %s1519 = smul.addr %s1518, 256
          %s1520 = scalar_lea.vmem [#allocation3], %s1519
        $region108: #{tpu_custom_call.1} parent=103 // pred_fallthru
          _
      $region104: #{tpu_custom_call.1} parent=5 // pred_fallthru
        _
    $region6: #{tpu_custom_call.1} parent=1 // loop_footer
      %s19 = sadd.s32 1, %s15
    $region7: #{tpu_custom_call.1} parent=1 // loop_footer_branch
      %14 = sbr.rel target = $region3
    $region8: #{tpu_custom_call.1} parent=1 // loop_exit
      _

// kernel: tpu_custom_call.1
$region0: #{tpu_custom_call.1}
  #allocation0 [shape = 'u32[]', space=smem, size = 0x4, offset = 0x4, fixed_abs, tag = 'smem constant byte address 0x4 - core index']
  #allocation1 [shape = 'u32[144,128]{1,0:T(1,128)}', space=vmem, size = 0x12000, scoped, tag = 'internal scratch']
  #allocation2 [shape = 'f32[1,1]{1,0:T(1,128)S(1)}', space=vmem, size = 0x200, scoped, tag = 'scoped memory for tpu_custom_call.1']
  %s0 = inlined_call_operand.vmem [shape: f32[300,16], index: 0, kind: input, shape index: {}]
  %s1 = inlined_call_operand.vmem [shape: f32[16,32], index: 1, kind: input, shape index: {}]
  %s2 = inlined_call_operand.vmem [shape: f32[1,32], index: 2, kind: input, shape index: {}]
  %s3 = inlined_call_operand.vmem [shape: f32[32,32], index: 3, kind: input, shape index: {}]
  %s4 = inlined_call_operand.vmem [shape: f32[1,32], index: 4, kind: input, shape index: {}]
  %s5 = inlined_call_operand.vmem [shape: f32[1,32], index: 5, kind: input, shape index: {}]
  %s6 = inlined_call_operand.<no memory space> [shape: f32[1,1], index: 6, kind: input, shape index: {}]
  %s7 = inlined_call_operand.vmem [shape: f32[300,1], index: 7, kind: output, shape index: {}]
  %s8 = sld [smem:[#allocation0]]
  $region109: #{tpu_custom_call.1} parent=0
    _
  %s10 = ssub.s32 1, %s8
  %s11 = scalar_select 0, %s10, %s8
  %v12 = vstv %s6
  %13 = vst [vmem:[#allocation2] sm:$0x1] %v12
  $region1: #{tpu_custom_call.1} parent=0
    #allocation3 [shape = 'u8[262144]{0}', space=vmem, size = 0x40000, scoped, tag = 'output window, operand 0']
    loop: start=0, step=1, limit=4
    $region2: #{tpu_custom_call.1} parent=1 // loop_pre_header
      _
    $region3: #{tpu_custom_call.1} parent=1 // loop_header
      %s15 = sphi 0, %s19
      %p16 = scmp.ge.s32.totalorder %s15, 4
      %s25 = sphi 0, %s27
      %s28 = sphi 0, %s25
      %s29 = sphi 0, %s28
      %s45 = sphi 0, %s29
      %s49 = sphi 0, %s49
      %s51 = sphi 0, %s49
      %s52 = sphi 0, %s51
      %s66 = sphi 0, %s52
      %s70 = sphi 0, %s70
      %s72 = sphi 0, %s70
      %s73 = sphi 0, %s72
      %s87 = sphi 0, %s73
      %s91 = sphi 0, %s91
      %s93 = sphi 0, %s91
      %s94 = sphi 0, %s93
      %s108 = sphi 0, %s94
      %s112 = sphi 0, %s112
      %s114 = sphi 0, %s112
      %s115 = sphi 0, %s114
      %s129 = sphi 0, %s115
      %s133 = sphi 0, %s133
      %s135 = sphi 0, %s133
      %s136 = sphi 0, %s135
      %s150 = sphi 0, %s136
      %s154 = sphi 0, %s154
      %s156 = sphi 0, %s154
      %s157 = sphi 0, %s156
      %s171 = sphi 0, %s157
      %s177 = sphi 0, %s179
      %s180 = sphi 0, %s177
      %s181 = sphi 0, %s180
      %s197 = sphi 0, %s181
    $region4: #{tpu_custom_call.1} parent=1 // loop_header_branch
      %18 = sbr.rel (%p16) target = $region8
    $region5: #{tpu_custom_call.1} parent=1 // loop_body
      %s20 = ssub.s32 %s15, 1
      %s21 = ssub.s32 %s15, 2
      %s22 = sadd.s32 %s15, 1
      %s23 = ssub.s32 %s15, %s22
      %p24 = scmp.eq.s32.totalorder %s23, 0
      %s26 = sadd.s32 %s25, 1
      %s27 = scalar_select %p24, %s25, %s26
      %p30 = pneg %p24
      %p31 = scmp.eq.s32.totalorder %s15, 1
      %p32 = por %p30, %p31
      %p33 = scmp.ne.s32.totalorder %s25, %s28
      %p34 = scmp.eq.s32.totalorder %s15, 0
      %p35 = por %p33, %p34
      %p36 = scmp.ne.s32.totalorder %s25, %s28
      %p37 = scmp.eq.s32.totalorder %s20, 1
      %p38 = por %p36, %p37
      %p39 = scmp.ne.s32.totalorder %s28, %s29
      %p40 = scmp.eq.s32.totalorder %s20, 0
      %p41 = por %p39, %p40
      %p42 = scmp.ne.s32.totalorder %s28, %s29
      %p43 = scmp.eq.s32.totalorder %s21, 1
      %p44 = por %p42, %p43
      %p46 = scmp.ne.s32.totalorder %s29, %s45
      %p47 = scmp.eq.s32.totalorder %s21, 0
      %p48 = por %p46, %p47
      %s50 = sadd.s32 %s49, 1
      %p53 = scmp.eq.s32.totalorder %s15, 1
      %p54 = scmp.ne.s32.totalorder %s49, %s51
      %p55 = scmp.eq.s32.totalorder %s15, 0
      %p56 = por %p54, %p55
      %p57 = scmp.ne.s32.totalorder %s49, %s51
      %p58 = scmp.eq.s32.totalorder %s20, 1
      %p59 = por %p57, %p58
      %p60 = scmp.ne.s32.totalorder %s51, %s52
      %p61 = scmp.eq.s32.totalorder %s20, 0
      %p62 = por %p60, %p61
      %p63 = scmp.ne.s32.totalorder %s51, %s52
      %p64 = scmp.eq.s32.totalorder %s21, 1
      %p65 = por %p63, %p64
      %p67 = scmp.ne.s32.totalorder %s52, %s66
      %p68 = scmp.eq.s32.totalorder %s21, 0
      %p69 = por %p67, %p68
      %s71 = sadd.s32 %s70, 1
      %p74 = scmp.eq.s32.totalorder %s15, 1
      %p75 = scmp.ne.s32.totalorder %s70, %s72
      %p76 = scmp.eq.s32.totalorder %s15, 0
      %p77 = por %p75, %p76
      %p78 = scmp.ne.s32.totalorder %s70, %s72
      %p79 = scmp.eq.s32.totalorder %s20, 1
      %p80 = por %p78, %p79
      %p81 = scmp.ne.s32.totalorder %s72, %s73
      %p82 = scmp.eq.s32.totalorder %s20, 0
      %p83 = por %p81, %p82
      %p84 = scmp.ne.s32.totalorder %s72, %s73
      %p85 = scmp.eq.s32.totalorder %s21, 1
      %p86 = por %p84, %p85
      %p88 = scmp.ne.s32.totalorder %s73, %s87
      %p89 = scmp.eq.s32.totalorder %s21, 0
      %p90 = por %p88, %p89
      %s92 = sadd.s32 %s91, 1
      %p95 = scmp.eq.s32.totalorder %s15, 1
      %p96 = scmp.ne.s32.totalorder %s91, %s93
      %p97 = scmp.eq.s32.totalorder %s15, 0
      %p98 = por %p96, %p97
      %p99 = scmp.ne.s32.totalorder %s91, %s93
      %p100 = scmp.eq.s32.totalorder %s20, 1
      %p101 = por %p99, %p100
      %p102 = scmp.ne.s32.totalorder %s93, %s94
      %p103 = scmp.eq.s32.totalorder %s20, 0
      %p104 = por %p102, %p103
      %p105 = scmp.ne.s32.totalorder %s93, %s94
      %p106 = scmp.eq.s32.totalorder %s21, 1
      %p107 = por %p105, %p106
      %p109 = scmp.ne.s32.totalorder %s94, %s108
      %p110 = scmp.eq.s32.totalorder %s21, 0
      %p111 = por %p109, %p110
      %s113 = sadd.s32 %s112, 1
      %p116 = scmp.eq.s32.totalorder %s15, 1
      %p117 = scmp.ne.s32.totalorder %s112, %s114
      %p118 = scmp.eq.s32.totalorder %s15, 0
      %p119 = por %p117, %p118
      %p120 = scmp.ne.s32.totalorder %s112, %s114
      %p121 = scmp.eq.s32.totalorder %s20, 1
      %p122 = por %p120, %p121
      %p123 = scmp.ne.s32.totalorder %s114, %s115
      %p124 = scmp.eq.s32.totalorder %s20, 0
      %p125 = por %p123, %p124
      %p126 = scmp.ne.s32.totalorder %s114, %s115
      %p127 = scmp.eq.s32.totalorder %s21, 1
      %p128 = por %p126, %p127
      %p130 = scmp.ne.s32.totalorder %s115, %s129
      %p131 = scmp.eq.s32.totalorder %s21, 0
      %p132 = por %p130, %p131
      %s134 = sadd.s32 %s133, 1
      %p137 = scmp.eq.s32.totalorder %s15, 1
      %p138 = scmp.ne.s32.totalorder %s133, %s135
      %p139 = scmp.eq.s32.totalorder %s15, 0
      %p140 = por %p138, %p139
      %p141 = scmp.ne.s32.totalorder %s133, %s135
      %p142 = scmp.eq.s32.totalorder %s20, 1
      %p143 = por %p141, %p142
      %p144 = scmp.ne.s32.totalorder %s135, %s136
      %p145 = scmp.eq.s32.totalorder %s20, 0
      %p146 = por %p144, %p145
      %p147 = scmp.ne.s32.totalorder %s135, %s136
      %p148 = scmp.eq.s32.totalorder %s21, 1
      %p149 = por %p147, %p148
      %p151 = scmp.ne.s32.totalorder %s136, %s150
      %p152 = scmp.eq.s32.totalorder %s21, 0
      %p153 = por %p151, %p152
      %s155 = sadd.s32 %s154, 1
      %p158 = scmp.eq.s32.totalorder %s15, 1
      %p159 = scmp.ne.s32.totalorder %s154, %s156
      %p160 = scmp.eq.s32.totalorder %s15, 0
      %p161 = por %p159, %p160
      %p162 = scmp.ne.s32.totalorder %s154, %s156
      %p163 = scmp.eq.s32.totalorder %s20, 1
      %p164 = por %p162, %p163
      %p165 = scmp.ne.s32.totalorder %s156, %s157
      %p166 = scmp.eq.s32.totalorder %s20, 0
      %p167 = por %p165, %p166
      %p168 = scmp.ne.s32.totalorder %s156, %s157
      %p169 = scmp.eq.s32.totalorder %s21, 1
      %p170 = por %p168, %p169
      %p172 = scmp.ne.s32.totalorder %s157, %s171
      %p173 = scmp.eq.s32.totalorder %s21, 0
      %p174 = por %p172, %p173
      %s175 = ssub.s32 %s15, %s22
      %p176 = scmp.eq.s32.totalorder %s175, 0
      %s178 = sadd.s32 %s177, 1
      %s179 = scalar_select %p176, %s177, %s178
      %p182 = pneg %p176
      %p183 = scmp.eq.s32.totalorder %s15, 1
      %p184 = por %p182, %p183
      %p185 = scmp.ne.s32.totalorder %s177, %s180
      %p186 = scmp.eq.s32.totalorder %s15, 0
      %p187 = por %p185, %p186
      %p188 = scmp.ne.s32.totalorder %s177, %s180
      %p189 = scmp.eq.s32.totalorder %s20, 1
      %p190 = por %p188, %p189
      %p191 = scmp.ne.s32.totalorder %s180, %s181
      %p192 = scmp.eq.s32.totalorder %s20, 0
      %p193 = por %p191, %p192
      %p194 = scmp.ne.s32.totalorder %s180, %s181
      %p195 = scmp.eq.s32.totalorder %s21, 1
      %p196 = por %p194, %p195
      %p198 = scmp.ne.s32.totalorder %s181, %s197
      %p199 = scmp.eq.s32.totalorder %s21, 0
      %p200 = por %p198, %p199
      %p201 = scmp.le.s32.totalorder 1, %s15
      %p202 = scmp.lt.s32.totalorder %s15, 3
      %p203 = pnand %p201, %p202
      %p204 = pneg %p203
      // Predicated region
      $region9: #{tpu_custom_call.1} parent=5 // pred_check
        _
      $region10: #{tpu_custom_call.1} parent=5 // pred_check_branch
        %206 = sbr.rel (%p203) target = $region12
      $region11: #{tpu_custom_call.1} parent=5 // pred_region
        %s207 = ssub.s32 %s15, 1
        // Predicated region
        $region13: #{tpu_custom_call.1} parent=11 // pred_check
          %p208 = pneg %p62
        $region14: #{tpu_custom_call.1} parent=11 // pred_check_branch
          %210 = sbr.rel (%p208) target = $region16
        $region15: #{tpu_custom_call.1} parent=11 // pred_region
          _
        $region16: #{tpu_custom_call.1} parent=11 // pred_fallthru
          _
        // Predicated region
        $region17: #{tpu_custom_call.1} parent=11 // pred_check
          %p211 = pneg %p83
        $region18: #{tpu_custom_call.1} parent=11 // pred_check_branch
          %213 = sbr.rel (%p211) target = $region20
        $region19: #{tpu_custom_call.1} parent=11 // pred_region
          _
        $region20: #{tpu_custom_call.1} parent=11 // pred_fallthru
          _
        // Predicated region
        $region21: #{tpu_custom_call.1} parent=11 // pred_check
          %p214 = pneg %p104
        $region22: #{tpu_custom_call.1} parent=11 // pred_check_branch
          %216 = sbr.rel (%p214) target = $region24
        $region23: #{tpu_custom_call.1} parent=11 // pred_region
          _
        $region24: #{tpu_custom_call.1} parent=11 // pred_fallthru
          _
        // Predicated region
        $region25: #{tpu_custom_call.1} parent=11 // pred_check
          %p217 = pneg %p125
        $region26: #{tpu_custom_call.1} parent=11 // pred_check_branch
          %219 = sbr.rel (%p217) target = $region28
        $region27: #{tpu_custom_call.1} parent=11 // pred_region
          _
        $region28: #{tpu_custom_call.1} parent=11 // pred_fallthru
          _
        // Predicated region
        $region29: #{tpu_custom_call.1} parent=11 // pred_check
          %p220 = pneg %p146
        $region30: #{tpu_custom_call.1} parent=11 // pred_check_branch
          %222 = sbr.rel (%p220) target = $region32
        $region31: #{tpu_custom_call.1} parent=11 // pred_region
          _
        $region32: #{tpu_custom_call.1} parent=11 // pred_fallthru
          _
        // Predicated region
        $region33: #{tpu_custom_call.1} parent=11 // pred_check
          %p223 = pneg %p167
        $region34: #{tpu_custom_call.1} parent=11 // pred_check_branch
          %225 = sbr.rel (%p223) target = $region36
        $region35: #{tpu_custom_call.1} parent=11 // pred_region
          _
        $region36: #{tpu_custom_call.1} parent=11 // pred_fallthru
          _
      $region12: #{tpu_custom_call.1} parent=5 // pred_fallthru
        _
      %p226 = scmp.lt.s32.totalorder %s15, 2
      // Predicated region
      $region37: #{tpu_custom_call.1} parent=5 // pred_check
        %p227 = pneg %p226
      $region38: #{tpu_custom_call.1} parent=5 // pred_check_branch
        %229 = sbr.rel (%p227) target = $region40
      $region39: #{tpu_custom_call.1} parent=5 // pred_region
        // Predicated region
        $region41: #{tpu_custom_call.1} parent=39 // pred_check
          %p230 = pneg %p35
        $region42: #{tpu_custom_call.1} parent=39 // pred_check_branch
          %232 = sbr.rel (%p230) target = $region44
        $region43: #{tpu_custom_call.1} parent=39 // pred_region
          %s233 = smul.u32 32, %s15
          %s234 = ssub.s32 38, %s233
          %p235 = scmp.lt.s32.totalorder %s234, 32
          %s236 = scalar_select %p235, %s234, 32
          %s237 = smul.u32 128, %s236
          %p238 = scmp.lt.s32.totalorder %s233, 37
          %s239 = scalar_select %p238, %s233, 37
          %s240 = smul.addr %s239, 8
          %s241 = scalar_lea.vmem %s0, %s240
          %s242 = smul.u32 32, %s15
          %s243 = ssub.s32 38, %s242
          %p244 = scmp.lt.s32.totalorder %s243, 32
          %s245 = scalar_select %p244, %s243, 32
          %s246 = smul.u32 128, %s245
        $region44: #{tpu_custom_call.1} parent=39 // pred_fallthru
          _
      $region40: #{tpu_custom_call.1} parent=5 // pred_fallthru
        _
      %p247 = scmp.le.s32.totalorder 1, %s15
      %p248 = scmp.lt.s32.totalorder %s15, 3
      %p249 = pnand %p247, %p248
      %p250 = pneg %p249
      // Predicated region
      $region45: #{tpu_custom_call.1} parent=5 // pred_check
        _
      $region46: #{tpu_custom_call.1} parent=5 // pred_check_branch
        %252 = sbr.rel (%p249) target = $region48
      $region47: #{tpu_custom_call.1} parent=5 // pred_region
        %s253 = ssub.s32 %s15, 1
        %s254 = smul.u32 32, %s20
        %s255 = ssub.s32 38, %s254
        %p256 = scmp.lt.s32.totalorder %s255, 32
        %s257 = scalar_select %p256, %s255, 32
        %s258 = smul.u32 128, %s257
        %p259 = scmp.lt.s32.totalorder %s254, 37
        %s260 = scalar_select %p259, %s254, 37
        %s261 = smul.addr %s260, 8
        %s262 = scalar_lea.vmem %s0, %s261
        %p263 = pneg %p41
        %p264 = pneg %p38
        %p265 = pneg %p62
        %p266 = pneg %p59
        %p267 = pneg %p83
        %p268 = pneg %p80
        %p269 = pneg %p104
        %p270 = pneg %p101
        %p271 = pneg %p125
        %p272 = pneg %p122
        %p273 = pneg %p146
        %p274 = pneg %p143
        %p275 = pneg %p167
        %p276 = pneg %p164
        %p277 = pneg %p193
        %p278 = pneg %p190
        %s279 = sand.u32 %s180, 1
        %s280 = sand.u32 %s180, 1
        %s281 = smul.addr %s280, 256
        %s282 = scalar_lea.vmem [#allocation3], %s281
        %s283 = smul.u32 32, %s20
        %s284 = ssub.s32 38, %s283
        %p285 = scmp.lt.s32.totalorder %s284, 32
        %s286 = scalar_select %p285, %s284, 32
        %s287 = smul.u32 128, %s286
        %p288 = scmp.lt.s32.totalorder %s283, 37
        %s289 = scalar_select %p288, %s283, 37
        %s290 = smul.addr %s289, 8
        %s291 = scalar_lea.vmem %s0, %s290
        %s292 = smul.u32 32, %s20
        %s293 = ssub.s32 38, %s292
        %p294 = scmp.lt.s32.totalorder %s293, 32
        %s295 = scalar_select %p294, %s293, 32
        %s296 = smul.u32 128, %s295
        %s297 = smul.u32 32, %s20
        %s298 = ssub.s32 38, %s297
        %p299 = scmp.lt.s32.totalorder %s298, 32
        %s300 = scalar_select %p299, %s298, 32
        %s301 = smul.u32 128, %s300
        %v302 = vld [vmem:[%s291] sm:$0xff]
        %v303 = vld [vmem:[%s291 + $0x8] sm:$0xff]
        %v304 = vld [vmem:[%s291 + $0x10] sm:$0xff]
        %v305 = vld [vmem:[%s291 + $0x18] sm:$0xff]
        %v306 = vld [vmem:[%s291 + $0x20] sm:$0xff]
        %v307 = vld [vmem:[%s291 + $0x28] sm:$0xff]
        %v308 = vld [vmem:[%s291 + $0x30] sm:$0xff]
        %v309 = vld [vmem:[%s291 + $0x38] sm:$0xff]
        %v310 = vld [vmem:[%s291 + $0x40] sm:$0xff]
        %v311 = vld [vmem:[%s291 + $0x48] sm:$0xff]
        %v312 = vld [vmem:[%s291 + $0x50] sm:$0xff]
        %v313 = vld [vmem:[%s291 + $0x58] sm:$0xff]
        %v314 = vld [vmem:[%s291 + $0x60] sm:$0xff]
        %v315 = vld [vmem:[%s291 + $0x68] sm:$0xff]
        %v316 = vld [vmem:[%s291 + $0x70] sm:$0xff]
        %v317 = vld [vmem:[%s291 + $0x78] sm:$0xff]
        %v318 = vld [vmem:[%s291 + $0x80] sm:$0xff]
        %v319 = vld [vmem:[%s291 + $0x88] sm:$0xff]
        %v320 = vld [vmem:[%s291 + $0x90] sm:$0xff]
        %v321 = vld [vmem:[%s291 + $0x98] sm:$0xff]
        %v322 = vld [vmem:[%s291 + $0xa0] sm:$0xff]
        %v323 = vld [vmem:[%s291 + $0xa8] sm:$0xff]
        %v324 = vld [vmem:[%s291 + $0xb0] sm:$0xff]
        %v325 = vld [vmem:[%s291 + $0xb8] sm:$0xff]
        %v326 = vld [vmem:[%s291 + $0xc0] sm:$0xff]
        %v327 = vld [vmem:[%s291 + $0xc8] sm:$0xff]
        %v328 = vld [vmem:[%s291 + $0xd0] sm:$0xff]
        %v329 = vld [vmem:[%s291 + $0xd8] sm:$0xff]
        %v330 = vld [vmem:[%s291 + $0xe0] sm:$0xff]
        %v331 = vld [vmem:[%s291 + $0xe8] sm:$0xff]
        %v332 = vld [vmem:[%s291 + $0xf0] sm:$0xff]
        %v333 = vld [vmem:[%s291 + $0xf8] sm:$0xff]
        %v334 = vld [vmem:[%s1] sm:$0xff]
        %v335 = vld [vmem:[%s1 + $0x8] sm:$0xff]
        %v336 = vld [vmem:[%s2] sm:$0x1]
        %v338 = vlaneseq
        %v339 = vshrl.u32 %v338, 7
        %v340 = vsub.s32 0, %v339
        %v341 = vrot.slane %v336, %v340
        %vm343 = vcmask 130048
        %v345 = vsel %vm343, %v302, 0
        %v348 = vsel %vm343, %v303, 0
        %v351 = vsel %vm343, %v304, 0
        %v354 = vsel %vm343, %v305, 0
        %v357 = vsel %vm343, %v306, 0
        %v360 = vsel %vm343, %v307, 0
        %v363 = vsel %vm343, %v308, 0
        %v366 = vsel %vm343, %v309, 0
        %v369 = vsel %vm343, %v310, 0
        %v372 = vsel %vm343, %v311, 0
        %v375 = vsel %vm343, %v312, 0
        %v378 = vsel %vm343, %v313, 0
        %v381 = vsel %vm343, %v314, 0
        %v384 = vsel %vm343, %v315, 0
        %v387 = vsel %vm343, %v316, 0
        %v390 = vsel %vm343, %v317, 0
        %v393 = vsel %vm343, %v318, 0
        %v396 = vsel %vm343, %v319, 0
        %v399 = vsel %vm343, %v320, 0
        %v402 = vsel %vm343, %v321, 0
        %v405 = vsel %vm343, %v322, 0
        %v408 = vsel %vm343, %v323, 0
        %v411 = vsel %vm343, %v324, 0
        %v414 = vsel %vm343, %v325, 0
        %v417 = vsel %vm343, %v326, 0
        %v420 = vsel %vm343, %v327, 0
        %v423 = vsel %vm343, %v328, 0
        %v426 = vsel %vm343, %v329, 0
        %v429 = vsel %vm343, %v330, 0
        %v432 = vsel %vm343, %v331, 0
        %v435 = vsel %vm343, %v332, 0
        %v438 = vsel %vm343, %v333, 0
        %440 = vmatprep.subr.mxu0 0.0
        %441 = vmatpush1.msra.mxu0 %v334
        %442 = vmatprep.subr.mxu0 0.0
        %443 = vmatpush1.msra.mxu0 %v335
        %444 = vmatprep.subr.mxu0 0.0
        %445 = vmatpush1.msra.mxu0 0.0
        %446 = vmatprep.subr.mxu0 0.0
        %447 = vmatpush1.msra.mxu0 0.0
        %448 = vmatprep.subr.mxu0 0.0
        %449 = vmatpush1.msra.mxu0 0.0
        %450 = vmatprep.subr.mxu0 0.0
        %451 = vmatpush1.msra.mxu0 0.0
        %452 = vmatprep.subr.mxu0 0.0
        %453 = vmatpush1.msra.mxu0 0.0
        %454 = vmatprep.subr.mxu0 0.0
        %455 = vmatpush1.msra.mxu0 0.0
        %456 = vmatprep.subr.mxu0 0.0
        %457 = vmatpush1.msra.mxu0 0.0
        %458 = vmatprep.subr.mxu0 0.0
        %459 = vmatpush1.msra.mxu0 0.0
        %460 = vmatprep.subr.mxu0 0.0
        %461 = vmatpush1.msra.mxu0 0.0
        %462 = vmatprep.subr.mxu0 0.0
        %463 = vmatpush1.msra.mxu0 0.0
        %464 = vmatprep.subr.mxu0 0.0
        %465 = vmatpush1.msra.mxu0 0.0
        %466 = vmatprep.subr.mxu0 0.0
        %467 = vmatpush1.msra.mxu0 0.0
        %468 = vmatprep.subr.mxu0 0.0
        %469 = vmatpush1.msra.mxu0 0.0
        %470 = vmatprep.subr.mxu0 0.0
        %471 = vmatpush1.msra.mxu0 0.0
        %472 = vmatprep.subr.mxu0 0.0
        %473 = vmatpush1.msra.mxu0 0.0
        %474 = vmatprep.subr.mxu0 0.0
        %475 = vmatpush1.msra.mxu0 0.0
        %476 = vmatprep.subr.mxu0 0.0
        %477 = vmatpush1.msra.mxu0 0.0
        %478 = vmatprep.subr.mxu0 0.0
        %479 = vmatpush1.msra.mxu0 0.0
        %480 = vmatprep.subr.mxu0 0.0
        %481 = vmatpush1.msra.mxu0 0.0
        %482 = vmatprep.subr.mxu0 0.0
        %483 = vmatpush1.msra.mxu0 0.0
        %484 = vmatprep.subr.mxu0 0.0
        %485 = vmatpush1.msra.mxu0 0.0
        %486 = vmatprep.subr.mxu0 0.0
        %487 = vmatpush1.msra.mxu0 0.0
        %488 = vmatprep.subr.mxu0 0.0
        %489 = vmatpush1.msra.mxu0 0.0
        %490 = vmatprep.subr.mxu0 0.0
        %491 = vmatpush1.msra.mxu0 0.0
        %492 = vmatprep.subr.mxu0 0.0
        %493 = vmatpush1.msra.mxu0 0.0
        %494 = vmatprep.subr.mxu0 0.0
        %495 = vmatpush1.msra.mxu0 0.0
        %496 = vmatprep.subr.mxu0 0.0
        %497 = vmatpush1.msra.mxu0 0.0
        %498 = vmatprep.subr.mxu0 0.0
        %499 = vmatpush1.msra.mxu0 0.0
        %500 = vmatprep.subr.mxu0 0.0
        %501 = vmatpush1.msra.mxu0 0.0
        %502 = vmatprep.subr.mxu0 0.0
        %503 = vmatpush1.msra.mxu0 0.0
        %504 = vmatprep.mubr.f32.mxu0 0.0
        %505 = vmatmul.mubr.f32.gmra.mrb[0].mxu0 %v345
        %v506 = vpop.f32.mrb[0].mxu0
        %v507 = vadd.f32 %v341, %v506
        %v508 = vpop.f32.mrb[0].mxu0
        %509 = vmatprep.mubr.f32.mxu0 0.0
        %510 = vmatmul.mubr.f32.gmra.mrb[0].mxu0 %v348
        %v511 = vpop.f32.mrb[0].mxu0
        %v512 = vadd.f32 %v341, %v511
        %v513 = vpop.f32.mrb[0].mxu0
        %514 = vmatprep.mubr.f32.mxu0 0.0
        %515 = vmatmul.mubr.f32.gmra.mrb[0].mxu0 %v351
        %v516 = vpop.f32.mrb[0].mxu0
        %v517 = vadd.f32 %v341, %v516
        %v518 = vpop.f32.mrb[0].mxu0
        %519 = vmatprep.mubr.f32.mxu0 0.0
        %520 = vmatmul.mubr.f32.gmra.mrb[0].mxu0 %v354
        %v521 = vpop.f32.mrb[0].mxu0
        %v522 = vadd.f32 %v341, %v521
        %v523 = vpop.f32.mrb[0].mxu0
        %524 = vmatprep.mubr.f32.mxu0 0.0
        %525 = vmatmul.mubr.f32.gmra.mrb[0].mxu0 %v357
        %v526 = vpop.f32.mrb[0].mxu0
        %v527 = vadd.f32 %v341, %v526
        %v528 = vpop.f32.mrb[0].mxu0
        %529 = vmatprep.mubr.f32.mxu0 0.0
        %530 = vmatmul.mubr.f32.gmra.mrb[0].mxu0 %v360
        %v531 = vpop.f32.mrb[0].mxu0
        %v532 = vadd.f32 %v341, %v531
        %v533 = vpop.f32.mrb[0].mxu0
        %534 = vmatprep.mubr.f32.mxu0 0.0
        %535 = vmatmul.mubr.f32.gmra.mrb[0].mxu0 %v363
        %v536 = vpop.f32.mrb[0].mxu0
        %v537 = vadd.f32 %v341, %v536
        %v538 = vpop.f32.mrb[0].mxu0
        %539 = vmatprep.mubr.f32.mxu0 0.0
        %540 = vmatmul.mubr.f32.gmra.mrb[0].mxu0 %v366
        %v541 = vpop.f32.mrb[0].mxu0
        %v542 = vadd.f32 %v341, %v541
        %v543 = vpop.f32.mrb[0].mxu0
        %544 = vmatprep.mubr.f32.mxu0 0.0
        %545 = vmatmul.mubr.f32.gmra.mrb[0].mxu0 %v369
        %v546 = vpop.f32.mrb[0].mxu0
        %v547 = vadd.f32 %v341, %v546
        %v548 = vpop.f32.mrb[0].mxu0
        %549 = vmatprep.mubr.f32.mxu0 0.0
        %550 = vmatmul.mubr.f32.gmra.mrb[0].mxu0 %v372
        %v551 = vpop.f32.mrb[0].mxu0
        %v552 = vadd.f32 %v341, %v551
        %v553 = vpop.f32.mrb[0].mxu0
        %554 = vmatprep.mubr.f32.mxu0 0.0
        %555 = vmatmul.mubr.f32.gmra.mrb[0].mxu0 %v375
        %v556 = vpop.f32.mrb[0].mxu0
        %v557 = vadd.f32 %v341, %v556
        %v558 = vpop.f32.mrb[0].mxu0
        %559 = vmatprep.mubr.f32.mxu0 0.0
        %560 = vmatmul.mubr.f32.gmra.mrb[0].mxu0 %v378
        %v561 = vpop.f32.mrb[0].mxu0
        %v562 = vadd.f32 %v341, %v561
        %v563 = vpop.f32.mrb[0].mxu0
        %564 = vmatprep.mubr.f32.mxu0 0.0
        %565 = vmatmul.mubr.f32.gmra.mrb[0].mxu0 %v381
        %v566 = vpop.f32.mrb[0].mxu0
        %v567 = vadd.f32 %v341, %v566
        %v568 = vpop.f32.mrb[0].mxu0
        %569 = vmatprep.mubr.f32.mxu0 0.0
        %570 = vmatmul.mubr.f32.gmra.mrb[0].mxu0 %v384
        %v571 = vpop.f32.mrb[0].mxu0
        %v572 = vadd.f32 %v341, %v571
        %v573 = vpop.f32.mrb[0].mxu0
        %574 = vmatprep.mubr.f32.mxu0 0.0
        %575 = vmatmul.mubr.f32.gmra.mrb[0].mxu0 %v387
        %v576 = vpop.f32.mrb[0].mxu0
        %v577 = vadd.f32 %v341, %v576
        %v578 = vpop.f32.mrb[0].mxu0
        %579 = vmatprep.mubr.f32.mxu0 0.0
        %580 = vmatmul.mubr.f32.gmra.mrb[0].mxu0 %v390
        %v581 = vpop.f32.mrb[0].mxu0
        %v582 = vadd.f32 %v341, %v581
        %v583 = vpop.f32.mrb[0].mxu0
        %584 = vmatprep.mubr.f32.mxu0 0.0
        %585 = vmatmul.mubr.f32.gmra.mrb[0].mxu0 %v393
        %v586 = vpop.f32.mrb[0].mxu0
        %v587 = vadd.f32 %v341, %v586
        %v588 = vpop.f32.mrb[0].mxu0
        %589 = vmatprep.mubr.f32.mxu0 0.0
        %590 = vmatmul.mubr.f32.gmra.mrb[0].mxu0 %v396
        %v591 = vpop.f32.mrb[0].mxu0
        %v592 = vadd.f32 %v341, %v591
        %v593 = vpop.f32.mrb[0].mxu0
        %594 = vmatprep.mubr.f32.mxu0 0.0
        %595 = vmatmul.mubr.f32.gmra.mrb[0].mxu0 %v399
        %v596 = vpop.f32.mrb[0].mxu0
        %v597 = vadd.f32 %v341, %v596
        %v598 = vpop.f32.mrb[0].mxu0
        %599 = vmatprep.mubr.f32.mxu0 0.0
        %600 = vmatmul.mubr.f32.gmra.mrb[0].mxu0 %v402
        %v601 = vpop.f32.mrb[0].mxu0
        %v602 = vadd.f32 %v341, %v601
        %v603 = vpop.f32.mrb[0].mxu0
        %604 = vmatprep.mubr.f32.mxu0 0.0
        %605 = vmatmul.mubr.f32.gmra.mrb[0].mxu0 %v405
        %v606 = vpop.f32.mrb[0].mxu0
        %v607 = vadd.f32 %v341, %v606
        %v608 = vpop.f32.mrb[0].mxu0
        %609 = vmatprep.mubr.f32.mxu0 0.0
        %610 = vmatmul.mubr.f32.gmra.mrb[0].mxu0 %v408
        %v611 = vpop.f32.mrb[0].mxu0
        %v612 = vadd.f32 %v341, %v611
        %v613 = vpop.f32.mrb[0].mxu0
        %614 = vmatprep.mubr.f32.mxu0 0.0
        %615 = vmatmul.mubr.f32.gmra.mrb[0].mxu0 %v411
        %v616 = vpop.f32.mrb[0].mxu0
        %v617 = vadd.f32 %v341, %v616
        %v618 = vpop.f32.mrb[0].mxu0
        %619 = vmatprep.mubr.f32.mxu0 0.0
        %620 = vmatmul.mubr.f32.gmra.mrb[0].mxu0 %v414
        %v621 = vpop.f32.mrb[0].mxu0
        %v622 = vadd.f32 %v341, %v621
        %v623 = vpop.f32.mrb[0].mxu0
        %624 = vmatprep.mubr.f32.mxu0 0.0
        %625 = vmatmul.mubr.f32.gmra.mrb[0].mxu0 %v417
        %v626 = vpop.f32.mrb[0].mxu0
        %v627 = vadd.f32 %v341, %v626
        %v628 = vpop.f32.mrb[0].mxu0
        %629 = vmatprep.mubr.f32.mxu0 0.0
        %630 = vmatmul.mubr.f32.gmra.mrb[0].mxu0 %v420
        %v631 = vpop.f32.mrb[0].mxu0
        %v632 = vadd.f32 %v341, %v631
        %v633 = vpop.f32.mrb[0].mxu0
        %634 = vmatprep.mubr.f32.mxu0 0.0
        %635 = vmatmul.mubr.f32.gmra.mrb[0].mxu0 %v423
        %v636 = vpop.f32.mrb[0].mxu0
        %v637 = vadd.f32 %v341, %v636
        %v638 = vpop.f32.mrb[0].mxu0
        %639 = vmatprep.mubr.f32.mxu0 0.0
        %640 = vmatmul.mubr.f32.gmra.mrb[0].mxu0 %v426
        %v641 = vpop.f32.mrb[0].mxu0
        %v642 = vadd.f32 %v341, %v641
        %v643 = vpop.f32.mrb[0].mxu0
        %644 = vmatprep.mubr.f32.mxu0 0.0
        %645 = vmatmul.mubr.f32.gmra.mrb[0].mxu0 %v429
        %v646 = vpop.f32.mrb[0].mxu0
        %v647 = vadd.f32 %v341, %v646
        %v648 = vpop.f32.mrb[0].mxu0
        %649 = vmatprep.mubr.f32.mxu0 0.0
        %650 = vmatmul.mubr.f32.gmra.mrb[0].mxu0 %v432
        %v651 = vpop.f32.mrb[0].mxu0
        %v652 = vadd.f32 %v341, %v651
        %v653 = vpop.f32.mrb[0].mxu0
        %654 = vmatprep.mubr.f32.mxu0 0.0
        %655 = vmatmul.mubr.f32.gmra.mrb[0].mxu0 %v435
        %v656 = vpop.f32.mrb[0].mxu0
        %v657 = vadd.f32 %v341, %v656
        %v658 = vpop.f32.mrb[0].mxu0
        %659 = vmatprep.mubr.f32.mxu0 0.0
        %660 = vmatmul.mubr.f32.gmra.mrb[0].mxu0 %v438
        %v661 = vpop.f32.mrb[0].mxu0
        %v662 = vadd.f32 %v341, %v661
        %v663 = vpop.f32.mrb[0].mxu0
        %664 = vdwg.mxu0
        %v665 = vmax.f32 %v507, 0.0
        %v666 = vmax.f32 %v512, 0.0
        %v667 = vmax.f32 %v517, 0.0
        %v668 = vmax.f32 %v522, 0.0
        %v669 = vmax.f32 %v527, 0.0
        %v670 = vmax.f32 %v532, 0.0
        %v671 = vmax.f32 %v537, 0.0
        %v672 = vmax.f32 %v542, 0.0
        %v673 = vmax.f32 %v547, 0.0
        %v674 = vmax.f32 %v552, 0.0
        %v675 = vmax.f32 %v557, 0.0
        %v676 = vmax.f32 %v562, 0.0
        %v677 = vmax.f32 %v567, 0.0
        %v678 = vmax.f32 %v572, 0.0
        %v679 = vmax.f32 %v577, 0.0
        %v680 = vmax.f32 %v582, 0.0
        %v681 = vmax.f32 %v587, 0.0
        %v682 = vmax.f32 %v592, 0.0
        %v683 = vmax.f32 %v597, 0.0
        %v684 = vmax.f32 %v602, 0.0
        %v685 = vmax.f32 %v607, 0.0
        %v686 = vmax.f32 %v612, 0.0
        %v687 = vmax.f32 %v617, 0.0
        %v688 = vmax.f32 %v622, 0.0
        %v689 = vmax.f32 %v627, 0.0
        %v690 = vmax.f32 %v632, 0.0
        %v691 = vmax.f32 %v637, 0.0
        %v692 = vmax.f32 %v642, 0.0
        %v693 = vmax.f32 %v647, 0.0
        %v694 = vmax.f32 %v652, 0.0
        %v695 = vmax.f32 %v657, 0.0
        %v696 = vmax.f32 %v662, 0.0
        %v697 = vld [vmem:[%s3] sm:$0xff]
        %v698 = vld [vmem:[%s3 + $0x8] sm:$0xff]
        %v699 = vld [vmem:[%s3 + $0x10] sm:$0xff]
        %v700 = vld [vmem:[%s3 + $0x18] sm:$0xff]
        %v701 = vld [vmem:[%s4] sm:$0x1]
        %v703 = vlaneseq
        %v704 = vshrl.u32 %v703, 7
        %v705 = vsub.s32 0, %v704
        %v706 = vrot.slane %v701, %v705
        %vm708 = vcmask 261120
        %v710 = vsel %vm708, %v665, 0
        %v713 = vsel %vm708, %v666, 0
        %v716 = vsel %vm708, %v667, 0
        %v719 = vsel %vm708, %v668, 0
        %v722 = vsel %vm708, %v669, 0
        %v725 = vsel %vm708, %v670, 0
        %v728 = vsel %vm708, %v671, 0
        %v731 = vsel %vm708, %v672, 0
        %v734 = vsel %vm708, %v673, 0
        %v737 = vsel %vm708, %v674, 0
        %v740 = vsel %vm708, %v675, 0
        %v743 = vsel %vm708, %v676, 0
        %v746 = vsel %vm708, %v677, 0
        %v749 = vsel %vm708, %v678, 0
        %v752 = vsel %vm708, %v679, 0
        %v755 = vsel %vm708, %v680, 0
        %v758 = vsel %vm708, %v681, 0
        %v761 = vsel %vm708, %v682, 0
        %v764 = vsel %vm708, %v683, 0
        %v767 = vsel %vm708, %v684, 0
        %v770 = vsel %vm708, %v685, 0
        %v773 = vsel %vm708, %v686, 0
        %v776 = vsel %vm708, %v687, 0
        %v779 = vsel %vm708, %v688, 0
        %v782 = vsel %vm708, %v689, 0
        %v785 = vsel %vm708, %v690, 0
        %v788 = vsel %vm708, %v691, 0
        %v791 = vsel %vm708, %v692, 0
        %v794 = vsel %vm708, %v693, 0
        %v797 = vsel %vm708, %v694, 0
        %v800 = vsel %vm708, %v695, 0
        %v803 = vsel %vm708, %v696, 0
        %805 = vmatprep.subr.mxu0 0.0
        %806 = vmatpush1.msra.mxu0 %v697
        %807 = vmatprep.subr.mxu0 0.0
        %808 = vmatpush1.msra.mxu0 %v698
        %809 = vmatprep.subr.mxu0 0.0
        %810 = vmatpush1.msra.mxu0 %v699
        %811 = vmatprep.subr.mxu0 0.0
        %812 = vmatpush1.msra.mxu0 %v700
        %813 = vmatprep.subr.mxu0 0.0
        %814 = vmatpush1.msra.mxu0 0.0
        %815 = vmatprep.subr.mxu0 0.0
        %816 = vmatpush1.msra.mxu0 0.0
        %817 = vmatprep.subr.mxu0 0.0
        %818 = vmatpush1.msra.mxu0 0.0
        %819 = vmatprep.subr.mxu0 0.0
        %820 = vmatpush1.msra.mxu0 0.0
        %821 = vmatprep.subr.mxu0 0.0
        %822 = vmatpush1.msra.mxu0 0.0
        %823 = vmatprep.subr.mxu0 0.0
        %824 = vmatpush1.msra.mxu0 0.0
        %825 = vmatprep.subr.mxu0 0.0
        %826 = vmatpush1.msra.mxu0 0.0
        %827 = vmatprep.subr.mxu0 0.0
        %828 = vmatpush1.msra.mxu0 0.0
        %829 = vmatprep.subr.mxu0 0.0
        %830 = vmatpush1.msra.mxu0 0.0
        %831 = vmatprep.subr.mxu0 0.0
        %832 = vmatpush1.msra.mxu0 0.0
        %833 = vmatprep.subr.mxu0 0.0
        %834 = vmatpush1.msra.mxu0 0.0
        %835 = vmatprep.subr.mxu0 0.0
        %836 = vmatpush1.msra.mxu0 0.0
        %837 = vmatprep.subr.mxu0 0.0
        %838 = vmatpush1.msra.mxu0 0.0
        %839 = vmatprep.subr.mxu0 0.0
        %840 = vmatpush1.msra.mxu0 0.0
        %841 = vmatprep.subr.mxu0 0.0
        %842 = vmatpush1.msra.mxu0 0.0
        %843 = vmatprep.subr.mxu0 0.0
        %844 = vmatpush1.msra.mxu0 0.0
        %845 = vmatprep.subr.mxu0 0.0
        %846 = vmatpush1.msra.mxu0 0.0
        %847 = vmatprep.subr.mxu0 0.0
        %848 = vmatpush1.msra.mxu0 0.0
        %849 = vmatprep.subr.mxu0 0.0
        %850 = vmatpush1.msra.mxu0 0.0
        %851 = vmatprep.subr.mxu0 0.0
        %852 = vmatpush1.msra.mxu0 0.0
        %853 = vmatprep.subr.mxu0 0.0
        %854 = vmatpush1.msra.mxu0 0.0
        %855 = vmatprep.subr.mxu0 0.0
        %856 = vmatpush1.msra.mxu0 0.0
        %857 = vmatprep.subr.mxu0 0.0
        %858 = vmatpush1.msra.mxu0 0.0
        %859 = vmatprep.subr.mxu0 0.0
        %860 = vmatpush1.msra.mxu0 0.0
        %861 = vmatprep.subr.mxu0 0.0
        %862 = vmatpush1.msra.mxu0 0.0
        %863 = vmatprep.subr.mxu0 0.0
        %864 = vmatpush1.msra.mxu0 0.0
        %865 = vmatprep.subr.mxu0 0.0
        %866 = vmatpush1.msra.mxu0 0.0
        %867 = vmatprep.subr.mxu0 0.0
        %868 = vmatpush1.msra.mxu0 0.0
        %869 = vmatprep.mubr.f32.mxu0 0.0
        %870 = vmatmul.mubr.f32.gmra.mrb[0].mxu0 %v710
        %v871 = vpop.f32.mrb[0].mxu0
        %v872 = vadd.f32 %v706, %v871
        %v873 = vpop.f32.mrb[0].mxu0
        %874 = vmatprep.mubr.f32.mxu0 0.0
        %875 = vmatmul.mubr.f32.gmra.mrb[0].mxu0 %v713
        %v876 = vpop.f32.mrb[0].mxu0
        %v877 = vadd.f32 %v706, %v876
        %v878 = vpop.f32.mrb[0].mxu0
        %879 = vmatprep.mubr.f32.mxu0 0.0
        %880 = vmatmul.mubr.f32.gmra.mrb[0].mxu0 %v716
        %v881 = vpop.f32.mrb[0].mxu0
        %v882 = vadd.f32 %v706, %v881
        %v883 = vpop.f32.mrb[0].mxu0
        %884 = vmatprep.mubr.f32.mxu0 0.0
        %885 = vmatmul.mubr.f32.gmra.mrb[0].mxu0 %v719
        %v886 = vpop.f32.mrb[0].mxu0
        %v887 = vadd.f32 %v706, %v886
        %v888 = vpop.f32.mrb[0].mxu0
        %889 = vmatprep.mubr.f32.mxu0 0.0
        %890 = vmatmul.mubr.f32.gmra.mrb[0].mxu0 %v722
        %v891 = vpop.f32.mrb[0].mxu0
        %v892 = vadd.f32 %v706, %v891
        %v893 = vpop.f32.mrb[0].mxu0
        %894 = vmatprep.mubr.f32.mxu0 0.0
        %895 = vmatmul.mubr.f32.gmra.mrb[0].mxu0 %v725
        %v896 = vpop.f32.mrb[0].mxu0
        %v897 = vadd.f32 %v706, %v896
        %v898 = vpop.f32.mrb[0].mxu0
        %899 = vmatprep.mubr.f32.mxu0 0.0
        %900 = vmatmul.mubr.f32.gmra.mrb[0].mxu0 %v728
        %v901 = vpop.f32.mrb[0].mxu0
        %v902 = vadd.f32 %v706, %v901
        %v903 = vpop.f32.mrb[0].mxu0
        %904 = vmatprep.mubr.f32.mxu0 0.0
        %905 = vmatmul.mubr.f32.gmra.mrb[0].mxu0 %v731
        %v906 = vpop.f32.mrb[0].mxu0
        %v907 = vadd.f32 %v706, %v906
        %v908 = vpop.f32.mrb[0].mxu0
        %909 = vmatprep.mubr.f32.mxu0 0.0
        %910 = vmatmul.mubr.f32.gmra.mrb[0].mxu0 %v734
        %v911 = vpop.f32.mrb[0].mxu0
        %v912 = vadd.f32 %v706, %v911
        %v913 = vpop.f32.mrb[0].mxu0
        %914 = vmatprep.mubr.f32.mxu0 0.0
        %915 = vmatmul.mubr.f32.gmra.mrb[0].mxu0 %v737
        %v916 = vpop.f32.mrb[0].mxu0
        %v917 = vadd.f32 %v706, %v916
        %v918 = vpop.f32.mrb[0].mxu0
        %919 = vmatprep.mubr.f32.mxu0 0.0
        %920 = vmatmul.mubr.f32.gmra.mrb[0].mxu0 %v740
        %v921 = vpop.f32.mrb[0].mxu0
        %v922 = vadd.f32 %v706, %v921
        %v923 = vpop.f32.mrb[0].mxu0
        %924 = vmatprep.mubr.f32.mxu0 0.0
        %925 = vmatmul.mubr.f32.gmra.mrb[0].mxu0 %v743
        %v926 = vpop.f32.mrb[0].mxu0
        %v927 = vadd.f32 %v706, %v926
        %v928 = vpop.f32.mrb[0].mxu0
        %929 = vmatprep.mubr.f32.mxu0 0.0
        %930 = vmatmul.mubr.f32.gmra.mrb[0].mxu0 %v746
        %v931 = vpop.f32.mrb[0].mxu0
        %v932 = vadd.f32 %v706, %v931
        %v933 = vpop.f32.mrb[0].mxu0
        %934 = vmatprep.mubr.f32.mxu0 0.0
        %935 = vmatmul.mubr.f32.gmra.mrb[0].mxu0 %v749
        %v936 = vpop.f32.mrb[0].mxu0
        %v937 = vadd.f32 %v706, %v936
        %v938 = vpop.f32.mrb[0].mxu0
        %939 = vmatprep.mubr.f32.mxu0 0.0
        %940 = vmatmul.mubr.f32.gmra.mrb[0].mxu0 %v752
        %v941 = vpop.f32.mrb[0].mxu0
        %v942 = vadd.f32 %v706, %v941
        %v943 = vpop.f32.mrb[0].mxu0
        %944 = vmatprep.mubr.f32.mxu0 0.0
        %945 = vmatmul.mubr.f32.gmra.mrb[0].mxu0 %v755
        %v946 = vpop.f32.mrb[0].mxu0
        %v947 = vadd.f32 %v706, %v946
        %v948 = vpop.f32.mrb[0].mxu0
        %949 = vmatprep.mubr.f32.mxu0 0.0
        %950 = vmatmul.mubr.f32.gmra.mrb[0].mxu0 %v758
        %v951 = vpop.f32.mrb[0].mxu0
        %v952 = vadd.f32 %v706, %v951
        %v953 = vpop.f32.mrb[0].mxu0
        %954 = vmatprep.mubr.f32.mxu0 0.0
        %955 = vmatmul.mubr.f32.gmra.mrb[0].mxu0 %v761
        %v956 = vpop.f32.mrb[0].mxu0
        %v957 = vadd.f32 %v706, %v956
        %v958 = vpop.f32.mrb[0].mxu0
        %959 = vmatprep.mubr.f32.mxu0 0.0
        %960 = vmatmul.mubr.f32.gmra.mrb[0].mxu0 %v764
        %v961 = vpop.f32.mrb[0].mxu0
        %v962 = vadd.f32 %v706, %v961
        %v963 = vpop.f32.mrb[0].mxu0
        %964 = vmatprep.mubr.f32.mxu0 0.0
        %965 = vmatmul.mubr.f32.gmra.mrb[0].mxu0 %v767
        %v966 = vpop.f32.mrb[0].mxu0
        %v967 = vadd.f32 %v706, %v966
        %v968 = vpop.f32.mrb[0].mxu0
        %969 = vmatprep.mubr.f32.mxu0 0.0
        %970 = vmatmul.mubr.f32.gmra.mrb[0].mxu0 %v770
        %v971 = vpop.f32.mrb[0].mxu0
        %v972 = vadd.f32 %v706, %v971
        %v973 = vpop.f32.mrb[0].mxu0
        %974 = vmatprep.mubr.f32.mxu0 0.0
        %975 = vmatmul.mubr.f32.gmra.mrb[0].mxu0 %v773
        %v976 = vpop.f32.mrb[0].mxu0
        %v977 = vadd.f32 %v706, %v976
        %v978 = vpop.f32.mrb[0].mxu0
        %979 = vmatprep.mubr.f32.mxu0 0.0
        %980 = vmatmul.mubr.f32.gmra.mrb[0].mxu0 %v776
        %v981 = vpop.f32.mrb[0].mxu0
        %v982 = vadd.f32 %v706, %v981
        %v983 = vpop.f32.mrb[0].mxu0
        %984 = vmatprep.mubr.f32.mxu0 0.0
        %985 = vmatmul.mubr.f32.gmra.mrb[0].mxu0 %v779
        %v986 = vpop.f32.mrb[0].mxu0
        %v987 = vadd.f32 %v706, %v986
        %v988 = vpop.f32.mrb[0].mxu0
        %989 = vmatprep.mubr.f32.mxu0 0.0
        %990 = vmatmul.mubr.f32.gmra.mrb[0].mxu0 %v782
        %v991 = vpop.f32.mrb[0].mxu0
        %v992 = vadd.f32 %v706, %v991
        %v993 = vpop.f32.mrb[0].mxu0
        %994 = vmatprep.mubr.f32.mxu0 0.0
        %995 = vmatmul.mubr.f32.gmra.mrb[0].mxu0 %v785
        %v996 = vpop.f32.mrb[0].mxu0
        %v997 = vadd.f32 %v706, %v996
        %v998 = vpop.f32.mrb[0].mxu0
        %999 = vmatprep.mubr.f32.mxu0 0.0
        %1000 = vmatmul.mubr.f32.gmra.mrb[0].mxu0 %v788
        %v1001 = vpop.f32.mrb[0].mxu0
        %v1002 = vadd.f32 %v706, %v1001
        %v1003 = vpop.f32.mrb[0].mxu0
        %1004 = vmatprep.mubr.f32.mxu0 0.0
        %1005 = vmatmul.mubr.f32.gmra.mrb[0].mxu0 %v791
        %v1006 = vpop.f32.mrb[0].mxu0
        %v1007 = vadd.f32 %v706, %v1006
        %v1008 = vpop.f32.mrb[0].mxu0
        %1009 = vmatprep.mubr.f32.mxu0 0.0
        %1010 = vmatmul.mubr.f32.gmra.mrb[0].mxu0 %v794
        %v1011 = vpop.f32.mrb[0].mxu0
        %v1012 = vadd.f32 %v706, %v1011
        %v1013 = vpop.f32.mrb[0].mxu0
        %1014 = vmatprep.mubr.f32.mxu0 0.0
        %1015 = vmatmul.mubr.f32.gmra.mrb[0].mxu0 %v797
        %v1016 = vpop.f32.mrb[0].mxu0
        %v1017 = vadd.f32 %v706, %v1016
        %v1018 = vpop.f32.mrb[0].mxu0
        %1019 = vmatprep.mubr.f32.mxu0 0.0
        %1020 = vmatmul.mubr.f32.gmra.mrb[0].mxu0 %v800
        %v1021 = vpop.f32.mrb[0].mxu0
        %v1022 = vadd.f32 %v706, %v1021
        %v1023 = vpop.f32.mrb[0].mxu0
        %1024 = vmatprep.mubr.f32.mxu0 0.0
        %1025 = vmatmul.mubr.f32.gmra.mrb[0].mxu0 %v803
        %v1026 = vpop.f32.mrb[0].mxu0
        %v1027 = vadd.f32 %v706, %v1026
        %v1028 = vpop.f32.mrb[0].mxu0
        %1029 = vdwg.mxu0
        %v1030 = vmax.f32 %v872, 0.0
        %v1031 = vmax.f32 %v877, 0.0
        %v1032 = vmax.f32 %v882, 0.0
        %v1033 = vmax.f32 %v887, 0.0
        %v1034 = vmax.f32 %v892, 0.0
        %v1035 = vmax.f32 %v897, 0.0
        %v1036 = vmax.f32 %v902, 0.0
        %v1037 = vmax.f32 %v907, 0.0
        %v1038 = vmax.f32 %v912, 0.0
        %v1039 = vmax.f32 %v917, 0.0
        %v1040 = vmax.f32 %v922, 0.0
        %v1041 = vmax.f32 %v927, 0.0
        %v1042 = vmax.f32 %v932, 0.0
        %v1043 = vmax.f32 %v937, 0.0
        %v1044 = vmax.f32 %v942, 0.0
        %v1045 = vmax.f32 %v947, 0.0
        %v1046 = vmax.f32 %v952, 0.0
        %v1047 = vmax.f32 %v957, 0.0
        %v1048 = vmax.f32 %v962, 0.0
        %v1049 = vmax.f32 %v967, 0.0
        %v1050 = vmax.f32 %v972, 0.0
        %v1051 = vmax.f32 %v977, 0.0
        %v1052 = vmax.f32 %v982, 0.0
        %v1053 = vmax.f32 %v987, 0.0
        %v1054 = vmax.f32 %v992, 0.0
        %v1055 = vmax.f32 %v997, 0.0
        %v1056 = vmax.f32 %v1002, 0.0
        %v1057 = vmax.f32 %v1007, 0.0
        %v1058 = vmax.f32 %v1012, 0.0
        %v1059 = vmax.f32 %v1017, 0.0
        %v1060 = vmax.f32 %v1022, 0.0
        %v1061 = vmax.f32 %v1027, 0.0
        %v1062 = vld [vmem:[%s5] sm:$0x1]
        %v1064 = vlaneseq
        %v1065 = vshrl.u32 %v1064, 7
        %v1066 = vsub.s32 0, %v1065
        %v1067 = vrot.slane %v1062, %v1066
        %v1069 = vmul.f32 %v1030, %v1067
        %v1070 = vmul.f32 %v1031, %v1067
        %v1071 = vmul.f32 %v1032, %v1067
        %v1072 = vmul.f32 %v1033, %v1067
        %v1073 = vmul.f32 %v1034, %v1067
        %v1074 = vmul.f32 %v1035, %v1067
        %v1075 = vmul.f32 %v1036, %v1067
        %v1076 = vmul.f32 %v1037, %v1067
        %v1077 = vmul.f32 %v1038, %v1067
        %v1078 = vmul.f32 %v1039, %v1067
        %v1079 = vmul.f32 %v1040, %v1067
        %v1080 = vmul.f32 %v1041, %v1067
        %v1081 = vmul.f32 %v1042, %v1067
        %v1082 = vmul.f32 %v1043, %v1067
        %v1083 = vmul.f32 %v1044, %v1067
        %v1084 = vmul.f32 %v1045, %v1067
        %v1085 = vmul.f32 %v1046, %v1067
        %v1086 = vmul.f32 %v1047, %v1067
        %v1087 = vmul.f32 %v1048, %v1067
        %v1088 = vmul.f32 %v1049, %v1067
        %v1089 = vmul.f32 %v1050, %v1067
        %v1090 = vmul.f32 %v1051, %v1067
        %v1091 = vmul.f32 %v1052, %v1067
        %v1092 = vmul.f32 %v1053, %v1067
        %v1093 = vmul.f32 %v1054, %v1067
        %v1094 = vmul.f32 %v1055, %v1067
        %v1095 = vmul.f32 %v1056, %v1067
        %v1096 = vmul.f32 %v1057, %v1067
        %v1097 = vmul.f32 %v1058, %v1067
        %v1098 = vmul.f32 %v1059, %v1067
        %v1099 = vmul.f32 %v1060, %v1067
        %v1100 = vmul.f32 %v1061, %v1067
        %v1101 = vsel %vm708, %v1069, 0.0
        %1102 = vadd.xlane.f32.xlu0 %v1101
        %v1103 = vpop.xlane.xlu0 %1102
        %v1104 = vsel %vm708, %v1070, 0.0
        %1105 = vadd.xlane.f32.xlu0 %v1104
        %v1106 = vpop.xlane.xlu0 %1105
        %v1107 = vsel %vm708, %v1071, 0.0
        %1108 = vadd.xlane.f32.xlu0 %v1107
        %v1109 = vpop.xlane.xlu0 %1108
        %v1110 = vsel %vm708, %v1072, 0.0
        %1111 = vadd.xlane.f32.xlu0 %v1110
        %v1112 = vpop.xlane.xlu0 %1111
        %v1113 = vsel %vm708, %v1073, 0.0
        %1114 = vadd.xlane.f32.xlu0 %v1113
        %v1115 = vpop.xlane.xlu0 %1114
        %v1116 = vsel %vm708, %v1074, 0.0
        %1117 = vadd.xlane.f32.xlu0 %v1116
        %v1118 = vpop.xlane.xlu0 %1117
        %v1119 = vsel %vm708, %v1075, 0.0
        %1120 = vadd.xlane.f32.xlu0 %v1119
        %v1121 = vpop.xlane.xlu0 %1120
        %v1122 = vsel %vm708, %v1076, 0.0
        %1123 = vadd.xlane.f32.xlu0 %v1122
        %v1124 = vpop.xlane.xlu0 %1123
        %v1125 = vsel %vm708, %v1077, 0.0
        %1126 = vadd.xlane.f32.xlu0 %v1125
        %v1127 = vpop.xlane.xlu0 %1126
        %v1128 = vsel %vm708, %v1078, 0.0
        %1129 = vadd.xlane.f32.xlu0 %v1128
        %v1130 = vpop.xlane.xlu0 %1129
        %v1131 = vsel %vm708, %v1079, 0.0
        %1132 = vadd.xlane.f32.xlu0 %v1131
        %v1133 = vpop.xlane.xlu0 %1132
        %v1134 = vsel %vm708, %v1080, 0.0
        %1135 = vadd.xlane.f32.xlu0 %v1134
        %v1136 = vpop.xlane.xlu0 %1135
        %v1137 = vsel %vm708, %v1081, 0.0
        %1138 = vadd.xlane.f32.xlu0 %v1137
        %v1139 = vpop.xlane.xlu0 %1138
        %v1140 = vsel %vm708, %v1082, 0.0
        %1141 = vadd.xlane.f32.xlu0 %v1140
        %v1142 = vpop.xlane.xlu0 %1141
        %v1143 = vsel %vm708, %v1083, 0.0
        %1144 = vadd.xlane.f32.xlu0 %v1143
        %v1145 = vpop.xlane.xlu0 %1144
        %v1146 = vsel %vm708, %v1084, 0.0
        %1147 = vadd.xlane.f32.xlu0 %v1146
        %v1148 = vpop.xlane.xlu0 %1147
        %v1149 = vsel %vm708, %v1085, 0.0
        %1150 = vadd.xlane.f32.xlu0 %v1149
        %v1151 = vpop.xlane.xlu0 %1150
        %v1152 = vsel %vm708, %v1086, 0.0
        %1153 = vadd.xlane.f32.xlu0 %v1152
        %v1154 = vpop.xlane.xlu0 %1153
        %v1155 = vsel %vm708, %v1087, 0.0
        %1156 = vadd.xlane.f32.xlu0 %v1155
        %v1157 = vpop.xlane.xlu0 %1156
        %v1158 = vsel %vm708, %v1088, 0.0
        %1159 = vadd.xlane.f32.xlu0 %v1158
        %v1160 = vpop.xlane.xlu0 %1159
        %v1161 = vsel %vm708, %v1089, 0.0
        %1162 = vadd.xlane.f32.xlu0 %v1161
        %v1163 = vpop.xlane.xlu0 %1162
        %v1164 = vsel %vm708, %v1090, 0.0
        %1165 = vadd.xlane.f32.xlu0 %v1164
        %v1166 = vpop.xlane.xlu0 %1165
        %v1167 = vsel %vm708, %v1091, 0.0
        %1168 = vadd.xlane.f32.xlu0 %v1167
        %v1169 = vpop.xlane.xlu0 %1168
        %v1170 = vsel %vm708, %v1092, 0.0
        %1171 = vadd.xlane.f32.xlu0 %v1170
        %v1172 = vpop.xlane.xlu0 %1171
        %v1173 = vsel %vm708, %v1093, 0.0
        %1174 = vadd.xlane.f32.xlu0 %v1173
        %v1175 = vpop.xlane.xlu0 %1174
        %v1176 = vsel %vm708, %v1094, 0.0
        %1177 = vadd.xlane.f32.xlu0 %v1176
        %v1178 = vpop.xlane.xlu0 %1177
        %v1179 = vsel %vm708, %v1095, 0.0
        %1180 = vadd.xlane.f32.xlu0 %v1179
        %v1181 = vpop.xlane.xlu0 %1180
        %v1182 = vsel %vm708, %v1096, 0.0
        %1183 = vadd.xlane.f32.xlu0 %v1182
        %v1184 = vpop.xlane.xlu0 %1183
        %v1185 = vsel %vm708, %v1097, 0.0
        %1186 = vadd.xlane.f32.xlu0 %v1185
        %v1187 = vpop.xlane.xlu0 %1186
        %v1188 = vsel %vm708, %v1098, 0.0
        %1189 = vadd.xlane.f32.xlu0 %v1188
        %v1190 = vpop.xlane.xlu0 %1189
        %v1191 = vsel %vm708, %v1099, 0.0
        %1192 = vadd.xlane.f32.xlu0 %v1191
        %v1193 = vpop.xlane.xlu0 %1192
        %v1194 = vsel %vm708, %v1100, 0.0
        %1195 = vadd.xlane.f32.xlu0 %v1194
        %v1196 = vpop.xlane.xlu0 %1195
        %v1197 = vld [vmem:[#allocation2] sm:$0x1]
        %v1199 = vlaneseq
        %v1200 = vshrl.u32 %v1199, 7
        %v1201 = vsub.s32 0, %v1200
        %v1202 = vrot.slane %v1197, %v1201
        %v1204 = vadd.f32 %v1103, %v1202
        %v1205 = vadd.f32 %v1106, %v1202
        %v1206 = vadd.f32 %v1109, %v1202
        %v1207 = vadd.f32 %v1112, %v1202
        %v1208 = vadd.f32 %v1115, %v1202
        %v1209 = vadd.f32 %v1118, %v1202
        %v1210 = vadd.f32 %v1121, %v1202
        %v1211 = vadd.f32 %v1124, %v1202
        %v1212 = vadd.f32 %v1127, %v1202
        %v1213 = vadd.f32 %v1130, %v1202
        %v1214 = vadd.f32 %v1133, %v1202
        %v1215 = vadd.f32 %v1136, %v1202
        %v1216 = vadd.f32 %v1139, %v1202
        %v1217 = vadd.f32 %v1142, %v1202
        %v1218 = vadd.f32 %v1145, %v1202
        %v1219 = vadd.f32 %v1148, %v1202
        %v1220 = vadd.f32 %v1151, %v1202
        %v1221 = vadd.f32 %v1154, %v1202
        %v1222 = vadd.f32 %v1157, %v1202
        %v1223 = vadd.f32 %v1160, %v1202
        %v1224 = vadd.f32 %v1163, %v1202
        %v1225 = vadd.f32 %v1166, %v1202
        %v1226 = vadd.f32 %v1169, %v1202
        %v1227 = vadd.f32 %v1172, %v1202
        %v1228 = vadd.f32 %v1175, %v1202
        %v1229 = vadd.f32 %v1178, %v1202
        %v1230 = vadd.f32 %v1181, %v1202
        %v1231 = vadd.f32 %v1184, %v1202
        %v1232 = vadd.f32 %v1187, %v1202
        %v1233 = vadd.f32 %v1190, %v1202
        %v1234 = vadd.f32 %v1193, %v1202
        %v1235 = vadd.f32 %v1196, %v1202
        %vm1236 = vcmask 7168
        %1237 = vst.msk [vmem:[%s282] sm:$0xff] %vm1236, %v1204
        %1238 = vst.msk [vmem:[%s282 + $0x8] sm:$0xff] %vm1236, %v1205
        %1239 = vst.msk [vmem:[%s282 + $0x10] sm:$0xff] %vm1236, %v1206
        %1240 = vst.msk [vmem:[%s282 + $0x18] sm:$0xff] %vm1236, %v1207
        %1241 = vst.msk [vmem:[%s282 + $0x20] sm:$0xff] %vm1236, %v1208
        %1242 = vst.msk [vmem:[%s282 + $0x28] sm:$0xff] %vm1236, %v1209
        %1243 = vst.msk [vmem:[%s282 + $0x30] sm:$0xff] %vm1236, %v1210
        %1244 = vst.msk [vmem:[%s282 + $0x38] sm:$0xff] %vm1236, %v1211
        %1245 = vst.msk [vmem:[%s282 + $0x40] sm:$0xff] %vm1236, %v1212
        %1246 = vst.msk [vmem:[%s282 + $0x48] sm:$0xff] %vm1236, %v1213
        %1247 = vst.msk [vmem:[%s282 + $0x50] sm:$0xff] %vm1236, %v1214
        %1248 = vst.msk [vmem:[%s282 + $0x58] sm:$0xff] %vm1236, %v1215
        %1249 = vst.msk [vmem:[%s282 + $0x60] sm:$0xff] %vm1236, %v1216
        %1250 = vst.msk [vmem:[%s282 + $0x68] sm:$0xff] %vm1236, %v1217
        %1251 = vst.msk [vmem:[%s282 + $0x70] sm:$0xff] %vm1236, %v1218
        %1252 = vst.msk [vmem:[%s282 + $0x78] sm:$0xff] %vm1236, %v1219
        %1253 = vst.msk [vmem:[%s282 + $0x80] sm:$0xff] %vm1236, %v1220
        %1254 = vst.msk [vmem:[%s282 + $0x88] sm:$0xff] %vm1236, %v1221
        %1255 = vst.msk [vmem:[%s282 + $0x90] sm:$0xff] %vm1236, %v1222
        %1256 = vst.msk [vmem:[%s282 + $0x98] sm:$0xff] %vm1236, %v1223
        %1257 = vst.msk [vmem:[%s282 + $0xa0] sm:$0xff] %vm1236, %v1224
        %1258 = vst.msk [vmem:[%s282 + $0xa8] sm:$0xff] %vm1236, %v1225
        %1259 = vst.msk [vmem:[%s282 + $0xb0] sm:$0xff] %vm1236, %v1226
        %1260 = vst.msk [vmem:[%s282 + $0xb8] sm:$0xff] %vm1236, %v1227
        %1261 = vst.msk [vmem:[%s282 + $0xc0] sm:$0xff] %vm1236, %v1228
        %1262 = vst.msk [vmem:[%s282 + $0xc8] sm:$0xff] %vm1236, %v1229
        %1263 = vst.msk [vmem:[%s282 + $0xd0] sm:$0xff] %vm1236, %v1230
        %1264 = vst.msk [vmem:[%s282 + $0xd8] sm:$0xff] %vm1236, %v1231
        %1265 = vst.msk [vmem:[%s282 + $0xe0] sm:$0xff] %vm1236, %v1232
        %1266 = vst.msk [vmem:[%s282 + $0xe8] sm:$0xff] %vm1236, %v1233
        %1267 = vst.msk [vmem:[%s282 + $0xf0] sm:$0xff] %vm1236, %v1234
        %1268 = vst.msk [vmem:[%s282 + $0xf8] sm:$0xff] %vm1236, %v1235
        %s1269 = sand.u32 %s180, 1
        %s1270 = sand.u32 %s180, 1
        %s1271 = smul.addr %s1270, 256
        %s1272 = scalar_lea.vmem [#allocation3], %s1271
        // Predicated region
        $region49: #{tpu_custom_call.1} parent=47 // pred_check
          %p1273 = pneg %p190
        $region50: #{tpu_custom_call.1} parent=47 // pred_check_branch
          %1275 = sbr.rel (%p1273) target = $region52
        $region51: #{tpu_custom_call.1} parent=47 // pred_region
          %s1276 = smul.u32 32, %s20
          %s1277 = ssub.s32 38, %s1276
          %p1278 = scmp.lt.s32.totalorder %s1277, 32
          %s1279 = scalar_select %p1278, %s1277, 32
          %s1280 = smul.u32 128, %s1279
          %p1281 = scmp.ne.s32.totalorder 0, %s1280
          %s1282 = smul.addr %s1276, 8
          %s1283 = scalar_lea.vmem %s7, %s1282
          // Predicated region
          $region53: #{tpu_custom_call.1} parent=51 // pred_check
            %p1284 = pneg %p1281
          $region54: #{tpu_custom_call.1} parent=51 // pred_check_branch
            %1286 = sbr.rel (%p1284) target = $region56
          $region55: #{tpu_custom_call.1} parent=51 // pred_region
            // Predicated region
            $region57: #{tpu_custom_call.1} parent=55 // pred_check
              _
            $region58: #{tpu_custom_call.1} parent=55 // pred_check_branch
              %1288 = sbr.rel (0) target = $region60
            $region59: #{tpu_custom_call.1} parent=55 // pred_region
              // Predicated region
              $region79: #{tpu_custom_call.1} parent=59 // pred_check
                _
              $region80: #{tpu_custom_call.1} parent=59 // pred_check_branch
                %1399 = sbr.rel (0) target = $region82
              $region81: #{tpu_custom_call.1} parent=59 // pred_region
                %s1400 = sshrl.u32 %s1279, 5
                // While loop
                $region83: #{tpu_custom_call.1} parent=81 // loop_pre_header
                  _
                $region84: #{tpu_custom_call.1} parent=81 // loop_header
                  %s1402 = sphi 0, %s1404
                  %p1403 = scmp.ge.s32.totalorder %s1402, %s1400
                  %s1407 = sphi 0, %s1476
                  %s1408 = sphi %s1272, %s1479
                  %s1409 = sphi %s1283, %s1480
                $region85: #{tpu_custom_call.1} parent=81 // loop_header_branch
                  %1406 = sbr.rel (%p1403) target = $region89
                $region86: #{tpu_custom_call.1} parent=81 // loop_body
                  %v1410 = vld [vmem:[%s1408] sm:$0xff]
                  %1411 = vst [vmem:[%s1409] sm:$0xff] %v1410
                  %v1412 = vld [vmem:[%s1408 + $0x8] sm:$0xff]
                  %1413 = vst [vmem:[%s1409 + $0x8] sm:$0xff] %v1412
                  %v1414 = vld [vmem:[%s1408 + $0x10] sm:$0xff]
                  %1415 = vst [vmem:[%s1409 + $0x10] sm:$0xff] %v1414
                  %v1416 = vld [vmem:[%s1408 + $0x18] sm:$0xff]
                  %1417 = vst [vmem:[%s1409 + $0x18] sm:$0xff] %v1416
                  %v1418 = vld [vmem:[%s1408 + $0x20] sm:$0xff]
                  %1419 = vst [vmem:[%s1409 + $0x20] sm:$0xff] %v1418
                  %v1420 = vld [vmem:[%s1408 + $0x28] sm:$0xff]
                  %1421 = vst [vmem:[%s1409 + $0x28] sm:$0xff] %v1420
                  %v1422 = vld [vmem:[%s1408 + $0x30] sm:$0xff]
                  %1423 = vst [vmem:[%s1409 + $0x30] sm:$0xff] %v1422
                  %v1424 = vld [vmem:[%s1408 + $0x38] sm:$0xff]
                  %1425 = vst [vmem:[%s1409 + $0x38] sm:$0xff] %v1424
                  %v1426 = vld [vmem:[%s1408 + $0x40] sm:$0xff]
                  %1427 = vst [vmem:[%s1409 + $0x40] sm:$0xff] %v1426
                  %v1428 = vld [vmem:[%s1408 + $0x48] sm:$0xff]
                  %1429 = vst [vmem:[%s1409 + $0x48] sm:$0xff] %v1428
                  %v1430 = vld [vmem:[%s1408 + $0x50] sm:$0xff]
                  %1431 = vst [vmem:[%s1409 + $0x50] sm:$0xff] %v1430
                  %v1432 = vld [vmem:[%s1408 + $0x58] sm:$0xff]
                  %1433 = vst [vmem:[%s1409 + $0x58] sm:$0xff] %v1432
                  %v1434 = vld [vmem:[%s1408 + $0x60] sm:$0xff]
                  %1435 = vst [vmem:[%s1409 + $0x60] sm:$0xff] %v1434
                  %v1436 = vld [vmem:[%s1408 + $0x68] sm:$0xff]
                  %1437 = vst [vmem:[%s1409 + $0x68] sm:$0xff] %v1436
                  %v1438 = vld [vmem:[%s1408 + $0x70] sm:$0xff]
                  %1439 = vst [vmem:[%s1409 + $0x70] sm:$0xff] %v1438
                  %v1440 = vld [vmem:[%s1408 + $0x78] sm:$0xff]
                  %1441 = vst [vmem:[%s1409 + $0x78] sm:$0xff] %v1440
                  %v1442 = vld [vmem:[%s1408 + $0x80] sm:$0xff]
                  %1443 = vst [vmem:[%s1409 + $0x80] sm:$0xff] %v1442
                  %v1444 = vld [vmem:[%s1408 + $0x88] sm:$0xff]
                  %1445 = vst [vmem:[%s1409 + $0x88] sm:$0xff] %v1444
                  %v1446 = vld [vmem:[%s1408 + $0x90] sm:$0xff]
                  %1447 = vst [vmem:[%s1409 + $0x90] sm:$0xff] %v1446
                  %v1448 = vld [vmem:[%s1408 + $0x98] sm:$0xff]
                  %1449 = vst [vmem:[%s1409 + $0x98] sm:$0xff] %v1448
                  %v1450 = vld [vmem:[%s1408 + $0xa0] sm:$0xff]
                  %1451 = vst [vmem:[%s1409 + $0xa0] sm:$0xff] %v1450
                  %v1452 = vld [vmem:[%s1408 + $0xa8] sm:$0xff]
                  %1453 = vst [vmem:[%s1409 + $0xa8] sm:$0xff] %v1452
                  %v1454 = vld [vmem:[%s1408 + $0xb0] sm:$0xff]
                  %1455 = vst [vmem:[%s1409 + $0xb0] sm:$0xff] %v1454
                  %v1456 = vld [vmem:[%s1408 + $0xb8] sm:$0xff]
                  %1457 = vst [vmem:[%s1409 + $0xb8] sm:$0xff] %v1456
                  %v1458 = vld [vmem:[%s1408 + $0xc0] sm:$0xff]
                  %1459 = vst [vmem:[%s1409 + $0xc0] sm:$0xff] %v1458
                  %v1460 = vld [vmem:[%s1408 + $0xc8] sm:$0xff]
                  %1461 = vst [vmem:[%s1409 + $0xc8] sm:$0xff] %v1460
                  %v1462 = vld [vmem:[%s1408 + $0xd0] sm:$0xff]
                  %1463 = vst [vmem:[%s1409 + $0xd0] sm:$0xff] %v1462
                  %v1464 = vld [vmem:[%s1408 + $0xd8] sm:$0xff]
                  %1465 = vst [vmem:[%s1409 + $0xd8] sm:$0xff] %v1464
                  %v1466 = vld [vmem:[%s1408 + $0xe0] sm:$0xff]
                  %1467 = vst [vmem:[%s1409 + $0xe0] sm:$0xff] %v1466
                  %v1468 = vld [vmem:[%s1408 + $0xe8] sm:$0xff]
                  %1469 = vst [vmem:[%s1409 + $0xe8] sm:$0xff] %v1468
                  %v1470 = vld [vmem:[%s1408 + $0xf0] sm:$0xff]
                  %1471 = vst [vmem:[%s1409 + $0xf0] sm:$0xff] %v1470
                  %v1472 = vld [vmem:[%s1408 + $0xf8] sm:$0xff]
                  %1473 = vst [vmem:[%s1409 + $0xf8] sm:$0xff] %v1472
                  %s1474 = sadd.s32 1, %s1407
                  %p1475 = scmp.ge.s32.totalorder %s1474, %s1400
                  %s1476 = scalar_select %p1475, 0, %s1474
                  %s1477 = smul.u32 %s1476, 256
                  %s1478 = smul.u32 %s1476, 256
                  %s1479 = scalar_lea.vmem %s1272, %s1477 [#allocation3]
                  %s1480 = scalar_lea.vmem %s1283, %s1478
                $region87: #{tpu_custom_call.1} parent=81 // loop_footer
                  %s1404 = sadd.s32 %s1402, 1
                $region88: #{tpu_custom_call.1} parent=81 // loop_footer_branch
                  %1401 = sbr.rel target = $region84
                $region89: #{tpu_custom_call.1} parent=81 // loop_exit
                  _
                %s1481 = sshrl.u32 %s1279, 5
                %s1482 = sand.u32 %s1279, 31
                %s1483 = smul.u32 %s1481, 32
                %s1484 = smul.u32 8, %s1483
                %s1485 = scalar_lea.vmem %s1272, %s1484 [#allocation3]
                %s1486 = smul.u32 8, %s1483
                %s1487 = scalar_lea.vmem %s1283, %s1486
                // While loop
                $region90: #{tpu_custom_call.1} parent=81 // loop_pre_header
                  _
                $region91: #{tpu_custom_call.1} parent=81 // loop_header
                  %s1489 = sphi 0, %s1491
                  %p1490 = scmp.ge.s32.totalorder %s1489, %s1482
                  %s1494 = sphi 0, %s1501
                  %s1495 = sphi %s1485, %s1504
                  %s1496 = sphi %s1487, %s1505
                $region92: #{tpu_custom_call.1} parent=81 // loop_header_branch
                  %1493 = sbr.rel (%p1490) target = $region96
                $region93: #{tpu_custom_call.1} parent=81 // loop_body
                  %v1497 = vld [vmem:[%s1495] sm:$0xff]
                  %1498 = vst [vmem:[%s1496] sm:$0xff] %v1497
                  %s1499 = sadd.s32 1, %s1494
                  %p1500 = scmp.ge.s32.totalorder %s1499, %s1482
                  %s1501 = scalar_select %p1500, 0, %s1499
                  %s1502 = smul.u32 %s1501, 8
                  %s1503 = smul.u32 %s1501, 8
                  %s1504 = scalar_lea.vmem %s1485, %s1502 [#allocation3]
                  %s1505 = scalar_lea.vmem %s1487, %s1503
                $region94: #{tpu_custom_call.1} parent=81 // loop_footer
                  %s1491 = sadd.s32 %s1489, 1
                $region95: #{tpu_custom_call.1} parent=81 // loop_footer_branch
                  %1488 = sbr.rel target = $region91
                $region96: #{tpu_custom_call.1} parent=81 // loop_exit
                  _
              $region82: #{tpu_custom_call.1} parent=59 // pred_fallthru
                _
              // Predicated region
              $region97: #{tpu_custom_call.1} parent=59 // pred_check
                _
              $region98: #{tpu_custom_call.1} parent=59 // pred_check_branch
                %1507 = sbr.rel target = $region100
              $region99: #{tpu_custom_call.1} parent=59 // pred_region
                _
              $region100: #{tpu_custom_call.1} parent=59 // pred_fallthru
                _
            $region60: #{tpu_custom_call.1} parent=55 // pred_fallthru
              _
            // Predicated region
            $region61: #{tpu_custom_call.1} parent=55 // pred_check
              _
            $region62: #{tpu_custom_call.1} parent=55 // pred_check_branch
              %1290 = sbr.rel target = $region64
            $region63: #{tpu_custom_call.1} parent=55 // pred_region
              %s1292 = sshrl.u32 %s1279, 5
              // While loop
              $region65: #{tpu_custom_call.1} parent=63 // loop_pre_header
                _
              $region66: #{tpu_custom_call.1} parent=63 // loop_header
                %s1294 = sphi 0, %s1296
                %p1295 = scmp.ge.s32.totalorder %s1294, %s1292
                %s1299 = sphi 0, %s1368
                %s1300 = sphi %s1272, %s1371
                %s1301 = sphi %s1283, %s1372
              $region67: #{tpu_custom_call.1} parent=63 // loop_header_branch
                %1298 = sbr.rel (%p1295) target = $region71
              $region68: #{tpu_custom_call.1} parent=63 // loop_body
                %v1302 = vld [vmem:[%s1300] sm:$0xff]
                %1303 = vst [vmem:[%s1301] sm:$0xff] %v1302
                %v1304 = vld [vmem:[%s1300 + $0x8] sm:$0xff]
                %1305 = vst [vmem:[%s1301 + $0x8] sm:$0xff] %v1304
                %v1306 = vld [vmem:[%s1300 + $0x10] sm:$0xff]
                %1307 = vst [vmem:[%s1301 + $0x10] sm:$0xff] %v1306
                %v1308 = vld [vmem:[%s1300 + $0x18] sm:$0xff]
                %1309 = vst [vmem:[%s1301 + $0x18] sm:$0xff] %v1308
                %v1310 = vld [vmem:[%s1300 + $0x20] sm:$0xff]
                %1311 = vst [vmem:[%s1301 + $0x20] sm:$0xff] %v1310
                %v1312 = vld [vmem:[%s1300 + $0x28] sm:$0xff]
                %1313 = vst [vmem:[%s1301 + $0x28] sm:$0xff] %v1312
                %v1314 = vld [vmem:[%s1300 + $0x30] sm:$0xff]
                %1315 = vst [vmem:[%s1301 + $0x30] sm:$0xff] %v1314
                %v1316 = vld [vmem:[%s1300 + $0x38] sm:$0xff]
                %1317 = vst [vmem:[%s1301 + $0x38] sm:$0xff] %v1316
                %v1318 = vld [vmem:[%s1300 + $0x40] sm:$0xff]
                %1319 = vst [vmem:[%s1301 + $0x40] sm:$0xff] %v1318
                %v1320 = vld [vmem:[%s1300 + $0x48] sm:$0xff]
                %1321 = vst [vmem:[%s1301 + $0x48] sm:$0xff] %v1320
                %v1322 = vld [vmem:[%s1300 + $0x50] sm:$0xff]
                %1323 = vst [vmem:[%s1301 + $0x50] sm:$0xff] %v1322
                %v1324 = vld [vmem:[%s1300 + $0x58] sm:$0xff]
                %1325 = vst [vmem:[%s1301 + $0x58] sm:$0xff] %v1324
                %v1326 = vld [vmem:[%s1300 + $0x60] sm:$0xff]
                %1327 = vst [vmem:[%s1301 + $0x60] sm:$0xff] %v1326
                %v1328 = vld [vmem:[%s1300 + $0x68] sm:$0xff]
                %1329 = vst [vmem:[%s1301 + $0x68] sm:$0xff] %v1328
                %v1330 = vld [vmem:[%s1300 + $0x70] sm:$0xff]
                %1331 = vst [vmem:[%s1301 + $0x70] sm:$0xff] %v1330
                %v1332 = vld [vmem:[%s1300 + $0x78] sm:$0xff]
                %1333 = vst [vmem:[%s1301 + $0x78] sm:$0xff] %v1332
                %v1334 = vld [vmem:[%s1300 + $0x80] sm:$0xff]
                %1335 = vst [vmem:[%s1301 + $0x80] sm:$0xff] %v1334
                %v1336 = vld [vmem:[%s1300 + $0x88] sm:$0xff]
                %1337 = vst [vmem:[%s1301 + $0x88] sm:$0xff] %v1336
                %v1338 = vld [vmem:[%s1300 + $0x90] sm:$0xff]
                %1339 = vst [vmem:[%s1301 + $0x90] sm:$0xff] %v1338
                %v1340 = vld [vmem:[%s1300 + $0x98] sm:$0xff]
                %1341 = vst [vmem:[%s1301 + $0x98] sm:$0xff] %v1340
                %v1342 = vld [vmem:[%s1300 + $0xa0] sm:$0xff]
                %1343 = vst [vmem:[%s1301 + $0xa0] sm:$0xff] %v1342
                %v1344 = vld [vmem:[%s1300 + $0xa8] sm:$0xff]
                %1345 = vst [vmem:[%s1301 + $0xa8] sm:$0xff] %v1344
                %v1346 = vld [vmem:[%s1300 + $0xb0] sm:$0xff]
                %1347 = vst [vmem:[%s1301 + $0xb0] sm:$0xff] %v1346
                %v1348 = vld [vmem:[%s1300 + $0xb8] sm:$0xff]
                %1349 = vst [vmem:[%s1301 + $0xb8] sm:$0xff] %v1348
                %v1350 = vld [vmem:[%s1300 + $0xc0] sm:$0xff]
                %1351 = vst [vmem:[%s1301 + $0xc0] sm:$0xff] %v1350
                %v1352 = vld [vmem:[%s1300 + $0xc8] sm:$0xff]
                %1353 = vst [vmem:[%s1301 + $0xc8] sm:$0xff] %v1352
                %v1354 = vld [vmem:[%s1300 + $0xd0] sm:$0xff]
                %1355 = vst [vmem:[%s1301 + $0xd0] sm:$0xff] %v1354
                %v1356 = vld [vmem:[%s1300 + $0xd8] sm:$0xff]
                %1357 = vst [vmem:[%s1301 + $0xd8] sm:$0xff] %v1356
                %v1358 = vld [vmem:[%s1300 + $0xe0] sm:$0xff]
                %1359 = vst [vmem:[%s1301 + $0xe0] sm:$0xff] %v1358
                %v1360 = vld [vmem:[%s1300 + $0xe8] sm:$0xff]
                %1361 = vst [vmem:[%s1301 + $0xe8] sm:$0xff] %v1360
                %v1362 = vld [vmem:[%s1300 + $0xf0] sm:$0xff]
                %1363 = vst [vmem:[%s1301 + $0xf0] sm:$0xff] %v1362
                %v1364 = vld [vmem:[%s1300 + $0xf8] sm:$0xff]
                %1365 = vst [vmem:[%s1301 + $0xf8] sm:$0xff] %v1364
                %s1366 = sadd.s32 1, %s1299
                %p1367 = scmp.ge.s32.totalorder %s1366, %s1292
                %s1368 = scalar_select %p1367, 0, %s1366
                %s1369 = smul.u32 %s1368, 256
                %s1370 = smul.u32 %s1368, 256
                %s1371 = scalar_lea.vmem %s1272, %s1369 [#allocation3]
                %s1372 = scalar_lea.vmem %s1283, %s1370
              $region69: #{tpu_custom_call.1} parent=63 // loop_footer
                %s1296 = sadd.s32 %s1294, 1
              $region70: #{tpu_custom_call.1} parent=63 // loop_footer_branch
                %1293 = sbr.rel target = $region66
              $region71: #{tpu_custom_call.1} parent=63 // loop_exit
                _
              %s1373 = sshrl.u32 %s1279, 5
              %s1374 = sand.u32 %s1279, 31
              %s1375 = smul.u32 %s1373, 32
              %s1376 = smul.u32 8, %s1375
              %s1377 = scalar_lea.vmem %s1272, %s1376 [#allocation3]
              %s1378 = smul.u32 8, %s1375
              %s1379 = scalar_lea.vmem %s1283, %s1378
              // While loop
              $region72: #{tpu_custom_call.1} parent=63 // loop_pre_header
                _
              $region73: #{tpu_custom_call.1} parent=63 // loop_header
                %s1381 = sphi 0, %s1383
                %p1382 = scmp.ge.s32.totalorder %s1381, %s1374
                %s1386 = sphi 0, %s1393
                %s1387 = sphi %s1377, %s1396
                %s1388 = sphi %s1379, %s1397
              $region74: #{tpu_custom_call.1} parent=63 // loop_header_branch
                %1385 = sbr.rel (%p1382) target = $region78
              $region75: #{tpu_custom_call.1} parent=63 // loop_body
                %v1389 = vld [vmem:[%s1387] sm:$0xff]
                %1390 = vst [vmem:[%s1388] sm:$0xff] %v1389
                %s1391 = sadd.s32 1, %s1386
                %p1392 = scmp.ge.s32.totalorder %s1391, %s1374
                %s1393 = scalar_select %p1392, 0, %s1391
                %s1394 = smul.u32 %s1393, 8
                %s1395 = smul.u32 %s1393, 8
                %s1396 = scalar_lea.vmem %s1377, %s1394 [#allocation3]
                %s1397 = scalar_lea.vmem %s1379, %s1395
              $region76: #{tpu_custom_call.1} parent=63 // loop_footer
                %s1383 = sadd.s32 %s1381, 1
              $region77: #{tpu_custom_call.1} parent=63 // loop_footer_branch
                %1380 = sbr.rel target = $region73
              $region78: #{tpu_custom_call.1} parent=63 // loop_exit
                _
            $region64: #{tpu_custom_call.1} parent=55 // pred_fallthru
              _
          $region56: #{tpu_custom_call.1} parent=51 // pred_fallthru
            _
          %1508 = vnop
        $region52: #{tpu_custom_call.1} parent=47 // pred_fallthru
          _
      $region48: #{tpu_custom_call.1} parent=5 // pred_fallthru
        _
      %p1509 = scmp.le.s32.totalorder 2, %s15
      // Predicated region
      $region101: #{tpu_custom_call.1} parent=5 // pred_check
        %p1510 = pneg %p1509
      $region102: #{tpu_custom_call.1} parent=5 // pred_check_branch
        %1512 = sbr.rel (%p1510) target = $region104
      $region103: #{tpu_custom_call.1} parent=5 // pred_region
        %s1513 = ssub.s32 %s15, 2
        // Predicated region
        $region105: #{tpu_custom_call.1} parent=103 // pred_check
          %p1514 = pneg %p196
        $region106: #{tpu_custom_call.1} parent=103 // pred_check_branch
          %1516 = sbr.rel (%p1514) target = $region108
        $region107: #{tpu_custom_call.1} parent=103 // pred_region
          %s1517 = sand.u32 %s181, 1
          %s1518 = sand.u32 %s181, 1
          %s1519 = smul.addr %s1518, 256
          %s1520 = scalar_lea.vmem [#allocation3], %s1519
        $region108: #{tpu_custom_call.1} parent=103 // pred_fallthru
          _
      $region104: #{tpu_custom_call.1} parent=5 // pred_fallthru
        _
    $region6: #{tpu_custom_call.1} parent=1 // loop_footer
      %s19 = sadd.s32 1, %s15
    $region7: #{tpu_custom_call.1} parent=1 // loop_footer_branch
      %14 = sbr.rel target = $region3
    $region8: #{tpu_custom_call.1} parent=1 // loop_exit
      _

</llo_original>
